<compile_context>
chip_gen: v6e
topology: v6e:2x2x1
jax: 0.10.0
libtpu: 0.0.40
codegen_flags: <defaults>
</compile_context>

<pallas_src>
import functools

import numpy as np
import jax
import jax.numpy as jnp
from jax.experimental import pallas as pl
from jax.experimental.pallas import tpu as pltpu

POINTS_NUM = 15
CONF_THRESH = 0.2   # TODO(synk): DecDecoder's confidence filtering (variable #peaks) is external and
                    #             not reproducible; we always keep the top-15 NMS peaks.
DOWN_RATIO = 4      # unused by forward(); kept for parity with the module's __init__.

_INT_MAX = int(np.iinfo(np.int32).max)


# ---------------------------------------------------------------------------
# Fused Pallas kernel: one D-tile of 3x3x3 NMS + streaming top-K peak selection.
# ---------------------------------------------------------------------------
def _nms_topk_kernel(x_ref, prev_ref, next_ref, vals_ref, idxs_ref, *, width, num_k):
    """x_ref    : (TD, L)    heat tile, L = H*W (lane-dense)
       prev_ref : (8,  L)    8-row group containing global row t*TD-1  (halo row = row 7)
       next_ref : (8,  L)    8-row group containing global row t*TD+TD (halo row = row 0)
       vals_ref : (1, num_k) f32 running top-k values       (accumulator across the grid)
       idxs_ref : (1, num_k) i32 running top-k flat indices (accumulator across the grid)
    """
    t = pl.program_id(0)
    nt = pl.num_programs(0)

    x = x_ref[...]
    td, l = x.shape
    neg = jnp.float32(-jnp.inf)

    lane = jax.lax.broadcasted_iota(jnp.int32, (td, l), 1)
    sub = jax.lax.broadcasted_iota(jnp.int32, (td, l), 0)
    lane_row = jax.lax.broadcasted_iota(jnp.int32, (1, l), 1)

    pow2 = (width & (width - 1)) == 0

    def w_pos(ln):  # position inside a W-row; AND when width is a power of two (review item)
        return (ln & (width - 1)) if pow2 else (ln % width)

    def wh_max(a, ln):
        """3x3 max in the (H, W) plane of each D-row, flattened onto the lane axis."""
        negf = jnp.full_like(a, neg)
        wl = jnp.where(w_pos(ln) == 0, negf, pltpu.roll(a, 1, 1))
        wr = jnp.where(w_pos(ln) == width - 1, negf, pltpu.roll(a, l - 1, 1))
        m = jnp.maximum(jnp.maximum(a, wl), wr)
        hu = jnp.where(ln < width, negf, pltpu.roll(m, width, 1))
        hd = jnp.where(ln >= l - width, negf, pltpu.roll(m, l - width, 1))
        return jnp.maximum(jnp.maximum(m, hu), hd)

    m_wh = wh_max(x, lane)

    # D halo rows (global rows t*TD-1 / t*TD+TD); -inf outside the volume borders.
    prev_row = prev_ref[7:8, :]
    next_row = next_ref[0:1, :]
    prev_row = jnp.where(t == 0, jnp.full_like(prev_row, neg), prev_row)
    next_row = jnp.where(t == nt - 1, jnp.full_like(next_row, neg), next_row)
    m_prev = wh_max(prev_row, lane_row)
    m_next = wh_max(next_row, lane_row)

    # D direction: sublane roll + halo-row substitution at the tile borders.
    du = jnp.where(sub == 0, m_prev, pltpu.roll(m_wh, 1, 0))
    dd = jnp.where(sub == td - 1, m_next, pltpu.roll(m_wh, td - 1, 0))
    m3 = jnp.maximum(jnp.maximum(m_wh, du), dd)

    # Exact equality is safe: m3 is a max over copies of the same f32 values.
    # Non-peaks -> 0.0 (torch `heat * keep` semantics).
    supp = jnp.where(x == m3, x, jnp.zeros_like(x))

    # Global flat index of every element of this tile (row-major over (D, H, W)).
    gidx = (t * td + sub) * l + lane

    @pl.when(t == 0)
    def _init():
        vals_ref[...] = jnp.full(vals_ref.shape, -jnp.inf, jnp.float32)
        idxs_ref[...] = jnp.full(idxs_ref.shape, -1, jnp.int32)

    lane_k = jax.lax.broadcasted_iota(jnp.int32, vals_ref.shape, 1)

    def select_body(_, carry):
        work, acc_v, acc_i = carry
        cval = jnp.max(work)                                                  # tile max
        cidx = jnp.min(jnp.where(work == cval, gidx, jnp.int32(_INT_MAX)))    # lowest index on ties
        amin = jnp.min(acc_v)                                                 # running-min slot
        min_lane = jnp.min(jnp.where(acc_v == amin, lane_k, jnp.int32(_INT_MAX)))
        sel = (lane_k == min_lane) & (cval > amin)                            # replace-min insert
        acc_v = jnp.where(sel, cval, acc_v)
        acc_i = jnp.where(sel, cidx, acc_i)
        work = jnp.where(gidx == cidx, neg, work)                             # remove taken element
        return work, acc_v, acc_i

    _, acc_v, acc_i = jax.lax.fori_loop(
        0, num_k, select_body, (supp, vals_ref[...], idxs_ref[...]), unroll=True)
    vals_ref[...] = acc_v
    idxs_ref[...] = acc_i


def _pick_block_d(d, l, budget_bytes=8 * 2**20):
    """Largest D-tile (multiple of 8, dividing D) whose double-buffered input stays under
    ~8 MiB - sized for v7x (64 MiB physical / 32 MiB default-scoped VMEM)."""
    rows = max(8, (budget_bytes // (2 * l * 4) // 8) * 8)
    rows = min(rows, d)
    while rows > 8 and d % rows != 0:
        rows -= 8
    return rows if d % rows == 0 else d


def nms_topk(heat2, width, *, num_k=POINTS_NUM, block_d=None):
    """heat2: (D, H*W) f32 -> (top-k peak values (num_k,), top-k flat indices (num_k,) i32)."""
    d, l = heat2.shape
    # TODO(synk): ragged shapes (D % 8 != 0 or H*W % 128 != 0) would need a padded tail; the
    #             detection volumes this model uses are powers of two.
    assert d % 8 == 0 and l % 128 == 0, (d, l)
    if block_d is None:
        block_d = _pick_block_d(d, l)
    assert block_d % 8 == 0 and d % block_d == 0, (d, block_d)
    nt = d // block_d
    bpd8 = block_d // 8
    ngrp = d // 8

    # Explicit VMEM budget: ~3x (tile + two 8-row halo blocks) + headroom (review item, v7x-aware).
    vmem_limit = int(min(100 * 2**20, max(16 * 2**20, 3 * (block_d + 16) * l * 4 + 2**20)))

    vals, idxs = pl.pallas_call(
        functools.partial(_nms_topk_kernel, width=width, num_k=num_k),
        out_shape=(jax.ShapeDtypeStruct((1, num_k), jnp.float32),
                   jax.ShapeDtypeStruct((1, num_k), jnp.int32)),
        grid_spec=pltpu.PrefetchScalarGridSpec(
            num_scalar_prefetch=0,
            grid=(nt,),
            in_specs=[
                pl.BlockSpec((block_d, l), lambda t: (t, 0)),
                # 8-row-aligned groups holding the -1 / +TD halo rows (clamped in the index_map;
                # masked to -inf in-kernel at the first/last tile).
                pl.BlockSpec((8, l), lambda t: (jnp.maximum(t * bpd8 - 1, 0), 0)),
                pl.BlockSpec((8, l), lambda t: (jnp.minimum(t * bpd8 + bpd8, ngrp - 1), 0)),
            ],
            out_specs=(
                pl.BlockSpec((1, num_k), lambda t: (0, 0)),
                pl.BlockSpec((1, num_k), lambda t: (0, 0)),
            ),
        ),
        compiler_params=pltpu.CompilerParams(
            # The D axis carries the running top-k accumulator -> "arbitrary".  A batch /
            # channel axis (if this were batched) would be the natural "parallel" axis for
            # the 2 TensorCores on v7x.
            dimension_semantics=("arbitrary",),
            vmem_limit_bytes=vmem_limit,
        ),
    )(heat2, heat2, heat2)
    return vals[0], idxs[0]


# ---------------------------------------------------------------------------
# Decode glue (equivalent of DecDecoder.ctdet_decode + get_pre_points)
# ---------------------------------------------------------------------------
def decode_points(pr_hm, reg, *, block_d=None):
    """CenterNet-style 3-D decode: fused NMS+top-15 (Pallas) -> add reg offsets -> sort -> round."""
    _, _, D, H, W = pr_hm.shape
    heat2 = pr_hm[0, 0].astype(jnp.float32).reshape(D, H * W)
    _, inds = nms_topk(heat2, W, block_d=block_d)          # (15,) int32 flat indices into D*H*W

    zi = inds // (H * W)
    yi = (inds // W) % H
    xi = inds % W

    # 45-float gather; tiny XLA op.  TODO(synk): could be fused into the kernel with a
    # per-candidate in-tile gather, but that adds 45 full-tile passes for 180 bytes.
    reg_flat = reg[0].astype(jnp.float32).reshape(3, -1)
    off = reg_flat[:, inds]
    xs = xi.astype(jnp.float32) + off[0]
    ys = yi.astype(jnp.float32) + off[1]
    zs = zi.astype(jnp.float32) + off[2]
    pts = jnp.stack([xs, ys, zs], axis=1)                  # (15, 3)

    # Python `sort(key=lambda x: (x[0], x[1]))` -> stable lexsort (x primary, y secondary).
    order = jnp.lexsort((pts[:, 1], pts[:, 0]))
    pts = pts[order]
    return jnp.round(pts).astype(jnp.int32).astype(jnp.float32)   # round -> int32 -> float (as module)


# ---------------------------------------------------------------------------
# Plane fitting + point-to-plane distances + grouped reduction (plain jnp; XLA fuses it).
# ---------------------------------------------------------------------------
def p2p_loss(pred_g, gt_g):
    p1 = gt_g[:, 0, :]                                     # (5, 3)
    p2 = gt_g[:, 1, :]
    p3 = gt_g[:, 2, :]
    N = jnp.cross(p2 - p1, p3 - p1)                        # (5, 3) plane normals
    Dc = -jnp.sum(N * p1, axis=-1)                         # (5,)
    denom = jnp.sqrt(jnp.sum(N * N, axis=-1)) + 1e-4       # (5,)
    dis = jnp.abs(jnp.einsum("gpc,gc->gp", pred_g, N) + Dc[:, None])   # (5, 3)
    point2plane = dis / denom[:, None]
    return jnp.sum(jnp.sum(point2plane, axis=1) / 3.0) / 5.0


@functools.partial(jax.jit, static_argnames=("block_d",))
def point2plane_loss(pr_hm, reg, gt_points, block_d=None):
    pred = decode_points(pr_hm, reg, block_d=block_d)      # (15, 3)
    pred_g = pred.reshape(5, 3, 3)
    gt_g = gt_points[0].astype(jnp.float32).reshape(5, 3, 3)
    return p2p_loss(pred_g, gt_g)


# ---------------------------------------------------------------------------
# Pure-numpy references mirroring the PyTorch behaviour (for correctness checks)
# ---------------------------------------------------------------------------
def ref_nms_np(heat):
    hp = np.pad(heat, 1, mode="constant", constant_values=-np.inf)
    Dv, Hv, Wv = heat.shape
    m = np.full_like(heat, -np.inf)
    for dz in range(3):
        for dy in range(3):
            for dx in range(3):
                m = np.maximum(m, hp[dz:dz + Dv, dy:dy + Hv, dx:dx + Wv])
    return np.where(heat == m, heat, 0.0).astype(np.float32)


def ref_topk_np(heat):
    supp = ref_nms_np(heat).reshape(-1)
    return np.argsort(-supp, kind="stable")[:POINTS_NUM]


def ref_decode_np(pr_hm, reg):
    heat = pr_hm[0, 0].astype(np.float32)
    Dv, Hv, Wv = heat.shape
    inds = ref_topk_np(heat)
    zi, yi, xi = inds // (Hv * Wv), (inds // Wv) % Hv, inds % Wv
    rf = reg[0].astype(np.float32).reshape(3, -1)
    off = rf[:, inds]
    pts = np.stack([xi.astype(np.float32) + off[0],
                    yi.astype(np.float32) + off[1],
                    zi.astype(np.float32) + off[2]], axis=1)
    pts = np.asarray(sorted(pts.tolist(), key=lambda p: (p[0], p[1])), np.float32)
    return np.round(pts).astype(np.int32).astype(np.float32)


def ref_loss_np(pred, gt_points):
    pred = np.asarray(pred, np.float64)
    gt = np.asarray(gt_points, np.float64)[0]
    planes = []
    for g in range(POINTS_NUM // 3):
        a, b, c = gt[3 * g], gt[3 * g + 1], gt[3 * g + 2]
        AB, AC = b - a, c - a
        N = np.array([AB[1] * AC[2] - AB[2] * AC[1],
                      AB[2] * AC[0] - AB[0] * AC[2],
                      AB[0] * AC[1] - AB[1] * AC[0]])
        Dp = -(N[0] * a[0] + N[1] * a[1] + N[2] * a[2])
        planes.append(np.array([N[0], N[1], N[2], Dp]))
    loss, loss_avg = 0.0, 0.0
    for i in range(POINTS_NUM):
        plane = planes[i // 3]
        other, Dp = plane[:3], plane[3]
        dis = abs((pred[i] * other).sum() + Dp)
        s = np.sqrt((other ** 2).sum()) + 1e-4
        loss += dis / s
        if (i + 1) % 3 == 0:
            loss_avg += loss / 3
            loss = 0.0
    return loss_avg / 5


if __name__ == "__main__":
    key = jax.random.PRNGKey(0)
    k_hm, k_reg, k_gt = jax.random.split(key, 3)

    D = H = W = 16
    pr_hm = jax.random.uniform(k_hm, (1, 1, D, H, W), dtype=jnp.float32)        # heatmap scores in (0,1)
    reg = jax.random.uniform(k_reg, (1, 3, D, H, W), dtype=jnp.float32)         # sub-voxel offsets
    gt_points = jax.random.uniform(k_gt, (1, POINTS_NUM, 3), dtype=jnp.float32,
                                   minval=0.0, maxval=float(W))                 # ground-truth landmarks

    loss = point2plane_loss(pr_hm, reg, gt_points)
    jax.block_until_ready(loss)

    pr_hm_np = np.asarray(jax.device_get(pr_hm))
    reg_np = np.asarray(jax.device_get(reg))
    heat_np = pr_hm_np[0, 0].astype(np.float32)
    supp_ref = ref_nms_np(heat_np).reshape(-1)
    ref_idx = np.sort(ref_topk_np(heat_np))

    # 1) Fused NMS + top-15 kernel vs numpy reference: single-tile AND multi-tile (halo/merge) paths.
    heat2 = jnp.asarray(heat_np).reshape(D, H * W)
    for bd in (None, 8):
        vals, idxs = nms_topk(heat2, W, block_d=bd)
        idx_np = np.sort(np.asarray(jax.device_get(idxs)))
        assert np.array_equal(idx_np, ref_idx), ("top-k index mismatch", bd)
        val_np = np.sort(np.asarray(jax.device_get(vals)))
        assert np.allclose(val_np, np.sort(supp_ref[ref_idx])), ("top-k value mismatch", bd)

    # 2) Full decode (NMS -> offsets -> lexsort -> round) vs numpy reference, both tilings.
    pred_ref = ref_decode_np(pr_hm_np, reg_np)
    for bd in (None, 8):
        pred_jx = np.asarray(jax.device_get(decode_points(pr_hm, reg, block_d=bd)))
        assert np.array_equal(pred_jx, pred_ref), ("decode mismatch", bd)

    # 3) End-to-end loss vs the numpy loop reference on the same decoded points.
    ref = ref_loss_np(pred_ref, np.asarray(jax.device_get(gt_points)))
    assert np.allclose(float(loss), ref, rtol=1e-3, atol=1e-3), (float(loss), ref)

    print("KERNEL_OK")
</pallas_src>

<mosaic_0001>
module attributes {stable_mosaic.version = 11 : i64} {
  func.func @_nms_topk_kernel(%arg0: i32, %arg1: memref<16x256xf32, #tpu.memory_space<vmem>>, %arg2: memref<8x256xf32, #tpu.memory_space<vmem>>, %arg3: memref<8x256xf32, #tpu.memory_space<vmem>>, %arg4: memref<1x15xf32, #tpu.memory_space<vmem>>, %arg5: memref<1x15xi32, #tpu.memory_space<vmem>>) attributes {dimension_semantics = [#tpu.dimension_semantics<arbitrary>], iteration_bounds = array<i64: 1>, scalar_prefetch = 0 : i64, scratch_operands = 0 : i64, tpu.core_type = #tpu.core_type<tc>, window_params = [{transform_indices = @transform_0, window_bounds = array<i64: 16, 256>}, {transform_indices = @transform_1, window_bounds = array<i64: 8, 256>}, {transform_indices = @transform_2, window_bounds = array<i64: 8, 256>}, {pipeline_mode = #tpu.pipeline_mode<synchronous>, transform_indices = @transform_3, window_bounds = array<i64: 1, 15>}, {pipeline_mode = #tpu.pipeline_mode<synchronous>, transform_indices = @transform_4, window_bounds = array<i64: 1, 15>}]} {
    %c0 = arith.constant 0 : index
    %c0_0 = arith.constant 0 : index
    %0 = vector.load %arg1[%c0, %c0_0] : memref<16x256xf32, #tpu.memory_space<vmem>>, vector<16x256xf32>
    %1 = tpu.iota {dimensions = array<i32: 1>} : vector<16x256xi32>
    %2 = tpu.iota {dimensions = array<i32: 0>} : vector<16x256xi32>
    %3 = tpu.iota {dimensions = array<i32: 1>} : vector<1x256xi32>
    %cst = arith.constant 0xFF800000 : f32
    %4 = vector.broadcast %cst : f32 to vector<16x256xf32>
    %c15_i32 = arith.constant 15 : i32
    %5 = vector.broadcast %c15_i32 : i32 to vector<16x256xi32>
    %6 = arith.andi %1, %5 : vector<16x256xi32>
    %c0_i32 = arith.constant 0 : i32
    %7 = vector.broadcast %c0_i32 : i32 to vector<16x256xi32>
    %8 = arith.cmpi eq, %6, %7 : vector<16x256xi32>
    %c1_i32 = arith.constant 1 : i32
    %9 = tpu.dynamic_rotate %0 by %c1_i32 dim 1 : vector<16x256xf32>, i32 -> vector<16x256xf32>
    %10 = arith.select %8, %4, %9 : vector<16x256xi1>, vector<16x256xf32>
    %c15_i32_1 = arith.constant 15 : i32
    %11 = vector.broadcast %c15_i32_1 : i32 to vector<16x256xi32>
    %12 = arith.andi %1, %11 : vector<16x256xi32>
    %c15_i32_2 = arith.constant 15 : i32
    %13 = vector.broadcast %c15_i32_2 : i32 to vector<16x256xi32>
    %14 = arith.cmpi eq, %12, %13 : vector<16x256xi32>
    %c255_i32 = arith.constant 255 : i32
    %15 = tpu.dynamic_rotate %0 by %c255_i32 dim 1 : vector<16x256xf32>, i32 -> vector<16x256xf32>
    %16 = arith.select %14, %4, %15 : vector<16x256xi1>, vector<16x256xf32>
    %17 = arith.maximumf %0, %10 : vector<16x256xf32>
    %18 = arith.maximumf %17, %16 : vector<16x256xf32>
    %c16_i32 = arith.constant 16 : i32
    %19 = vector.broadcast %c16_i32 : i32 to vector<16x256xi32>
    %20 = arith.cmpi slt, %1, %19 : vector<16x256xi32>
    %c16_i32_3 = arith.constant 16 : i32
    %21 = tpu.dynamic_rotate %18 by %c16_i32_3 dim 1 : vector<16x256xf32>, i32 -> vector<16x256xf32>
    %22 = arith.select %20, %4, %21 : vector<16x256xi1>, vector<16x256xf32>
    %c240_i32 = arith.constant 240 : i32
    %23 = vector.broadcast %c240_i32 : i32 to vector<16x256xi32>
    %24 = arith.cmpi sge, %1, %23 : vector<16x256xi32>
    %c240_i32_4 = arith.constant 240 : i32
    %25 = tpu.dynamic_rotate %18 by %c240_i32_4 dim 1 : vector<16x256xf32>, i32 -> vector<16x256xf32>
    %26 = arith.select %24, %4, %25 : vector<16x256xi1>, vector<16x256xf32>
    %27 = arith.maximumf %18, %22 : vector<16x256xf32>
    %28 = arith.maximumf %27, %26 : vector<16x256xf32>
    %c7 = arith.constant 7 : index
    %c0_5 = arith.constant 0 : index
    %29 = vector.load %arg2[%c7, %c0_5] : memref<8x256xf32, #tpu.memory_space<vmem>>, vector<1x256xf32>
    %c0_6 = arith.constant 0 : index
    %c0_7 = arith.constant 0 : index
    %30 = vector.load %arg3[%c0_6, %c0_7] : memref<8x256xf32, #tpu.memory_space<vmem>>, vector<1x256xf32>
    %c0_i32_8 = arith.constant 0 : i32
    %31 = arith.cmpi eq, %arg0, %c0_i32_8 : i32
    %cst_9 = arith.constant 0xFF800000 : f32
    %32 = vector.broadcast %cst_9 : f32 to vector<1x256xf32>
    %33 = arith.select %31, %32, %29 : vector<1x256xf32>
    %c0_i32_10 = arith.constant 0 : i32
    %34 = arith.cmpi eq, %arg0, %c0_i32_10 : i32
    %cst_11 = arith.constant 0xFF800000 : f32
    %35 = vector.broadcast %cst_11 : f32 to vector<1x256xf32>
    %36 = arith.select %34, %35, %30 : vector<1x256xf32>
    %cst_12 = arith.constant 0xFF800000 : f32
    %37 = vector.broadcast %cst_12 : f32 to vector<1x256xf32>
    %c15_i32_13 = arith.constant 15 : i32
    %38 = vector.broadcast %c15_i32_13 : i32 to vector<1x256xi32>
    %39 = arith.andi %3, %38 : vector<1x256xi32>
    %c0_i32_14 = arith.constant 0 : i32
    %40 = vector.broadcast %c0_i32_14 : i32 to vector<1x256xi32>
    %41 = arith.cmpi eq, %39, %40 : vector<1x256xi32>
    %c1_i32_15 = arith.constant 1 : i32
    %42 = tpu.dynamic_rotate %33 by %c1_i32_15 dim 1 : vector<1x256xf32>, i32 -> vector<1x256xf32>
    %43 = arith.select %41, %37, %42 : vector<1x256xi1>, vector<1x256xf32>
    %c15_i32_16 = arith.constant 15 : i32
    %44 = vector.broadcast %c15_i32_16 : i32 to vector<1x256xi32>
    %45 = arith.andi %3, %44 : vector<1x256xi32>
    %c15_i32_17 = arith.constant 15 : i32
    %46 = vector.broadcast %c15_i32_17 : i32 to vector<1x256xi32>
    %47 = arith.cmpi eq, %45, %46 : vector<1x256xi32>
    %c255_i32_18 = arith.constant 255 : i32
    %48 = tpu.dynamic_rotate %33 by %c255_i32_18 dim 1 : vector<1x256xf32>, i32 -> vector<1x256xf32>
    %49 = arith.select %47, %37, %48 : vector<1x256xi1>, vector<1x256xf32>
    %50 = arith.maximumf %33, %43 : vector<1x256xf32>
    %51 = arith.maximumf %50, %49 : vector<1x256xf32>
    %c16_i32_19 = arith.constant 16 : i32
    %52 = vector.broadcast %c16_i32_19 : i32 to vector<1x256xi32>
    %53 = arith.cmpi slt, %3, %52 : vector<1x256xi32>
    %c16_i32_20 = arith.constant 16 : i32
    %54 = tpu.dynamic_rotate %51 by %c16_i32_20 dim 1 : vector<1x256xf32>, i32 -> vector<1x256xf32>
    %55 = arith.select %53, %37, %54 : vector<1x256xi1>, vector<1x256xf32>
    %c240_i32_21 = arith.constant 240 : i32
    %56 = vector.broadcast %c240_i32_21 : i32 to vector<1x256xi32>
    %57 = arith.cmpi sge, %3, %56 : vector<1x256xi32>
    %c240_i32_22 = arith.constant 240 : i32
    %58 = tpu.dynamic_rotate %51 by %c240_i32_22 dim 1 : vector<1x256xf32>, i32 -> vector<1x256xf32>
    %59 = arith.select %57, %37, %58 : vector<1x256xi1>, vector<1x256xf32>
    %60 = arith.maximumf %51, %55 : vector<1x256xf32>
    %61 = arith.maximumf %60, %59 : vector<1x256xf32>
    %cst_23 = arith.constant 0xFF800000 : f32
    %62 = vector.broadcast %cst_23 : f32 to vector<1x256xf32>
    %c15_i32_24 = arith.constant 15 : i32
    %63 = vector.broadcast %c15_i32_24 : i32 to vector<1x256xi32>
    %64 = arith.andi %3, %63 : vector<1x256xi32>
    %c0_i32_25 = arith.constant 0 : i32
    %65 = vector.broadcast %c0_i32_25 : i32 to vector<1x256xi32>
    %66 = arith.cmpi eq, %64, %65 : vector<1x256xi32>
    %c1_i32_26 = arith.constant 1 : i32
    %67 = tpu.dynamic_rotate %36 by %c1_i32_26 dim 1 : vector<1x256xf32>, i32 -> vector<1x256xf32>
    %68 = arith.select %66, %62, %67 : vector<1x256xi1>, vector<1x256xf32>
    %c15_i32_27 = arith.constant 15 : i32
    %69 = vector.broadcast %c15_i32_27 : i32 to vector<1x256xi32>
    %70 = arith.andi %3, %69 : vector<1x256xi32>
    %c15_i32_28 = arith.constant 15 : i32
    %71 = vector.broadcast %c15_i32_28 : i32 to vector<1x256xi32>
    %72 = arith.cmpi eq, %70, %71 : vector<1x256xi32>
    %c255_i32_29 = arith.constant 255 : i32
    %73 = tpu.dynamic_rotate %36 by %c255_i32_29 dim 1 : vector<1x256xf32>, i32 -> vector<1x256xf32>
    %74 = arith.select %72, %62, %73 : vector<1x256xi1>, vector<1x256xf32>
    %75 = arith.maximumf %36, %68 : vector<1x256xf32>
    %76 = arith.maximumf %75, %74 : vector<1x256xf32>
    %c16_i32_30 = arith.constant 16 : i32
    %77 = vector.broadcast %c16_i32_30 : i32 to vector<1x256xi32>
    %78 = arith.cmpi slt, %3, %77 : vector<1x256xi32>
    %c16_i32_31 = arith.constant 16 : i32
    %79 = tpu.dynamic_rotate %76 by %c16_i32_31 dim 1 : vector<1x256xf32>, i32 -> vector<1x256xf32>
    %80 = arith.select %78, %62, %79 : vector<1x256xi1>, vector<1x256xf32>
    %c240_i32_32 = arith.constant 240 : i32
    %81 = vector.broadcast %c240_i32_32 : i32 to vector<1x256xi32>
    %82 = arith.cmpi sge, %3, %81 : vector<1x256xi32>
    %c240_i32_33 = arith.constant 240 : i32
    %83 = tpu.dynamic_rotate %76 by %c240_i32_33 dim 1 : vector<1x256xf32>, i32 -> vector<1x256xf32>
    %84 = arith.select %82, %62, %83 : vector<1x256xi1>, vector<1x256xf32>
    %85 = arith.maximumf %76, %80 : vector<1x256xf32>
    %86 = arith.maximumf %85, %84 : vector<1x256xf32>
    %c0_i32_34 = arith.constant 0 : i32
    %87 = vector.broadcast %c0_i32_34 : i32 to vector<16x256xi32>
    %88 = arith.cmpi eq, %2, %87 : vector<16x256xi32>
    %c1_i32_35 = arith.constant 1 : i32
    %89 = tpu.dynamic_rotate %28 by %c1_i32_35 dim 0 : vector<16x256xf32>, i32 -> vector<16x256xf32>
    %90 = vector.shape_cast %61 : vector<1x256xf32> to vector<1x256xf32>
    %91 = vector.broadcast %90 : vector<1x256xf32> to vector<16x256xf32>
    %92 = arith.select %88, %91, %89 : vector<16x256xi1>, vector<16x256xf32>
    %c15_i32_36 = arith.constant 15 : i32
    %93 = vector.broadcast %c15_i32_36 : i32 to vector<16x256xi32>
    %94 = arith.cmpi eq, %2, %93 : vector<16x256xi32>
    %c15_i32_37 = arith.constant 15 : i32
    %95 = tpu.dynamic_rotate %28 by %c15_i32_37 dim 0 : vector<16x256xf32>, i32 -> vector<16x256xf32>
    %96 = vector.shape_cast %86 : vector<1x256xf32> to vector<1x256xf32>
    %97 = vector.broadcast %96 : vector<1x256xf32> to vector<16x256xf32>
    %98 = arith.select %94, %97, %95 : vector<16x256xi1>, vector<16x256xf32>
    %99 = arith.maximumf %28, %92 : vector<16x256xf32>
    %100 = arith.maximumf %99, %98 : vector<16x256xf32>
    %101 = arith.cmpf oeq, %0, %100 : vector<16x256xf32>
    %cst_38 = arith.constant 0.000000e+00 : f32
    %102 = vector.broadcast %cst_38 : f32 to vector<16x256xf32>
    %103 = arith.select %101, %0, %102 : vector<16x256xi1>, vector<16x256xf32>
    %c16_i32_39 = arith.constant 16 : i32
    %104 = arith.muli %arg0, %c16_i32_39 : i32
    %105 = vector.broadcast %104 : i32 to vector<16x256xi32>
    %106 = arith.addi %105, %2 : vector<16x256xi32>
    %c256_i32 = arith.constant 256 : i32
    %107 = vector.broadcast %c256_i32 : i32 to vector<16x256xi32>
    %108 = arith.muli %106, %107 : vector<16x256xi32>
    %109 = arith.addi %108, %1 : vector<16x256xi32>
    %c0_i32_40 = arith.constant 0 : i32
    %110 = arith.cmpi eq, %arg0, %c0_i32_40 : i32
    %111 = arith.extui %110 : i1 to i32
    %c0_i32_41 = arith.constant 0 : i32
    %112 = arith.cmpi ne, %111, %c0_i32_41 : i32
    scf.if %112 {
      %cst_142 = arith.constant 0xFF800000 : f32
      %673 = vector.broadcast %cst_142 : f32 to vector<1x15xf32>
      %c0_143 = arith.constant 0 : index
      %c0_144 = arith.constant 0 : index
      %674 = vector.load %arg4[%c0_143, %c0_144] : memref<1x15xf32, #tpu.memory_space<vmem>>, vector<1x15xf32>
      tpu.vector_store %arg4[%c0_143, %c0_144], %673 {strides = array<i32>} : memref<1x15xf32, #tpu.memory_space<vmem>>, vector<1x15xf32>,
      %c-1_i32 = arith.constant -1 : i32
      %675 = vector.broadcast %c-1_i32 : i32 to vector<1x15xi32>
      %c0_145 = arith.constant 0 : index
      %c0_146 = arith.constant 0 : index
      %676 = vector.load %arg5[%c0_145, %c0_146] : memref<1x15xi32, #tpu.memory_space<vmem>>, vector<1x15xi32>
      tpu.vector_store %arg5[%c0_145, %c0_146], %675 {strides = array<i32>} : memref<1x15xi32, #tpu.memory_space<vmem>>, vector<1x15xi32>,
    } else {
    }
    %113 = tpu.iota {dimensions = array<i32: 1>} : vector<1x15xi32>
    %c0_42 = arith.constant 0 : index
    %c0_43 = arith.constant 0 : index
    %114 = vector.load %arg4[%c0_42, %c0_43] : memref<1x15xf32, #tpu.memory_space<vmem>>, vector<1x15xf32>
    %c0_44 = arith.constant 0 : index
    %c0_45 = arith.constant 0 : index
    %115 = vector.load %arg5[%c0_44, %c0_45] : memref<1x15xi32, #tpu.memory_space<vmem>>, vector<1x15xi32>
    %cst_46 = arith.constant 0xFF800000 : f32
    %c0_i32_47 = arith.constant 0 : i32
    %116 = vector.shape_cast %103 : vector<16x256xf32> to vector<1x16x256xf32>
    %cst_48 = arith.constant dense<0xFF800000> : vector<1xf32>
    %117 = vector.multi_reduction <maximumf>, %116, %cst_48 [1, 2] : vector<1x16x256xf32> to vector<1xf32>
    %118 = vector.shape_cast %117 : vector<1xf32> to vector<1x1x1xf32>
    %119 = vector.extract %118[0, 0, 0] : f32 from vector<1x1x1xf32>
    %120 = vector.broadcast %119 : f32 to vector<16x256xf32>
    %121 = arith.cmpf oeq, %103, %120 : vector<16x256xf32>
    %c2147483647_i32 = arith.constant 2147483647 : i32
    %122 = vector.broadcast %c2147483647_i32 : i32 to vector<16x256xi32>
    %123 = arith.select %121, %109, %122 : vector<16x256xi1>, vector<16x256xi32>
    %124 = vector.shape_cast %123 : vector<16x256xi32> to vector<1x16x256xi32>
    %cst_49 = arith.constant dense<2147483647> : vector<1xi32>
    %125 = vector.multi_reduction <minsi>, %124, %cst_49 [1, 2] : vector<1x16x256xi32> to vector<1xi32>
    %126 = vector.shape_cast %125 : vector<1xi32> to vector<1x1x1xi32>
    %127 = vector.extract %126[0, 0, 0] : i32 from vector<1x1x1xi32>
    %128 = vector.shape_cast %114 : vector<1x15xf32> to vector<1x1x15xf32>
    %cst_50 = arith.constant dense<0x7F800000> : vector<1xf32>
    %129 = vector.multi_reduction <minimumf>, %128, %cst_50 [1, 2] : vector<1x1x15xf32> to vector<1xf32>
    %130 = vector.shape_cast %129 : vector<1xf32> to vector<1x1x1xf32>
    %131 = vector.extract %130[0, 0, 0] : f32 from vector<1x1x1xf32>
    %132 = vector.broadcast %131 : f32 to vector<1x15xf32>
    %133 = arith.cmpf oeq, %114, %132 : vector<1x15xf32>
    %c2147483647_i32_51 = arith.constant 2147483647 : i32
    %134 = vector.broadcast %c2147483647_i32_51 : i32 to vector<1x15xi32>
    %135 = arith.select %133, %113, %134 : vector<1x15xi1>, vector<1x15xi32>
    %136 = vector.shape_cast %135 : vector<1x15xi32> to vector<1x1x15xi32>
    %cst_52 = arith.constant dense<2147483647> : vector<1xi32>
    %137 = vector.multi_reduction <minsi>, %136, %cst_52 [1, 2] : vector<1x1x15xi32> to vector<1xi32>
    %138 = vector.shape_cast %137 : vector<1xi32> to vector<1x1x1xi32>
    %139 = vector.extract %138[0, 0, 0] : i32 from vector<1x1x1xi32>
    %140 = vector.broadcast %139 : i32 to vector<1x15xi32>
    %141 = arith.cmpi eq, %113, %140 : vector<1x15xi32>
    %142 = arith.cmpf ogt, %119, %131 : f32
    %143 = vector.broadcast %142 : i1 to vector<1x15xi1>
    %144 = arith.andi %141, %143 : vector<1x15xi1>
    %145 = vector.broadcast %119 : f32 to vector<1x15xf32>
    %146 = arith.select %144, %145, %114 : vector<1x15xi1>, vector<1x15xf32>
    %147 = vector.broadcast %127 : i32 to vector<1x15xi32>
    %148 = arith.select %144, %147, %115 : vector<1x15xi1>, vector<1x15xi32>
    %149 = vector.broadcast %127 : i32 to vector<16x256xi32>
    %150 = arith.cmpi eq, %109, %149 : vector<16x256xi32>
    %151 = vector.broadcast %cst_46 : f32 to vector<16x256xf32>
    %152 = arith.select %150, %151, %103 : vector<16x256xi1>, vector<16x256xf32>
    %c1_i32_53 = arith.constant 1 : i32
    %153 = vector.shape_cast %152 : vector<16x256xf32> to vector<1x16x256xf32>
    %cst_54 = arith.constant dense<0xFF800000> : vector<1xf32>
    %154 = vector.multi_reduction <maximumf>, %153, %cst_54 [1, 2] : vector<1x16x256xf32> to vector<1xf32>
    %155 = vector.shape_cast %154 : vector<1xf32> to vector<1x1x1xf32>
    %156 = vector.extract %155[0, 0, 0] : f32 from vector<1x1x1xf32>
    %157 = vector.broadcast %156 : f32 to vector<16x256xf32>
    %158 = arith.cmpf oeq, %152, %157 : vector<16x256xf32>
    %c2147483647_i32_55 = arith.constant 2147483647 : i32
    %159 = vector.broadcast %c2147483647_i32_55 : i32 to vector<16x256xi32>
    %160 = arith.select %158, %109, %159 : vector<16x256xi1>, vector<16x256xi32>
    %161 = vector.shape_cast %160 : vector<16x256xi32> to vector<1x16x256xi32>
    %cst_56 = arith.constant dense<2147483647> : vector<1xi32>
    %162 = vector.multi_reduction <minsi>, %161, %cst_56 [1, 2] : vector<1x16x256xi32> to vector<1xi32>
    %163 = vector.shape_cast %162 : vector<1xi32> to vector<1x1x1xi32>
    %164 = vector.extract %163[0, 0, 0] : i32 from vector<1x1x1xi32>
    %165 = vector.shape_cast %146 : vector<1x15xf32> to vector<1x1x15xf32>
    %cst_57 = arith.constant dense<0x7F800000> : vector<1xf32>
    %166 = vector.multi_reduction <minimumf>, %165, %cst_57 [1, 2] : vector<1x1x15xf32> to vector<1xf32>
    %167 = vector.shape_cast %166 : vector<1xf32> to vector<1x1x1xf32>
    %168 = vector.extract %167[0, 0, 0] : f32 from vector<1x1x1xf32>
    %169 = vector.broadcast %168 : f32 to vector<1x15xf32>
    %170 = arith.cmpf oeq, %146, %169 : vector<1x15xf32>
    %c2147483647_i32_58 = arith.constant 2147483647 : i32
    %171 = vector.broadcast %c2147483647_i32_58 : i32 to vector<1x15xi32>
    %172 = arith.select %170, %113, %171 : vector<1x15xi1>, vector<1x15xi32>
    %173 = vector.shape_cast %172 : vector<1x15xi32> to vector<1x1x15xi32>
    %cst_59 = arith.constant dense<2147483647> : vector<1xi32>
    %174 = vector.multi_reduction <minsi>, %173, %cst_59 [1, 2] : vector<1x1x15xi32> to vector<1xi32>
    %175 = vector.shape_cast %174 : vector<1xi32> to vector<1x1x1xi32>
    %176 = vector.extract %175[0, 0, 0] : i32 from vector<1x1x1xi32>
    %177 = vector.broadcast %176 : i32 to vector<1x15xi32>
    %178 = arith.cmpi eq, %113, %177 : vector<1x15xi32>
    %179 = arith.cmpf ogt, %156, %168 : f32
    %180 = vector.broadcast %179 : i1 to vector<1x15xi1>
    %181 = arith.andi %178, %180 : vector<1x15xi1>
    %182 = vector.broadcast %156 : f32 to vector<1x15xf32>
    %183 = arith.select %181, %182, %146 : vector<1x15xi1>, vector<1x15xf32>
    %184 = vector.broadcast %164 : i32 to vector<1x15xi32>
    %185 = arith.select %181, %184, %148 : vector<1x15xi1>, vector<1x15xi32>
    %186 = vector.broadcast %164 : i32 to vector<16x256xi32>
    %187 = arith.cmpi eq, %109, %186 : vector<16x256xi32>
    %188 = vector.broadcast %cst_46 : f32 to vector<16x256xf32>
    %189 = arith.select %187, %188, %152 : vector<16x256xi1>, vector<16x256xf32>
    %c2_i32 = arith.constant 2 : i32
    %190 = vector.shape_cast %189 : vector<16x256xf32> to vector<1x16x256xf32>
    %cst_60 = arith.constant dense<0xFF800000> : vector<1xf32>
    %191 = vector.multi_reduction <maximumf>, %190, %cst_60 [1, 2] : vector<1x16x256xf32> to vector<1xf32>
    %192 = vector.shape_cast %191 : vector<1xf32> to vector<1x1x1xf32>
    %193 = vector.extract %192[0, 0, 0] : f32 from vector<1x1x1xf32>
    %194 = vector.broadcast %193 : f32 to vector<16x256xf32>
    %195 = arith.cmpf oeq, %189, %194 : vector<16x256xf32>
    %c2147483647_i32_61 = arith.constant 2147483647 : i32
    %196 = vector.broadcast %c2147483647_i32_61 : i32 to vector<16x256xi32>
    %197 = arith.select %195, %109, %196 : vector<16x256xi1>, vector<16x256xi32>
    %198 = vector.shape_cast %197 : vector<16x256xi32> to vector<1x16x256xi32>
    %cst_62 = arith.constant dense<2147483647> : vector<1xi32>
    %199 = vector.multi_reduction <minsi>, %198, %cst_62 [1, 2] : vector<1x16x256xi32> to vector<1xi32>
    %200 = vector.shape_cast %199 : vector<1xi32> to vector<1x1x1xi32>
    %201 = vector.extract %200[0, 0, 0] : i32 from vector<1x1x1xi32>
    %202 = vector.shape_cast %183 : vector<1x15xf32> to vector<1x1x15xf32>
    %cst_63 = arith.constant dense<0x7F800000> : vector<1xf32>
    %203 = vector.multi_reduction <minimumf>, %202, %cst_63 [1, 2] : vector<1x1x15xf32> to vector<1xf32>
    %204 = vector.shape_cast %203 : vector<1xf32> to vector<1x1x1xf32>
    %205 = vector.extract %204[0, 0, 0] : f32 from vector<1x1x1xf32>
    %206 = vector.broadcast %205 : f32 to vector<1x15xf32>
    %207 = arith.cmpf oeq, %183, %206 : vector<1x15xf32>
    %c2147483647_i32_64 = arith.constant 2147483647 : i32
    %208 = vector.broadcast %c2147483647_i32_64 : i32 to vector<1x15xi32>
    %209 = arith.select %207, %113, %208 : vector<1x15xi1>, vector<1x15xi32>
    %210 = vector.shape_cast %209 : vector<1x15xi32> to vector<1x1x15xi32>
    %cst_65 = arith.constant dense<2147483647> : vector<1xi32>
    %211 = vector.multi_reduction <minsi>, %210, %cst_65 [1, 2] : vector<1x1x15xi32> to vector<1xi32>
    %212 = vector.shape_cast %211 : vector<1xi32> to vector<1x1x1xi32>
    %213 = vector.extract %212[0, 0, 0] : i32 from vector<1x1x1xi32>
    %214 = vector.broadcast %213 : i32 to vector<1x15xi32>
    %215 = arith.cmpi eq, %113, %214 : vector<1x15xi32>
    %216 = arith.cmpf ogt, %193, %205 : f32
    %217 = vector.broadcast %216 : i1 to vector<1x15xi1>
    %218 = arith.andi %215, %217 : vector<1x15xi1>
    %219 = vector.broadcast %193 : f32 to vector<1x15xf32>
    %220 = arith.select %218, %219, %183 : vector<1x15xi1>, vector<1x15xf32>
    %221 = vector.broadcast %201 : i32 to vector<1x15xi32>
    %222 = arith.select %218, %221, %185 : vector<1x15xi1>, vector<1x15xi32>
    %223 = vector.broadcast %201 : i32 to vector<16x256xi32>
    %224 = arith.cmpi eq, %109, %223 : vector<16x256xi32>
    %225 = vector.broadcast %cst_46 : f32 to vector<16x256xf32>
    %226 = arith.select %224, %225, %189 : vector<16x256xi1>, vector<16x256xf32>
    %c3_i32 = arith.constant 3 : i32
    %227 = vector.shape_cast %226 : vector<16x256xf32> to vector<1x16x256xf32>
    %cst_66 = arith.constant dense<0xFF800000> : vector<1xf32>
    %228 = vector.multi_reduction <maximumf>, %227, %cst_66 [1, 2] : vector<1x16x256xf32> to vector<1xf32>
    %229 = vector.shape_cast %228 : vector<1xf32> to vector<1x1x1xf32>
    %230 = vector.extract %229[0, 0, 0] : f32 from vector<1x1x1xf32>
    %231 = vector.broadcast %230 : f32 to vector<16x256xf32>
    %232 = arith.cmpf oeq, %226, %231 : vector<16x256xf32>
    %c2147483647_i32_67 = arith.constant 2147483647 : i32
    %233 = vector.broadcast %c2147483647_i32_67 : i32 to vector<16x256xi32>
    %234 = arith.select %232, %109, %233 : vector<16x256xi1>, vector<16x256xi32>
    %235 = vector.shape_cast %234 : vector<16x256xi32> to vector<1x16x256xi32>
    %cst_68 = arith.constant dense<2147483647> : vector<1xi32>
    %236 = vector.multi_reduction <minsi>, %235, %cst_68 [1, 2] : vector<1x16x256xi32> to vector<1xi32>
    %237 = vector.shape_cast %236 : vector<1xi32> to vector<1x1x1xi32>
    %238 = vector.extract %237[0, 0, 0] : i32 from vector<1x1x1xi32>
    %239 = vector.shape_cast %220 : vector<1x15xf32> to vector<1x1x15xf32>
    %cst_69 = arith.constant dense<0x7F800000> : vector<1xf32>
    %240 = vector.multi_reduction <minimumf>, %239, %cst_69 [1, 2] : vector<1x1x15xf32> to vector<1xf32>
    %241 = vector.shape_cast %240 : vector<1xf32> to vector<1x1x1xf32>
    %242 = vector.extract %241[0, 0, 0] : f32 from vector<1x1x1xf32>
    %243 = vector.broadcast %242 : f32 to vector<1x15xf32>
    %244 = arith.cmpf oeq, %220, %243 : vector<1x15xf32>
    %c2147483647_i32_70 = arith.constant 2147483647 : i32
    %245 = vector.broadcast %c2147483647_i32_70 : i32 to vector<1x15xi32>
    %246 = arith.select %244, %113, %245 : vector<1x15xi1>, vector<1x15xi32>
    %247 = vector.shape_cast %246 : vector<1x15xi32> to vector<1x1x15xi32>
    %cst_71 = arith.constant dense<2147483647> : vector<1xi32>
    %248 = vector.multi_reduction <minsi>, %247, %cst_71 [1, 2] : vector<1x1x15xi32> to vector<1xi32>
    %249 = vector.shape_cast %248 : vector<1xi32> to vector<1x1x1xi32>
    %250 = vector.extract %249[0, 0, 0] : i32 from vector<1x1x1xi32>
    %251 = vector.broadcast %250 : i32 to vector<1x15xi32>
    %252 = arith.cmpi eq, %113, %251 : vector<1x15xi32>
    %253 = arith.cmpf ogt, %230, %242 : f32
    %254 = vector.broadcast %253 : i1 to vector<1x15xi1>
    %255 = arith.andi %252, %254 : vector<1x15xi1>
    %256 = vector.broadcast %230 : f32 to vector<1x15xf32>
    %257 = arith.select %255, %256, %220 : vector<1x15xi1>, vector<1x15xf32>
    %258 = vector.broadcast %238 : i32 to vector<1x15xi32>
    %259 = arith.select %255, %258, %222 : vector<1x15xi1>, vector<1x15xi32>
    %260 = vector.broadcast %238 : i32 to vector<16x256xi32>
    %261 = arith.cmpi eq, %109, %260 : vector<16x256xi32>
    %262 = vector.broadcast %cst_46 : f32 to vector<16x256xf32>
    %263 = arith.select %261, %262, %226 : vector<16x256xi1>, vector<16x256xf32>
    %c4_i32 = arith.constant 4 : i32
    %264 = vector.shape_cast %263 : vector<16x256xf32> to vector<1x16x256xf32>
    %cst_72 = arith.constant dense<0xFF800000> : vector<1xf32>
    %265 = vector.multi_reduction <maximumf>, %264, %cst_72 [1, 2] : vector<1x16x256xf32> to vector<1xf32>
    %266 = vector.shape_cast %265 : vector<1xf32> to vector<1x1x1xf32>
    %267 = vector.extract %266[0, 0, 0] : f32 from vector<1x1x1xf32>
    %268 = vector.broadcast %267 : f32 to vector<16x256xf32>
    %269 = arith.cmpf oeq, %263, %268 : vector<16x256xf32>
    %c2147483647_i32_73 = arith.constant 2147483647 : i32
    %270 = vector.broadcast %c2147483647_i32_73 : i32 to vector<16x256xi32>
    %271 = arith.select %269, %109, %270 : vector<16x256xi1>, vector<16x256xi32>
    %272 = vector.shape_cast %271 : vector<16x256xi32> to vector<1x16x256xi32>
    %cst_74 = arith.constant dense<2147483647> : vector<1xi32>
    %273 = vector.multi_reduction <minsi>, %272, %cst_74 [1, 2] : vector<1x16x256xi32> to vector<1xi32>
    %274 = vector.shape_cast %273 : vector<1xi32> to vector<1x1x1xi32>
    %275 = vector.extract %274[0, 0, 0] : i32 from vector<1x1x1xi32>
    %276 = vector.shape_cast %257 : vector<1x15xf32> to vector<1x1x15xf32>
    %cst_75 = arith.constant dense<0x7F800000> : vector<1xf32>
    %277 = vector.multi_reduction <minimumf>, %276, %cst_75 [1, 2] : vector<1x1x15xf32> to vector<1xf32>
    %278 = vector.shape_cast %277 : vector<1xf32> to vector<1x1x1xf32>
    %279 = vector.extract %278[0, 0, 0] : f32 from vector<1x1x1xf32>
    %280 = vector.broadcast %279 : f32 to vector<1x15xf32>
    %281 = arith.cmpf oeq, %257, %280 : vector<1x15xf32>
    %c2147483647_i32_76 = arith.constant 2147483647 : i32
    %282 = vector.broadcast %c2147483647_i32_76 : i32 to vector<1x15xi32>
    %283 = arith.select %281, %113, %282 : vector<1x15xi1>, vector<1x15xi32>
    %284 = vector.shape_cast %283 : vector<1x15xi32> to vector<1x1x15xi32>
    %cst_77 = arith.constant dense<2147483647> : vector<1xi32>
    %285 = vector.multi_reduction <minsi>, %284, %cst_77 [1, 2] : vector<1x1x15xi32> to vector<1xi32>
    %286 = vector.shape_cast %285 : vector<1xi32> to vector<1x1x1xi32>
    %287 = vector.extract %286[0, 0, 0] : i32 from vector<1x1x1xi32>
    %288 = vector.broadcast %287 : i32 to vector<1x15xi32>
    %289 = arith.cmpi eq, %113, %288 : vector<1x15xi32>
    %290 = arith.cmpf ogt, %267, %279 : f32
    %291 = vector.broadcast %290 : i1 to vector<1x15xi1>
    %292 = arith.andi %289, %291 : vector<1x15xi1>
    %293 = vector.broadcast %267 : f32 to vector<1x15xf32>
    %294 = arith.select %292, %293, %257 : vector<1x15xi1>, vector<1x15xf32>
    %295 = vector.broadcast %275 : i32 to vector<1x15xi32>
    %296 = arith.select %292, %295, %259 : vector<1x15xi1>, vector<1x15xi32>
    %297 = vector.broadcast %275 : i32 to vector<16x256xi32>
    %298 = arith.cmpi eq, %109, %297 : vector<16x256xi32>
    %299 = vector.broadcast %cst_46 : f32 to vector<16x256xf32>
    %300 = arith.select %298, %299, %263 : vector<16x256xi1>, vector<16x256xf32>
    %c5_i32 = arith.constant 5 : i32
    %301 = vector.shape_cast %300 : vector<16x256xf32> to vector<1x16x256xf32>
    %cst_78 = arith.constant dense<0xFF800000> : vector<1xf32>
    %302 = vector.multi_reduction <maximumf>, %301, %cst_78 [1, 2] : vector<1x16x256xf32> to vector<1xf32>
    %303 = vector.shape_cast %302 : vector<1xf32> to vector<1x1x1xf32>
    %304 = vector.extract %303[0, 0, 0] : f32 from vector<1x1x1xf32>
    %305 = vector.broadcast %304 : f32 to vector<16x256xf32>
    %306 = arith.cmpf oeq, %300, %305 : vector<16x256xf32>
    %c2147483647_i32_79 = arith.constant 2147483647 : i32
    %307 = vector.broadcast %c2147483647_i32_79 : i32 to vector<16x256xi32>
    %308 = arith.select %306, %109, %307 : vector<16x256xi1>, vector<16x256xi32>
    %309 = vector.shape_cast %308 : vector<16x256xi32> to vector<1x16x256xi32>
    %cst_80 = arith.constant dense<2147483647> : vector<1xi32>
    %310 = vector.multi_reduction <minsi>, %309, %cst_80 [1, 2] : vector<1x16x256xi32> to vector<1xi32>
    %311 = vector.shape_cast %310 : vector<1xi32> to vector<1x1x1xi32>
    %312 = vector.extract %311[0, 0, 0] : i32 from vector<1x1x1xi32>
    %313 = vector.shape_cast %294 : vector<1x15xf32> to vector<1x1x15xf32>
    %cst_81 = arith.constant dense<0x7F800000> : vector<1xf32>
    %314 = vector.multi_reduction <minimumf>, %313, %cst_81 [1, 2] : vector<1x1x15xf32> to vector<1xf32>
    %315 = vector.shape_cast %314 : vector<1xf32> to vector<1x1x1xf32>
    %316 = vector.extract %315[0, 0, 0] : f32 from vector<1x1x1xf32>
    %317 = vector.broadcast %316 : f32 to vector<1x15xf32>
    %318 = arith.cmpf oeq, %294, %317 : vector<1x15xf32>
    %c2147483647_i32_82 = arith.constant 2147483647 : i32
    %319 = vector.broadcast %c2147483647_i32_82 : i32 to vector<1x15xi32>
    %320 = arith.select %318, %113, %319 : vector<1x15xi1>, vector<1x15xi32>
    %321 = vector.shape_cast %320 : vector<1x15xi32> to vector<1x1x15xi32>
    %cst_83 = arith.constant dense<2147483647> : vector<1xi32>
    %322 = vector.multi_reduction <minsi>, %321, %cst_83 [1, 2] : vector<1x1x15xi32> to vector<1xi32>
    %323 = vector.shape_cast %322 : vector<1xi32> to vector<1x1x1xi32>
    %324 = vector.extract %323[0, 0, 0] : i32 from vector<1x1x1xi32>
    %325 = vector.broadcast %324 : i32 to vector<1x15xi32>
    %326 = arith.cmpi eq, %113, %325 : vector<1x15xi32>
    %327 = arith.cmpf ogt, %304, %316 : f32
    %328 = vector.broadcast %327 : i1 to vector<1x15xi1>
    %329 = arith.andi %326, %328 : vector<1x15xi1>
    %330 = vector.broadcast %304 : f32 to vector<1x15xf32>
    %331 = arith.select %329, %330, %294 : vector<1x15xi1>, vector<1x15xf32>
    %332 = vector.broadcast %312 : i32 to vector<1x15xi32>
    %333 = arith.select %329, %332, %296 : vector<1x15xi1>, vector<1x15xi32>
    %334 = vector.broadcast %312 : i32 to vector<16x256xi32>
    %335 = arith.cmpi eq, %109, %334 : vector<16x256xi32>
    %336 = vector.broadcast %cst_46 : f32 to vector<16x256xf32>
    %337 = arith.select %335, %336, %300 : vector<16x256xi1>, vector<16x256xf32>
    %c6_i32 = arith.constant 6 : i32
    %338 = vector.shape_cast %337 : vector<16x256xf32> to vector<1x16x256xf32>
    %cst_84 = arith.constant dense<0xFF800000> : vector<1xf32>
    %339 = vector.multi_reduction <maximumf>, %338, %cst_84 [1, 2] : vector<1x16x256xf32> to vector<1xf32>
    %340 = vector.shape_cast %339 : vector<1xf32> to vector<1x1x1xf32>
    %341 = vector.extract %340[0, 0, 0] : f32 from vector<1x1x1xf32>
    %342 = vector.broadcast %341 : f32 to vector<16x256xf32>
    %343 = arith.cmpf oeq, %337, %342 : vector<16x256xf32>
    %c2147483647_i32_85 = arith.constant 2147483647 : i32
    %344 = vector.broadcast %c2147483647_i32_85 : i32 to vector<16x256xi32>
    %345 = arith.select %343, %109, %344 : vector<16x256xi1>, vector<16x256xi32>
    %346 = vector.shape_cast %345 : vector<16x256xi32> to vector<1x16x256xi32>
    %cst_86 = arith.constant dense<2147483647> : vector<1xi32>
    %347 = vector.multi_reduction <minsi>, %346, %cst_86 [1, 2] : vector<1x16x256xi32> to vector<1xi32>
    %348 = vector.shape_cast %347 : vector<1xi32> to vector<1x1x1xi32>
    %349 = vector.extract %348[0, 0, 0] : i32 from vector<1x1x1xi32>
    %350 = vector.shape_cast %331 : vector<1x15xf32> to vector<1x1x15xf32>
    %cst_87 = arith.constant dense<0x7F800000> : vector<1xf32>
    %351 = vector.multi_reduction <minimumf>, %350, %cst_87 [1, 2] : vector<1x1x15xf32> to vector<1xf32>
    %352 = vector.shape_cast %351 : vector<1xf32> to vector<1x1x1xf32>
    %353 = vector.extract %352[0, 0, 0] : f32 from vector<1x1x1xf32>
    %354 = vector.broadcast %353 : f32 to vector<1x15xf32>
    %355 = arith.cmpf oeq, %331, %354 : vector<1x15xf32>
    %c2147483647_i32_88 = arith.constant 2147483647 : i32
    %356 = vector.broadcast %c2147483647_i32_88 : i32 to vector<1x15xi32>
    %357 = arith.select %355, %113, %356 : vector<1x15xi1>, vector<1x15xi32>
    %358 = vector.shape_cast %357 : vector<1x15xi32> to vector<1x1x15xi32>
    %cst_89 = arith.constant dense<2147483647> : vector<1xi32>
    %359 = vector.multi_reduction <minsi>, %358, %cst_89 [1, 2] : vector<1x1x15xi32> to vector<1xi32>
    %360 = vector.shape_cast %359 : vector<1xi32> to vector<1x1x1xi32>
    %361 = vector.extract %360[0, 0, 0] : i32 from vector<1x1x1xi32>
    %362 = vector.broadcast %361 : i32 to vector<1x15xi32>
    %363 = arith.cmpi eq, %113, %362 : vector<1x15xi32>
    %364 = arith.cmpf ogt, %341, %353 : f32
    %365 = vector.broadcast %364 : i1 to vector<1x15xi1>
    %366 = arith.andi %363, %365 : vector<1x15xi1>
    %367 = vector.broadcast %341 : f32 to vector<1x15xf32>
    %368 = arith.select %366, %367, %331 : vector<1x15xi1>, vector<1x15xf32>
    %369 = vector.broadcast %349 : i32 to vector<1x15xi32>
    %370 = arith.select %366, %369, %333 : vector<1x15xi1>, vector<1x15xi32>
    %371 = vector.broadcast %349 : i32 to vector<16x256xi32>
    %372 = arith.cmpi eq, %109, %371 : vector<16x256xi32>
    %373 = vector.broadcast %cst_46 : f32 to vector<16x256xf32>
    %374 = arith.select %372, %373, %337 : vector<16x256xi1>, vector<16x256xf32>
    %c7_i32 = arith.constant 7 : i32
    %375 = vector.shape_cast %374 : vector<16x256xf32> to vector<1x16x256xf32>
    %cst_90 = arith.constant dense<0xFF800000> : vector<1xf32>
    %376 = vector.multi_reduction <maximumf>, %375, %cst_90 [1, 2] : vector<1x16x256xf32> to vector<1xf32>
    %377 = vector.shape_cast %376 : vector<1xf32> to vector<1x1x1xf32>
    %378 = vector.extract %377[0, 0, 0] : f32 from vector<1x1x1xf32>
    %379 = vector.broadcast %378 : f32 to vector<16x256xf32>
    %380 = arith.cmpf oeq, %374, %379 : vector<16x256xf32>
    %c2147483647_i32_91 = arith.constant 2147483647 : i32
    %381 = vector.broadcast %c2147483647_i32_91 : i32 to vector<16x256xi32>
    %382 = arith.select %380, %109, %381 : vector<16x256xi1>, vector<16x256xi32>
    %383 = vector.shape_cast %382 : vector<16x256xi32> to vector<1x16x256xi32>
    %cst_92 = arith.constant dense<2147483647> : vector<1xi32>
    %384 = vector.multi_reduction <minsi>, %383, %cst_92 [1, 2] : vector<1x16x256xi32> to vector<1xi32>
    %385 = vector.shape_cast %384 : vector<1xi32> to vector<1x1x1xi32>
    %386 = vector.extract %385[0, 0, 0] : i32 from vector<1x1x1xi32>
    %387 = vector.shape_cast %368 : vector<1x15xf32> to vector<1x1x15xf32>
    %cst_93 = arith.constant dense<0x7F800000> : vector<1xf32>
    %388 = vector.multi_reduction <minimumf>, %387, %cst_93 [1, 2] : vector<1x1x15xf32> to vector<1xf32>
    %389 = vector.shape_cast %388 : vector<1xf32> to vector<1x1x1xf32>
    %390 = vector.extract %389[0, 0, 0] : f32 from vector<1x1x1xf32>
    %391 = vector.broadcast %390 : f32 to vector<1x15xf32>
    %392 = arith.cmpf oeq, %368, %391 : vector<1x15xf32>
    %c2147483647_i32_94 = arith.constant 2147483647 : i32
    %393 = vector.broadcast %c2147483647_i32_94 : i32 to vector<1x15xi32>
    %394 = arith.select %392, %113, %393 : vector<1x15xi1>, vector<1x15xi32>
    %395 = vector.shape_cast %394 : vector<1x15xi32> to vector<1x1x15xi32>
    %cst_95 = arith.constant dense<2147483647> : vector<1xi32>
    %396 = vector.multi_reduction <minsi>, %395, %cst_95 [1, 2] : vector<1x1x15xi32> to vector<1xi32>
    %397 = vector.shape_cast %396 : vector<1xi32> to vector<1x1x1xi32>
    %398 = vector.extract %397[0, 0, 0] : i32 from vector<1x1x1xi32>
    %399 = vector.broadcast %398 : i32 to vector<1x15xi32>
    %400 = arith.cmpi eq, %113, %399 : vector<1x15xi32>
    %401 = arith.cmpf ogt, %378, %390 : f32
    %402 = vector.broadcast %401 : i1 to vector<1x15xi1>
    %403 = arith.andi %400, %402 : vector<1x15xi1>
    %404 = vector.broadcast %378 : f32 to vector<1x15xf32>
    %405 = arith.select %403, %404, %368 : vector<1x15xi1>, vector<1x15xf32>
    %406 = vector.broadcast %386 : i32 to vector<1x15xi32>
    %407 = arith.select %403, %406, %370 : vector<1x15xi1>, vector<1x15xi32>
    %408 = vector.broadcast %386 : i32 to vector<16x256xi32>
    %409 = arith.cmpi eq, %109, %408 : vector<16x256xi32>
    %410 = vector.broadcast %cst_46 : f32 to vector<16x256xf32>
    %411 = arith.select %409, %410, %374 : vector<16x256xi1>, vector<16x256xf32>
    %c8_i32 = arith.constant 8 : i32
    %412 = vector.shape_cast %411 : vector<16x256xf32> to vector<1x16x256xf32>
    %cst_96 = arith.constant dense<0xFF800000> : vector<1xf32>
    %413 = vector.multi_reduction <maximumf>, %412, %cst_96 [1, 2] : vector<1x16x256xf32> to vector<1xf32>
    %414 = vector.shape_cast %413 : vector<1xf32> to vector<1x1x1xf32>
    %415 = vector.extract %414[0, 0, 0] : f32 from vector<1x1x1xf32>
    %416 = vector.broadcast %415 : f32 to vector<16x256xf32>
    %417 = arith.cmpf oeq, %411, %416 : vector<16x256xf32>
    %c2147483647_i32_97 = arith.constant 2147483647 : i32
    %418 = vector.broadcast %c2147483647_i32_97 : i32 to vector<16x256xi32>
    %419 = arith.select %417, %109, %418 : vector<16x256xi1>, vector<16x256xi32>
    %420 = vector.shape_cast %419 : vector<16x256xi32> to vector<1x16x256xi32>
    %cst_98 = arith.constant dense<2147483647> : vector<1xi32>
    %421 = vector.multi_reduction <minsi>, %420, %cst_98 [1, 2] : vector<1x16x256xi32> to vector<1xi32>
    %422 = vector.shape_cast %421 : vector<1xi32> to vector<1x1x1xi32>
    %423 = vector.extract %422[0, 0, 0] : i32 from vector<1x1x1xi32>
    %424 = vector.shape_cast %405 : vector<1x15xf32> to vector<1x1x15xf32>
    %cst_99 = arith.constant dense<0x7F800000> : vector<1xf32>
    %425 = vector.multi_reduction <minimumf>, %424, %cst_99 [1, 2] : vector<1x1x15xf32> to vector<1xf32>
    %426 = vector.shape_cast %425 : vector<1xf32> to vector<1x1x1xf32>
    %427 = vector.extract %426[0, 0, 0] : f32 from vector<1x1x1xf32>
    %428 = vector.broadcast %427 : f32 to vector<1x15xf32>
    %429 = arith.cmpf oeq, %405, %428 : vector<1x15xf32>
    %c2147483647_i32_100 = arith.constant 2147483647 : i32
    %430 = vector.broadcast %c2147483647_i32_100 : i32 to vector<1x15xi32>
    %431 = arith.select %429, %113, %430 : vector<1x15xi1>, vector<1x15xi32>
    %432 = vector.shape_cast %431 : vector<1x15xi32> to vector<1x1x15xi32>
    %cst_101 = arith.constant dense<2147483647> : vector<1xi32>
    %433 = vector.multi_reduction <minsi>, %432, %cst_101 [1, 2] : vector<1x1x15xi32> to vector<1xi32>
    %434 = vector.shape_cast %433 : vector<1xi32> to vector<1x1x1xi32>
    %435 = vector.extract %434[0, 0, 0] : i32 from vector<1x1x1xi32>
    %436 = vector.broadcast %435 : i32 to vector<1x15xi32>
    %437 = arith.cmpi eq, %113, %436 : vector<1x15xi32>
    %438 = arith.cmpf ogt, %415, %427 : f32
    %439 = vector.broadcast %438 : i1 to vector<1x15xi1>
    %440 = arith.andi %437, %439 : vector<1x15xi1>
    %441 = vector.broadcast %415 : f32 to vector<1x15xf32>
    %442 = arith.select %440, %441, %405 : vector<1x15xi1>, vector<1x15xf32>
    %443 = vector.broadcast %423 : i32 to vector<1x15xi32>
    %444 = arith.select %440, %443, %407 : vector<1x15xi1>, vector<1x15xi32>
    %445 = vector.broadcast %423 : i32 to vector<16x256xi32>
    %446 = arith.cmpi eq, %109, %445 : vector<16x256xi32>
    %447 = vector.broadcast %cst_46 : f32 to vector<16x256xf32>
    %448 = arith.select %446, %447, %411 : vector<16x256xi1>, vector<16x256xf32>
    %c9_i32 = arith.constant 9 : i32
    %449 = vector.shape_cast %448 : vector<16x256xf32> to vector<1x16x256xf32>
    %cst_102 = arith.constant dense<0xFF800000> : vector<1xf32>
    %450 = vector.multi_reduction <maximumf>, %449, %cst_102 [1, 2] : vector<1x16x256xf32> to vector<1xf32>
    %451 = vector.shape_cast %450 : vector<1xf32> to vector<1x1x1xf32>
    %452 = vector.extract %451[0, 0, 0] : f32 from vector<1x1x1xf32>
    %453 = vector.broadcast %452 : f32 to vector<16x256xf32>
    %454 = arith.cmpf oeq, %448, %453 : vector<16x256xf32>
    %c2147483647_i32_103 = arith.constant 2147483647 : i32
    %455 = vector.broadcast %c2147483647_i32_103 : i32 to vector<16x256xi32>
    %456 = arith.select %454, %109, %455 : vector<16x256xi1>, vector<16x256xi32>
    %457 = vector.shape_cast %456 : vector<16x256xi32> to vector<1x16x256xi32>
    %cst_104 = arith.constant dense<2147483647> : vector<1xi32>
    %458 = vector.multi_reduction <minsi>, %457, %cst_104 [1, 2] : vector<1x16x256xi32> to vector<1xi32>
    %459 = vector.shape_cast %458 : vector<1xi32> to vector<1x1x1xi32>
    %460 = vector.extract %459[0, 0, 0] : i32 from vector<1x1x1xi32>
    %461 = vector.shape_cast %442 : vector<1x15xf32> to vector<1x1x15xf32>
    %cst_105 = arith.constant dense<0x7F800000> : vector<1xf32>
    %462 = vector.multi_reduction <minimumf>, %461, %cst_105 [1, 2] : vector<1x1x15xf32> to vector<1xf32>
    %463 = vector.shape_cast %462 : vector<1xf32> to vector<1x1x1xf32>
    %464 = vector.extract %463[0, 0, 0] : f32 from vector<1x1x1xf32>
    %465 = vector.broadcast %464 : f32 to vector<1x15xf32>
    %466 = arith.cmpf oeq, %442, %465 : vector<1x15xf32>
    %c2147483647_i32_106 = arith.constant 2147483647 : i32
    %467 = vector.broadcast %c2147483647_i32_106 : i32 to vector<1x15xi32>
    %468 = arith.select %466, %113, %467 : vector<1x15xi1>, vector<1x15xi32>
    %469 = vector.shape_cast %468 : vector<1x15xi32> to vector<1x1x15xi32>
    %cst_107 = arith.constant dense<2147483647> : vector<1xi32>
    %470 = vector.multi_reduction <minsi>, %469, %cst_107 [1, 2] : vector<1x1x15xi32> to vector<1xi32>
    %471 = vector.shape_cast %470 : vector<1xi32> to vector<1x1x1xi32>
    %472 = vector.extract %471[0, 0, 0] : i32 from vector<1x1x1xi32>
    %473 = vector.broadcast %472 : i32 to vector<1x15xi32>
    %474 = arith.cmpi eq, %113, %473 : vector<1x15xi32>
    %475 = arith.cmpf ogt, %452, %464 : f32
    %476 = vector.broadcast %475 : i1 to vector<1x15xi1>
    %477 = arith.andi %474, %476 : vector<1x15xi1>
    %478 = vector.broadcast %452 : f32 to vector<1x15xf32>
    %479 = arith.select %477, %478, %442 : vector<1x15xi1>, vector<1x15xf32>
    %480 = vector.broadcast %460 : i32 to vector<1x15xi32>
    %481 = arith.select %477, %480, %444 : vector<1x15xi1>, vector<1x15xi32>
    %482 = vector.broadcast %460 : i32 to vector<16x256xi32>
    %483 = arith.cmpi eq, %109, %482 : vector<16x256xi32>
    %484 = vector.broadcast %cst_46 : f32 to vector<16x256xf32>
    %485 = arith.select %483, %484, %448 : vector<16x256xi1>, vector<16x256xf32>
    %c10_i32 = arith.constant 10 : i32
    %486 = vector.shape_cast %485 : vector<16x256xf32> to vector<1x16x256xf32>
    %cst_108 = arith.constant dense<0xFF800000> : vector<1xf32>
    %487 = vector.multi_reduction <maximumf>, %486, %cst_108 [1, 2] : vector<1x16x256xf32> to vector<1xf32>
    %488 = vector.shape_cast %487 : vector<1xf32> to vector<1x1x1xf32>
    %489 = vector.extract %488[0, 0, 0] : f32 from vector<1x1x1xf32>
    %490 = vector.broadcast %489 : f32 to vector<16x256xf32>
    %491 = arith.cmpf oeq, %485, %490 : vector<16x256xf32>
    %c2147483647_i32_109 = arith.constant 2147483647 : i32
    %492 = vector.broadcast %c2147483647_i32_109 : i32 to vector<16x256xi32>
    %493 = arith.select %491, %109, %492 : vector<16x256xi1>, vector<16x256xi32>
    %494 = vector.shape_cast %493 : vector<16x256xi32> to vector<1x16x256xi32>
    %cst_110 = arith.constant dense<2147483647> : vector<1xi32>
    %495 = vector.multi_reduction <minsi>, %494, %cst_110 [1, 2] : vector<1x16x256xi32> to vector<1xi32>
    %496 = vector.shape_cast %495 : vector<1xi32> to vector<1x1x1xi32>
    %497 = vector.extract %496[0, 0, 0] : i32 from vector<1x1x1xi32>
    %498 = vector.shape_cast %479 : vector<1x15xf32> to vector<1x1x15xf32>
    %cst_111 = arith.constant dense<0x7F800000> : vector<1xf32>
    %499 = vector.multi_reduction <minimumf>, %498, %cst_111 [1, 2] : vector<1x1x15xf32> to vector<1xf32>
    %500 = vector.shape_cast %499 : vector<1xf32> to vector<1x1x1xf32>
    %501 = vector.extract %500[0, 0, 0] : f32 from vector<1x1x1xf32>
    %502 = vector.broadcast %501 : f32 to vector<1x15xf32>
    %503 = arith.cmpf oeq, %479, %502 : vector<1x15xf32>
    %c2147483647_i32_112 = arith.constant 2147483647 : i32
    %504 = vector.broadcast %c2147483647_i32_112 : i32 to vector<1x15xi32>
    %505 = arith.select %503, %113, %504 : vector<1x15xi1>, vector<1x15xi32>
    %506 = vector.shape_cast %505 : vector<1x15xi32> to vector<1x1x15xi32>
    %cst_113 = arith.constant dense<2147483647> : vector<1xi32>
    %507 = vector.multi_reduction <minsi>, %506, %cst_113 [1, 2] : vector<1x1x15xi32> to vector<1xi32>
    %508 = vector.shape_cast %507 : vector<1xi32> to vector<1x1x1xi32>
    %509 = vector.extract %508[0, 0, 0] : i32 from vector<1x1x1xi32>
    %510 = vector.broadcast %509 : i32 to vector<1x15xi32>
    %511 = arith.cmpi eq, %113, %510 : vector<1x15xi32>
    %512 = arith.cmpf ogt, %489, %501 : f32
    %513 = vector.broadcast %512 : i1 to vector<1x15xi1>
    %514 = arith.andi %511, %513 : vector<1x15xi1>
    %515 = vector.broadcast %489 : f32 to vector<1x15xf32>
    %516 = arith.select %514, %515, %479 : vector<1x15xi1>, vector<1x15xf32>
    %517 = vector.broadcast %497 : i32 to vector<1x15xi32>
    %518 = arith.select %514, %517, %481 : vector<1x15xi1>, vector<1x15xi32>
    %519 = vector.broadcast %497 : i32 to vector<16x256xi32>
    %520 = arith.cmpi eq, %109, %519 : vector<16x256xi32>
    %521 = vector.broadcast %cst_46 : f32 to vector<16x256xf32>
    %522 = arith.select %520, %521, %485 : vector<16x256xi1>, vector<16x256xf32>
    %c11_i32 = arith.constant 11 : i32
    %523 = vector.shape_cast %522 : vector<16x256xf32> to vector<1x16x256xf32>
    %cst_114 = arith.constant dense<0xFF800000> : vector<1xf32>
    %524 = vector.multi_reduction <maximumf>, %523, %cst_114 [1, 2] : vector<1x16x256xf32> to vector<1xf32>
    %525 = vector.shape_cast %524 : vector<1xf32> to vector<1x1x1xf32>
    %526 = vector.extract %525[0, 0, 0] : f32 from vector<1x1x1xf32>
    %527 = vector.broadcast %526 : f32 to vector<16x256xf32>
    %528 = arith.cmpf oeq, %522, %527 : vector<16x256xf32>
    %c2147483647_i32_115 = arith.constant 2147483647 : i32
    %529 = vector.broadcast %c2147483647_i32_115 : i32 to vector<16x256xi32>
    %530 = arith.select %528, %109, %529 : vector<16x256xi1>, vector<16x256xi32>
    %531 = vector.shape_cast %530 : vector<16x256xi32> to vector<1x16x256xi32>
    %cst_116 = arith.constant dense<2147483647> : vector<1xi32>
    %532 = vector.multi_reduction <minsi>, %531, %cst_116 [1, 2] : vector<1x16x256xi32> to vector<1xi32>
    %533 = vector.shape_cast %532 : vector<1xi32> to vector<1x1x1xi32>
    %534 = vector.extract %533[0, 0, 0] : i32 from vector<1x1x1xi32>
    %535 = vector.shape_cast %516 : vector<1x15xf32> to vector<1x1x15xf32>
    %cst_117 = arith.constant dense<0x7F800000> : vector<1xf32>
    %536 = vector.multi_reduction <minimumf>, %535, %cst_117 [1, 2] : vector<1x1x15xf32> to vector<1xf32>
    %537 = vector.shape_cast %536 : vector<1xf32> to vector<1x1x1xf32>
    %538 = vector.extract %537[0, 0, 0] : f32 from vector<1x1x1xf32>
    %539 = vector.broadcast %538 : f32 to vector<1x15xf32>
    %540 = arith.cmpf oeq, %516, %539 : vector<1x15xf32>
    %c2147483647_i32_118 = arith.constant 2147483647 : i32
    %541 = vector.broadcast %c2147483647_i32_118 : i32 to vector<1x15xi32>
    %542 = arith.select %540, %113, %541 : vector<1x15xi1>, vector<1x15xi32>
    %543 = vector.shape_cast %542 : vector<1x15xi32> to vector<1x1x15xi32>
    %cst_119 = arith.constant dense<2147483647> : vector<1xi32>
    %544 = vector.multi_reduction <minsi>, %543, %cst_119 [1, 2] : vector<1x1x15xi32> to vector<1xi32>
    %545 = vector.shape_cast %544 : vector<1xi32> to vector<1x1x1xi32>
    %546 = vector.extract %545[0, 0, 0] : i32 from vector<1x1x1xi32>
    %547 = vector.broadcast %546 : i32 to vector<1x15xi32>
    %548 = arith.cmpi eq, %113, %547 : vector<1x15xi32>
    %549 = arith.cmpf ogt, %526, %538 : f32
    %550 = vector.broadcast %549 : i1 to vector<1x15xi1>
    %551 = arith.andi %548, %550 : vector<1x15xi1>
    %552 = vector.broadcast %526 : f32 to vector<1x15xf32>
    %553 = arith.select %551, %552, %516 : vector<1x15xi1>, vector<1x15xf32>
    %554 = vector.broadcast %534 : i32 to vector<1x15xi32>
    %555 = arith.select %551, %554, %518 : vector<1x15xi1>, vector<1x15xi32>
    %556 = vector.broadcast %534 : i32 to vector<16x256xi32>
    %557 = arith.cmpi eq, %109, %556 : vector<16x256xi32>
    %558 = vector.broadcast %cst_46 : f32 to vector<16x256xf32>
    %559 = arith.select %557, %558, %522 : vector<16x256xi1>, vector<16x256xf32>
    %c12_i32 = arith.constant 12 : i32
    %560 = vector.shape_cast %559 : vector<16x256xf32> to vector<1x16x256xf32>
    %cst_120 = arith.constant dense<0xFF800000> : vector<1xf32>
    %561 = vector.multi_reduction <maximumf>, %560, %cst_120 [1, 2] : vector<1x16x256xf32> to vector<1xf32>
    %562 = vector.shape_cast %561 : vector<1xf32> to vector<1x1x1xf32>
    %563 = vector.extract %562[0, 0, 0] : f32 from vector<1x1x1xf32>
    %564 = vector.broadcast %563 : f32 to vector<16x256xf32>
    %565 = arith.cmpf oeq, %559, %564 : vector<16x256xf32>
    %c2147483647_i32_121 = arith.constant 2147483647 : i32
    %566 = vector.broadcast %c2147483647_i32_121 : i32 to vector<16x256xi32>
    %567 = arith.select %565, %109, %566 : vector<16x256xi1>, vector<16x256xi32>
    %568 = vector.shape_cast %567 : vector<16x256xi32> to vector<1x16x256xi32>
    %cst_122 = arith.constant dense<2147483647> : vector<1xi32>
    %569 = vector.multi_reduction <minsi>, %568, %cst_122 [1, 2] : vector<1x16x256xi32> to vector<1xi32>
    %570 = vector.shape_cast %569 : vector<1xi32> to vector<1x1x1xi32>
    %571 = vector.extract %570[0, 0, 0] : i32 from vector<1x1x1xi32>
    %572 = vector.shape_cast %553 : vector<1x15xf32> to vector<1x1x15xf32>
    %cst_123 = arith.constant dense<0x7F800000> : vector<1xf32>
    %573 = vector.multi_reduction <minimumf>, %572, %cst_123 [1, 2] : vector<1x1x15xf32> to vector<1xf32>
    %574 = vector.shape_cast %573 : vector<1xf32> to vector<1x1x1xf32>
    %575 = vector.extract %574[0, 0, 0] : f32 from vector<1x1x1xf32>
    %576 = vector.broadcast %575 : f32 to vector<1x15xf32>
    %577 = arith.cmpf oeq, %553, %576 : vector<1x15xf32>
    %c2147483647_i32_124 = arith.constant 2147483647 : i32
    %578 = vector.broadcast %c2147483647_i32_124 : i32 to vector<1x15xi32>
    %579 = arith.select %577, %113, %578 : vector<1x15xi1>, vector<1x15xi32>
    %580 = vector.shape_cast %579 : vector<1x15xi32> to vector<1x1x15xi32>
    %cst_125 = arith.constant dense<2147483647> : vector<1xi32>
    %581 = vector.multi_reduction <minsi>, %580, %cst_125 [1, 2] : vector<1x1x15xi32> to vector<1xi32>
    %582 = vector.shape_cast %581 : vector<1xi32> to vector<1x1x1xi32>
    %583 = vector.extract %582[0, 0, 0] : i32 from vector<1x1x1xi32>
    %584 = vector.broadcast %583 : i32 to vector<1x15xi32>
    %585 = arith.cmpi eq, %113, %584 : vector<1x15xi32>
    %586 = arith.cmpf ogt, %563, %575 : f32
    %587 = vector.broadcast %586 : i1 to vector<1x15xi1>
    %588 = arith.andi %585, %587 : vector<1x15xi1>
    %589 = vector.broadcast %563 : f32 to vector<1x15xf32>
    %590 = arith.select %588, %589, %553 : vector<1x15xi1>, vector<1x15xf32>
    %591 = vector.broadcast %571 : i32 to vector<1x15xi32>
    %592 = arith.select %588, %591, %555 : vector<1x15xi1>, vector<1x15xi32>
    %593 = vector.broadcast %571 : i32 to vector<16x256xi32>
    %594 = arith.cmpi eq, %109, %593 : vector<16x256xi32>
    %595 = vector.broadcast %cst_46 : f32 to vector<16x256xf32>
    %596 = arith.select %594, %595, %559 : vector<16x256xi1>, vector<16x256xf32>
    %c13_i32 = arith.constant 13 : i32
    %597 = vector.shape_cast %596 : vector<16x256xf32> to vector<1x16x256xf32>
    %cst_126 = arith.constant dense<0xFF800000> : vector<1xf32>
    %598 = vector.multi_reduction <maximumf>, %597, %cst_126 [1, 2] : vector<1x16x256xf32> to vector<1xf32>
    %599 = vector.shape_cast %598 : vector<1xf32> to vector<1x1x1xf32>
    %600 = vector.extract %599[0, 0, 0] : f32 from vector<1x1x1xf32>
    %601 = vector.broadcast %600 : f32 to vector<16x256xf32>
    %602 = arith.cmpf oeq, %596, %601 : vector<16x256xf32>
    %c2147483647_i32_127 = arith.constant 2147483647 : i32
    %603 = vector.broadcast %c2147483647_i32_127 : i32 to vector<16x256xi32>
    %604 = arith.select %602, %109, %603 : vector<16x256xi1>, vector<16x256xi32>
    %605 = vector.shape_cast %604 : vector<16x256xi32> to vector<1x16x256xi32>
    %cst_128 = arith.constant dense<2147483647> : vector<1xi32>
    %606 = vector.multi_reduction <minsi>, %605, %cst_128 [1, 2] : vector<1x16x256xi32> to vector<1xi32>
    %607 = vector.shape_cast %606 : vector<1xi32> to vector<1x1x1xi32>
    %608 = vector.extract %607[0, 0, 0] : i32 from vector<1x1x1xi32>
    %609 = vector.shape_cast %590 : vector<1x15xf32> to vector<1x1x15xf32>
    %cst_129 = arith.constant dense<0x7F800000> : vector<1xf32>
    %610 = vector.multi_reduction <minimumf>, %609, %cst_129 [1, 2] : vector<1x1x15xf32> to vector<1xf32>
    %611 = vector.shape_cast %610 : vector<1xf32> to vector<1x1x1xf32>
    %612 = vector.extract %611[0, 0, 0] : f32 from vector<1x1x1xf32>
    %613 = vector.broadcast %612 : f32 to vector<1x15xf32>
    %614 = arith.cmpf oeq, %590, %613 : vector<1x15xf32>
    %c2147483647_i32_130 = arith.constant 2147483647 : i32
    %615 = vector.broadcast %c2147483647_i32_130 : i32 to vector<1x15xi32>
    %616 = arith.select %614, %113, %615 : vector<1x15xi1>, vector<1x15xi32>
    %617 = vector.shape_cast %616 : vector<1x15xi32> to vector<1x1x15xi32>
    %cst_131 = arith.constant dense<2147483647> : vector<1xi32>
    %618 = vector.multi_reduction <minsi>, %617, %cst_131 [1, 2] : vector<1x1x15xi32> to vector<1xi32>
    %619 = vector.shape_cast %618 : vector<1xi32> to vector<1x1x1xi32>
    %620 = vector.extract %619[0, 0, 0] : i32 from vector<1x1x1xi32>
    %621 = vector.broadcast %620 : i32 to vector<1x15xi32>
    %622 = arith.cmpi eq, %113, %621 : vector<1x15xi32>
    %623 = arith.cmpf ogt, %600, %612 : f32
    %624 = vector.broadcast %623 : i1 to vector<1x15xi1>
    %625 = arith.andi %622, %624 : vector<1x15xi1>
    %626 = vector.broadcast %600 : f32 to vector<1x15xf32>
    %627 = arith.select %625, %626, %590 : vector<1x15xi1>, vector<1x15xf32>
    %628 = vector.broadcast %608 : i32 to vector<1x15xi32>
    %629 = arith.select %625, %628, %592 : vector<1x15xi1>, vector<1x15xi32>
    %630 = vector.broadcast %608 : i32 to vector<16x256xi32>
    %631 = arith.cmpi eq, %109, %630 : vector<16x256xi32>
    %632 = vector.broadcast %cst_46 : f32 to vector<16x256xf32>
    %633 = arith.select %631, %632, %596 : vector<16x256xi1>, vector<16x256xf32>
    %c14_i32 = arith.constant 14 : i32
    %634 = vector.shape_cast %633 : vector<16x256xf32> to vector<1x16x256xf32>
    %cst_132 = arith.constant dense<0xFF800000> : vector<1xf32>
    %635 = vector.multi_reduction <maximumf>, %634, %cst_132 [1, 2] : vector<1x16x256xf32> to vector<1xf32>
    %636 = vector.shape_cast %635 : vector<1xf32> to vector<1x1x1xf32>
    %637 = vector.extract %636[0, 0, 0] : f32 from vector<1x1x1xf32>
    %638 = vector.broadcast %637 : f32 to vector<16x256xf32>
    %639 = arith.cmpf oeq, %633, %638 : vector<16x256xf32>
    %c2147483647_i32_133 = arith.constant 2147483647 : i32
    %640 = vector.broadcast %c2147483647_i32_133 : i32 to vector<16x256xi32>
    %641 = arith.select %639, %109, %640 : vector<16x256xi1>, vector<16x256xi32>
    %642 = vector.shape_cast %641 : vector<16x256xi32> to vector<1x16x256xi32>
    %cst_134 = arith.constant dense<2147483647> : vector<1xi32>
    %643 = vector.multi_reduction <minsi>, %642, %cst_134 [1, 2] : vector<1x16x256xi32> to vector<1xi32>
    %644 = vector.shape_cast %643 : vector<1xi32> to vector<1x1x1xi32>
    %645 = vector.extract %644[0, 0, 0] : i32 from vector<1x1x1xi32>
    %646 = vector.shape_cast %627 : vector<1x15xf32> to vector<1x1x15xf32>
    %cst_135 = arith.constant dense<0x7F800000> : vector<1xf32>
    %647 = vector.multi_reduction <minimumf>, %646, %cst_135 [1, 2] : vector<1x1x15xf32> to vector<1xf32>
    %648 = vector.shape_cast %647 : vector<1xf32> to vector<1x1x1xf32>
    %649 = vector.extract %648[0, 0, 0] : f32 from vector<1x1x1xf32>
    %650 = vector.broadcast %649 : f32 to vector<1x15xf32>
    %651 = arith.cmpf oeq, %627, %650 : vector<1x15xf32>
    %c2147483647_i32_136 = arith.constant 2147483647 : i32
    %652 = vector.broadcast %c2147483647_i32_136 : i32 to vector<1x15xi32>
    %653 = arith.select %651, %113, %652 : vector<1x15xi1>, vector<1x15xi32>
    %654 = vector.shape_cast %653 : vector<1x15xi32> to vector<1x1x15xi32>
    %cst_137 = arith.constant dense<2147483647> : vector<1xi32>
    %655 = vector.multi_reduction <minsi>, %654, %cst_137 [1, 2] : vector<1x1x15xi32> to vector<1xi32>
    %656 = vector.shape_cast %655 : vector<1xi32> to vector<1x1x1xi32>
    %657 = vector.extract %656[0, 0, 0] : i32 from vector<1x1x1xi32>
    %658 = vector.broadcast %657 : i32 to vector<1x15xi32>
    %659 = arith.cmpi eq, %113, %658 : vector<1x15xi32>
    %660 = arith.cmpf ogt, %637, %649 : f32
    %661 = vector.broadcast %660 : i1 to vector<1x15xi1>
    %662 = arith.andi %659, %661 : vector<1x15xi1>
    %663 = vector.broadcast %637 : f32 to vector<1x15xf32>
    %664 = arith.select %662, %663, %627 : vector<1x15xi1>, vector<1x15xf32>
    %665 = vector.broadcast %645 : i32 to vector<1x15xi32>
    %666 = arith.select %662, %665, %629 : vector<1x15xi1>, vector<1x15xi32>
    %667 = vector.broadcast %645 : i32 to vector<16x256xi32>
    %668 = arith.cmpi eq, %109, %667 : vector<16x256xi32>
    %669 = vector.broadcast %cst_46 : f32 to vector<16x256xf32>
    %670 = arith.select %668, %669, %633 : vector<16x256xi1>, vector<16x256xf32>
    %c0_138 = arith.constant 0 : index
    %c0_139 = arith.constant 0 : index
    %671 = vector.load %arg4[%c0_138, %c0_139] : memref<1x15xf32, #tpu.memory_space<vmem>>, vector<1x15xf32>
    tpu.vector_store %arg4[%c0_138, %c0_139], %664 {strides = array<i32>} : memref<1x15xf32, #tpu.memory_space<vmem>>, vector<1x15xf32>,
    %c0_140 = arith.constant 0 : index
    %c0_141 = arith.constant 0 : index
    %672 = vector.load %arg5[%c0_140, %c0_141] : memref<1x15xi32, #tpu.memory_space<vmem>>, vector<1x15xi32>
    tpu.vector_store %arg5[%c0_140, %c0_141], %666 {strides = array<i32>} : memref<1x15xi32, #tpu.memory_space<vmem>>, vector<1x15xi32>,
    return
  }
  func.func @transform_0(%arg0: i32) -> (i32, i32) {
    %c0_i32 = arith.constant 0 : i32
    %c0_i32_0 = arith.constant 0 : i32
    return %arg0, %c0_i32 : i32, i32
  }
  func.func @transform_1(%arg0: i32) -> (i32, i32) {
    %c2_i32 = arith.constant 2 : i32
    %0 = arith.muli %arg0, %c2_i32 : i32
    %c1_i32 = arith.constant 1 : i32
    %1 = arith.subi %0, %c1_i32 : i32
    %c0_i32 = arith.constant 0 : i32
    %2 = arith.maxsi %1, %c0_i32 : i32
    %c0_i32_0 = arith.constant 0 : i32
    %c0_i32_1 = arith.constant 0 : i32
    return %2, %c0_i32_0 : i32, i32
  }
  func.func @transform_2(%arg0: i32) -> (i32, i32) {
    %c2_i32 = arith.constant 2 : i32
    %0 = arith.muli %arg0, %c2_i32 : i32
    %c2_i32_0 = arith.constant 2 : i32
    %1 = arith.addi %0, %c2_i32_0 : i32
    %c1_i32 = arith.constant 1 : i32
    %2 = arith.minsi %1, %c1_i32 : i32
    %c0_i32 = arith.constant 0 : i32
    %c0_i32_1 = arith.constant 0 : i32
    return %2, %c0_i32 : i32, i32
  }
  func.func @transform_3(%arg0: i32) -> (i32, i32) {
    %c0_i32 = arith.constant 0 : i32
    %c0_i32_0 = arith.constant 0 : i32
    %c0_i32_1 = arith.constant 0 : i32
    return %c0_i32, %c0_i32_0 : i32, i32
  }
  func.func @transform_4(%arg0: i32) -> (i32, i32) {
    %c0_i32 = arith.constant 0 : i32
    %c0_i32_0 = arith.constant 0 : i32
    %c0_i32_1 = arith.constant 0 : i32
    return %c0_i32, %c0_i32_0 : i32, i32
  }
}

</mosaic_0001>

<llo_original>
// kernel: squeeze.22
$region0: #{squeeze.22}
  %s0 = inlined_call_operand.hbm [shape: f32[1,1,16,16,16], index: 0, kind: input, shape index: {}]
  %s1 = inlined_call_operand.vmem [shape: f32[16,256], index: 1, kind: output, shape index: {}]
  $region1: #{squeeze.22} parent=0
    #allocation0 [shape = 'u8[131072]{0}', space=vmem, size = 0x20000, scoped, tag = 'operand span for operand 0']
    #allocation1 [shape = 's32[1]{0}', space=sflag, size = 0x4, scoped, tag = 'scoped memory for squeeze.22']
    %2 = vsyncpa [#allocation1], 0
    %s4 = ssub.s32 4096, 4096
    %5 = vsyncadd [#allocation1], %s4
    %s7 = sshll.u32 [#allocation0], 4
    %s8 = int_to_ptr.vmem [resolvable:$true] %s7
    %10 = dma.hbm_to_vmem [thread:$0]  %s0, 4096, %s8, [#allocation1]
    %11 = dma.done [#allocation1], 4096
    %v12 = vld [vmem:[#allocation0] ss:$8 sm:$0xf]
    %v13 = vld [vmem:[#allocation0] ss:$8 sm:$0xf0]
    %vm14 = vcmask 1047556
    %v15 = vsel %vm14, %v13, %v12
    %vm16 = vcmask 130048
    %17 = vst.msk [vmem:[%s1] ss:$8 sm:$0x3] %vm16, %v15
    %s18 = scalar_lea.vmem %s1, 4294967281
    %19 = vst.msk [vmem:[%s18] ss:$8 sm:$0xc] %vm16, %v15
    %s20 = scalar_lea.vmem %s1, 4294967266
    %21 = vst.msk [vmem:[%s20] ss:$8 sm:$0x30] %vm16, %v15
    %s22 = scalar_lea.vmem %s1, 4294967251
    %23 = vst.msk [vmem:[%s22] ss:$8 sm:$0xc0] %vm16, %v15
    %s24 = scalar_lea.vmem [#allocation0], 64
    %v25 = vld [vmem:[%s24] ss:$8 sm:$0xf]
    %s26 = scalar_lea.vmem [#allocation0], 64
    %v27 = vld [vmem:[%s26] ss:$8 sm:$0xf0]
    %vm28 = vcmask 1047556
    %v29 = vsel %vm28, %v27, %v25
    %vm30 = vcmask 130048
    %s31 = scalar_lea.vmem %s1, 4
    %32 = vst.msk [vmem:[%s31] ss:$8 sm:$0x3] %vm30, %v29
    %s33 = scalar_lea.vmem %s1, 4294967285
    %34 = vst.msk [vmem:[%s33] ss:$8 sm:$0xc] %vm30, %v29
    %s35 = scalar_lea.vmem %s1, 4294967270
    %36 = vst.msk [vmem:[%s35] ss:$8 sm:$0x30] %vm30, %v29
    %s37 = scalar_lea.vmem %s1, 4294967255
    %38 = vst.msk [vmem:[%s37] ss:$8 sm:$0xc0] %vm30, %v29
    %s39 = scalar_lea.vmem [#allocation0], 128
    %v40 = vld [vmem:[%s39] ss:$8 sm:$0xf]
    %s41 = scalar_lea.vmem [#allocation0], 128
    %v42 = vld [vmem:[%s41] ss:$8 sm:$0xf0]
    %vm43 = vcmask 1047556
    %v44 = vsel %vm43, %v42, %v40
    %vm45 = vcmask 130048
    %s46 = scalar_lea.vmem %s1, 16
    %47 = vst.msk [vmem:[%s46] ss:$8 sm:$0x3] %vm45, %v44
    %s48 = scalar_lea.vmem %s1, 1
    %49 = vst.msk [vmem:[%s48] ss:$8 sm:$0xc] %vm45, %v44
    %s50 = scalar_lea.vmem %s1, 4294967282
    %51 = vst.msk [vmem:[%s50] ss:$8 sm:$0x30] %vm45, %v44
    %s52 = scalar_lea.vmem %s1, 4294967267
    %53 = vst.msk [vmem:[%s52] ss:$8 sm:$0xc0] %vm45, %v44
    %s54 = scalar_lea.vmem [#allocation0], 192
    %v55 = vld [vmem:[%s54] ss:$8 sm:$0xf]
    %s56 = scalar_lea.vmem [#allocation0], 192
    %v57 = vld [vmem:[%s56] ss:$8 sm:$0xf0]
    %vm58 = vcmask 1047556
    %v59 = vsel %vm58, %v57, %v55
    %vm60 = vcmask 130048
    %s61 = scalar_lea.vmem %s1, 20
    %62 = vst.msk [vmem:[%s61] ss:$8 sm:$0x3] %vm60, %v59
    %s63 = scalar_lea.vmem %s1, 5
    %64 = vst.msk [vmem:[%s63] ss:$8 sm:$0xc] %vm60, %v59
    %s65 = scalar_lea.vmem %s1, 4294967286
    %66 = vst.msk [vmem:[%s65] ss:$8 sm:$0x30] %vm60, %v59
    %s67 = scalar_lea.vmem %s1, 4294967271
    %68 = vst.msk [vmem:[%s67] ss:$8 sm:$0xc0] %vm60, %v59
    %s69 = scalar_lea.vmem [#allocation0], 7
    %s70 = smov 3
    %v71 = vld [vmem:[%s69] ss:$16 sm:%s70]
    %s72 = scalar_lea.vmem [#allocation0], 7
    %s73 = smov 12
    %v74 = vld [vmem:[%s72] ss:$16 sm:%s73]
    %vm75 = vcmask 1043458
    %v76 = vsel %vm75, %v74, %v71
    %s77 = scalar_lea.vmem [#allocation0], 7
    %s78 = smov 48
    %v79 = vld [vmem:[%s77] ss:$16 sm:%s78]
    %vm80 = vcmask 1045508
    %v81 = vsel %vm80, %v79, %v76
    %s82 = scalar_lea.vmem [#allocation0], 7
    %s83 = smov 192
    %v84 = vld [vmem:[%s82] ss:$16 sm:%s83]
    %vm85 = vcmask 1047558
    %v86 = vsel %vm85, %v84, %v81
    %87 = vrot.lane.b32.xlu0 %v86, 112
    %v88 = vpop.permute.xlu0 %87
    %vm89 = vcmask 1048448
    %90 = vst.msk [vmem:[%s1] sm:$0xff] %vm89, %v88
    %s91 = scalar_lea.vmem [#allocation0], 15
    %s92 = smov 3
    %v93 = vld [vmem:[%s91] ss:$16 sm:%s92]
    %s94 = scalar_lea.vmem [#allocation0], 15
    %s95 = smov 12
    %v96 = vld [vmem:[%s94] ss:$16 sm:%s95]
    %vm97 = vcmask 1043458
    %v98 = vsel %vm97, %v96, %v93
    %s99 = scalar_lea.vmem [#allocation0], 15
    %s100 = smov 48
    %v101 = vld [vmem:[%s99] ss:$16 sm:%s100]
    %vm102 = vcmask 1045508
    %v103 = vsel %vm102, %v101, %v98
    %s104 = scalar_lea.vmem [#allocation0], 15
    %s105 = smov 192
    %v106 = vld [vmem:[%s104] ss:$16 sm:%s105]
    %vm107 = vcmask 1047558
    %v108 = vsel %vm107, %v106, %v103
    %109 = vrot.lane.b32.xlu0 %v108, 112
    %v110 = vpop.permute.xlu0 %109
    %vm111 = vcmask 1048448
    %s112 = scalar_lea.vmem %s1, 8
    %113 = vst.msk [vmem:[%s112] sm:$0xff] %vm111, %v110
    %s114 = scalar_lea.vmem [#allocation0], 135
    %s115 = smov 3
    %v116 = vld [vmem:[%s114] ss:$16 sm:%s115]
    %s117 = scalar_lea.vmem [#allocation0], 135
    %s118 = smov 12
    %v119 = vld [vmem:[%s117] ss:$16 sm:%s118]
    %vm120 = vcmask 1043458
    %v121 = vsel %vm120, %v119, %v116
    %s122 = scalar_lea.vmem [#allocation0], 135
    %s123 = smov 48
    %v124 = vld [vmem:[%s122] ss:$16 sm:%s123]
    %vm125 = vcmask 1045508
    %v126 = vsel %vm125, %v124, %v121
    %s127 = scalar_lea.vmem [#allocation0], 135
    %s128 = smov 192
    %v129 = vld [vmem:[%s127] ss:$16 sm:%s128]
    %vm130 = vcmask 1047558
    %v131 = vsel %vm130, %v129, %v126
    %132 = vrot.lane.b32.xlu0 %v131, 112
    %v133 = vpop.permute.xlu0 %132
    %vm134 = vcmask 1048448
    %s135 = scalar_lea.vmem %s1, 16
    %136 = vst.msk [vmem:[%s135] sm:$0xff] %vm134, %v133
    %s137 = scalar_lea.vmem [#allocation0], 143
    %s138 = smov 3
    %v139 = vld [vmem:[%s137] ss:$16 sm:%s138]
    %s140 = scalar_lea.vmem [#allocation0], 143
    %s141 = smov 12
    %v142 = vld [vmem:[%s140] ss:$16 sm:%s141]
    %vm143 = vcmask 1043458
    %v144 = vsel %vm143, %v142, %v139
    %s145 = scalar_lea.vmem [#allocation0], 143
    %s146 = smov 48
    %v147 = vld [vmem:[%s145] ss:$16 sm:%s146]
    %vm148 = vcmask 1045508
    %v149 = vsel %vm148, %v147, %v144
    %s150 = scalar_lea.vmem [#allocation0], 143
    %s151 = smov 192
    %v152 = vld [vmem:[%s150] ss:$16 sm:%s151]
    %vm153 = vcmask 1047558
    %v154 = vsel %vm153, %v152, %v149
    %155 = vrot.lane.b32.xlu0 %v154, 112
    %v156 = vpop.permute.xlu0 %155
    %vm157 = vcmask 1048448
    %s158 = scalar_lea.vmem %s1, 24
    %159 = vst.msk [vmem:[%s158] sm:$0xff] %vm157, %v156
    %s160 = scalar_lea.vmem [#allocation0], 6
    %s161 = smov 3
    %v162 = vld [vmem:[%s160] ss:$16 sm:%s161]
    %s163 = scalar_lea.vmem [#allocation0], 6
    %s164 = smov 12
    %v165 = vld [vmem:[%s163] ss:$16 sm:%s164]
    %vm166 = vcmask 1043458
    %v167 = vsel %vm166, %v165, %v162
    %s168 = scalar_lea.vmem [#allocation0], 6
    %s169 = smov 48
    %v170 = vld [vmem:[%s168] ss:$16 sm:%s169]
    %vm171 = vcmask 1045508
    %v172 = vsel %vm171, %v170, %v167
    %s173 = scalar_lea.vmem [#allocation0], 6
    %s174 = smov 192
    %v175 = vld [vmem:[%s173] ss:$16 sm:%s174]
    %vm176 = vcmask 1047558
    %v177 = vsel %vm176, %v175, %v172
    %178 = vrot.lane.b32.xlu0 %v177, 96
    %v179 = vpop.permute.xlu0 %178
    %vm180 = vcmask 917248
    %181 = vst.msk [vmem:[%s1] sm:$0xff] %vm180, %v179
    %s182 = scalar_lea.vmem [#allocation0], 14
    %s183 = smov 3
    %v184 = vld [vmem:[%s182] ss:$16 sm:%s183]
    %s185 = scalar_lea.vmem [#allocation0], 14
    %s186 = smov 12
    %v187 = vld [vmem:[%s185] ss:$16 sm:%s186]
    %vm188 = vcmask 1043458
    %v189 = vsel %vm188, %v187, %v184
    %s190 = scalar_lea.vmem [#allocation0], 14
    %s191 = smov 48
    %v192 = vld [vmem:[%s190] ss:$16 sm:%s191]
    %vm193 = vcmask 1045508
    %v194 = vsel %vm193, %v192, %v189
    %s195 = scalar_lea.vmem [#allocation0], 14
    %s196 = smov 192
    %v197 = vld [vmem:[%s195] ss:$16 sm:%s196]
    %vm198 = vcmask 1047558
    %v199 = vsel %vm198, %v197, %v194
    %200 = vrot.lane.b32.xlu0 %v199, 96
    %v201 = vpop.permute.xlu0 %200
    %vm202 = vcmask 917248
    %s203 = scalar_lea.vmem %s1, 8
    %204 = vst.msk [vmem:[%s203] sm:$0xff] %vm202, %v201
    %s205 = scalar_lea.vmem [#allocation0], 134
    %s206 = smov 3
    %v207 = vld [vmem:[%s205] ss:$16 sm:%s206]
    %s208 = scalar_lea.vmem [#allocation0], 134
    %s209 = smov 12
    %v210 = vld [vmem:[%s208] ss:$16 sm:%s209]
    %vm211 = vcmask 1043458
    %v212 = vsel %vm211, %v210, %v207
    %s213 = scalar_lea.vmem [#allocation0], 134
    %s214 = smov 48
    %v215 = vld [vmem:[%s213] ss:$16 sm:%s214]
    %vm216 = vcmask 1045508
    %v217 = vsel %vm216, %v215, %v212
    %s218 = scalar_lea.vmem [#allocation0], 134
    %s219 = smov 192
    %v220 = vld [vmem:[%s218] ss:$16 sm:%s219]
    %vm221 = vcmask 1047558
    %v222 = vsel %vm221, %v220, %v217
    %223 = vrot.lane.b32.xlu0 %v222, 96
    %v224 = vpop.permute.xlu0 %223
    %vm225 = vcmask 917248
    %s226 = scalar_lea.vmem %s1, 16
    %227 = vst.msk [vmem:[%s226] sm:$0xff] %vm225, %v224
    %s228 = scalar_lea.vmem [#allocation0], 142
    %s229 = smov 3
    %v230 = vld [vmem:[%s228] ss:$16 sm:%s229]
    %s231 = scalar_lea.vmem [#allocation0], 142
    %s232 = smov 12
    %v233 = vld [vmem:[%s231] ss:$16 sm:%s232]
    %vm234 = vcmask 1043458
    %v235 = vsel %vm234, %v233, %v230
    %s236 = scalar_lea.vmem [#allocation0], 142
    %s237 = smov 48
    %v238 = vld [vmem:[%s236] ss:$16 sm:%s237]
    %vm239 = vcmask 1045508
    %v240 = vsel %vm239, %v238, %v235
    %s241 = scalar_lea.vmem [#allocation0], 142
    %s242 = smov 192
    %v243 = vld [vmem:[%s241] ss:$16 sm:%s242]
    %vm244 = vcmask 1047558
    %v245 = vsel %vm244, %v243, %v240
    %246 = vrot.lane.b32.xlu0 %v245, 96
    %v247 = vpop.permute.xlu0 %246
    %vm248 = vcmask 917248
    %s249 = scalar_lea.vmem %s1, 24
    %250 = vst.msk [vmem:[%s249] sm:$0xff] %vm248, %v247
    %s251 = scalar_lea.vmem [#allocation0], 5
    %s252 = smov 3
    %v253 = vld [vmem:[%s251] ss:$16 sm:%s252]
    %s254 = scalar_lea.vmem [#allocation0], 5
    %s255 = smov 12
    %v256 = vld [vmem:[%s254] ss:$16 sm:%s255]
    %vm257 = vcmask 1043458
    %v258 = vsel %vm257, %v256, %v253
    %s259 = scalar_lea.vmem [#allocation0], 5
    %s260 = smov 48
    %v261 = vld [vmem:[%s259] ss:$16 sm:%s260]
    %vm262 = vcmask 1045508
    %v263 = vsel %vm262, %v261, %v258
    %s264 = scalar_lea.vmem [#allocation0], 5
    %s265 = smov 192
    %v266 = vld [vmem:[%s264] ss:$16 sm:%s265]
    %vm267 = vcmask 1047558
    %v268 = vsel %vm267, %v266, %v263
    %269 = vrot.lane.b32.xlu0 %v268, 80
    %v270 = vpop.permute.xlu0 %269
    %vm271 = vcmask 786048
    %272 = vst.msk [vmem:[%s1] sm:$0xff] %vm271, %v270
    %s273 = scalar_lea.vmem [#allocation0], 13
    %s274 = smov 3
    %v275 = vld [vmem:[%s273] ss:$16 sm:%s274]
    %s276 = scalar_lea.vmem [#allocation0], 13
    %s277 = smov 12
    %v278 = vld [vmem:[%s276] ss:$16 sm:%s277]
    %vm279 = vcmask 1043458
    %v280 = vsel %vm279, %v278, %v275
    %s281 = scalar_lea.vmem [#allocation0], 13
    %s282 = smov 48
    %v283 = vld [vmem:[%s281] ss:$16 sm:%s282]
    %vm284 = vcmask 1045508
    %v285 = vsel %vm284, %v283, %v280
    %s286 = scalar_lea.vmem [#allocation0], 13
    %s287 = smov 192
    %v288 = vld [vmem:[%s286] ss:$16 sm:%s287]
    %vm289 = vcmask 1047558
    %v290 = vsel %vm289, %v288, %v285
    %291 = vrot.lane.b32.xlu0 %v290, 80
    %v292 = vpop.permute.xlu0 %291
    %vm293 = vcmask 786048
    %s294 = scalar_lea.vmem %s1, 8
    %295 = vst.msk [vmem:[%s294] sm:$0xff] %vm293, %v292
    %s296 = scalar_lea.vmem [#allocation0], 133
    %s297 = smov 3
    %v298 = vld [vmem:[%s296] ss:$16 sm:%s297]
    %s299 = scalar_lea.vmem [#allocation0], 133
    %s300 = smov 12
    %v301 = vld [vmem:[%s299] ss:$16 sm:%s300]
    %vm302 = vcmask 1043458
    %v303 = vsel %vm302, %v301, %v298
    %s304 = scalar_lea.vmem [#allocation0], 133
    %s305 = smov 48
    %v306 = vld [vmem:[%s304] ss:$16 sm:%s305]
    %vm307 = vcmask 1045508
    %v308 = vsel %vm307, %v306, %v303
    %s309 = scalar_lea.vmem [#allocation0], 133
    %s310 = smov 192
    %v311 = vld [vmem:[%s309] ss:$16 sm:%s310]
    %vm312 = vcmask 1047558
    %v313 = vsel %vm312, %v311, %v308
    %314 = vrot.lane.b32.xlu0 %v313, 80
    %v315 = vpop.permute.xlu0 %314
    %vm316 = vcmask 786048
    %s317 = scalar_lea.vmem %s1, 16
    %318 = vst.msk [vmem:[%s317] sm:$0xff] %vm316, %v315
    %s319 = scalar_lea.vmem [#allocation0], 141
    %s320 = smov 3
    %v321 = vld [vmem:[%s319] ss:$16 sm:%s320]
    %s322 = scalar_lea.vmem [#allocation0], 141
    %s323 = smov 12
    %v324 = vld [vmem:[%s322] ss:$16 sm:%s323]
    %vm325 = vcmask 1043458
    %v326 = vsel %vm325, %v324, %v321
    %s327 = scalar_lea.vmem [#allocation0], 141
    %s328 = smov 48
    %v329 = vld [vmem:[%s327] ss:$16 sm:%s328]
    %vm330 = vcmask 1045508
    %v331 = vsel %vm330, %v329, %v326
    %s332 = scalar_lea.vmem [#allocation0], 141
    %s333 = smov 192
    %v334 = vld [vmem:[%s332] ss:$16 sm:%s333]
    %vm335 = vcmask 1047558
    %v336 = vsel %vm335, %v334, %v331
    %337 = vrot.lane.b32.xlu0 %v336, 80
    %v338 = vpop.permute.xlu0 %337
    %vm339 = vcmask 786048
    %s340 = scalar_lea.vmem %s1, 24
    %341 = vst.msk [vmem:[%s340] sm:$0xff] %vm339, %v338
    %s342 = scalar_lea.vmem [#allocation0], 4
    %s343 = smov 3
    %v344 = vld [vmem:[%s342] ss:$16 sm:%s343]
    %s345 = scalar_lea.vmem [#allocation0], 4
    %s346 = smov 12
    %v347 = vld [vmem:[%s345] ss:$16 sm:%s346]
    %vm348 = vcmask 1043458
    %v349 = vsel %vm348, %v347, %v344
    %s350 = scalar_lea.vmem [#allocation0], 4
    %s351 = smov 48
    %v352 = vld [vmem:[%s350] ss:$16 sm:%s351]
    %vm353 = vcmask 1045508
    %v354 = vsel %vm353, %v352, %v349
    %s355 = scalar_lea.vmem [#allocation0], 4
    %s356 = smov 192
    %v357 = vld [vmem:[%s355] ss:$16 sm:%s356]
    %vm358 = vcmask 1047558
    %v359 = vsel %vm358, %v357, %v354
    %360 = vrot.lane.b32.xlu0 %v359, 64
    %v361 = vpop.permute.xlu0 %360
    %vm362 = vcmask 654848
    %363 = vst.msk [vmem:[%s1] sm:$0xff] %vm362, %v361
    %s364 = scalar_lea.vmem [#allocation0], 12
    %s365 = smov 3
    %v366 = vld [vmem:[%s364] ss:$16 sm:%s365]
    %s367 = scalar_lea.vmem [#allocation0], 12
    %s368 = smov 12
    %v369 = vld [vmem:[%s367] ss:$16 sm:%s368]
    %vm370 = vcmask 1043458
    %v371 = vsel %vm370, %v369, %v366
    %s372 = scalar_lea.vmem [#allocation0], 12
    %s373 = smov 48
    %v374 = vld [vmem:[%s372] ss:$16 sm:%s373]
    %vm375 = vcmask 1045508
    %v376 = vsel %vm375, %v374, %v371
    %s377 = scalar_lea.vmem [#allocation0], 12
    %s378 = smov 192
    %v379 = vld [vmem:[%s377] ss:$16 sm:%s378]
    %vm380 = vcmask 1047558
    %v381 = vsel %vm380, %v379, %v376
    %382 = vrot.lane.b32.xlu0 %v381, 64
    %v383 = vpop.permute.xlu0 %382
    %vm384 = vcmask 654848
    %s385 = scalar_lea.vmem %s1, 8
    %386 = vst.msk [vmem:[%s385] sm:$0xff] %vm384, %v383
    %s387 = scalar_lea.vmem [#allocation0], 132
    %s388 = smov 3
    %v389 = vld [vmem:[%s387] ss:$16 sm:%s388]
    %s390 = scalar_lea.vmem [#allocation0], 132
    %s391 = smov 12
    %v392 = vld [vmem:[%s390] ss:$16 sm:%s391]
    %vm393 = vcmask 1043458
    %v394 = vsel %vm393, %v392, %v389
    %s395 = scalar_lea.vmem [#allocation0], 132
    %s396 = smov 48
    %v397 = vld [vmem:[%s395] ss:$16 sm:%s396]
    %vm398 = vcmask 1045508
    %v399 = vsel %vm398, %v397, %v394
    %s400 = scalar_lea.vmem [#allocation0], 132
    %s401 = smov 192
    %v402 = vld [vmem:[%s400] ss:$16 sm:%s401]
    %vm403 = vcmask 1047558
    %v404 = vsel %vm403, %v402, %v399
    %405 = vrot.lane.b32.xlu0 %v404, 64
    %v406 = vpop.permute.xlu0 %405
    %vm407 = vcmask 654848
    %s408 = scalar_lea.vmem %s1, 16
    %409 = vst.msk [vmem:[%s408] sm:$0xff] %vm407, %v406
    %s410 = scalar_lea.vmem [#allocation0], 140
    %s411 = smov 3
    %v412 = vld [vmem:[%s410] ss:$16 sm:%s411]
    %s413 = scalar_lea.vmem [#allocation0], 140
    %s414 = smov 12
    %v415 = vld [vmem:[%s413] ss:$16 sm:%s414]
    %vm416 = vcmask 1043458
    %v417 = vsel %vm416, %v415, %v412
    %s418 = scalar_lea.vmem [#allocation0], 140
    %s419 = smov 48
    %v420 = vld [vmem:[%s418] ss:$16 sm:%s419]
    %vm421 = vcmask 1045508
    %v422 = vsel %vm421, %v420, %v417
    %s423 = scalar_lea.vmem [#allocation0], 140
    %s424 = smov 192
    %v425 = vld [vmem:[%s423] ss:$16 sm:%s424]
    %vm426 = vcmask 1047558
    %v427 = vsel %vm426, %v425, %v422
    %428 = vrot.lane.b32.xlu0 %v427, 64
    %v429 = vpop.permute.xlu0 %428
    %vm430 = vcmask 654848
    %s431 = scalar_lea.vmem %s1, 24
    %432 = vst.msk [vmem:[%s431] sm:$0xff] %vm430, %v429
    %s433 = scalar_lea.vmem [#allocation0], 3
    %s434 = smov 3
    %v435 = vld [vmem:[%s433] ss:$16 sm:%s434]
    %s436 = scalar_lea.vmem [#allocation0], 3
    %s437 = smov 12
    %v438 = vld [vmem:[%s436] ss:$16 sm:%s437]
    %vm439 = vcmask 1043458
    %v440 = vsel %vm439, %v438, %v435
    %s441 = scalar_lea.vmem [#allocation0], 3
    %s442 = smov 48
    %v443 = vld [vmem:[%s441] ss:$16 sm:%s442]
    %vm444 = vcmask 1045508
    %v445 = vsel %vm444, %v443, %v440
    %s446 = scalar_lea.vmem [#allocation0], 3
    %s447 = smov 192
    %v448 = vld [vmem:[%s446] ss:$16 sm:%s447]
    %vm449 = vcmask 1047558
    %v450 = vsel %vm449, %v448, %v445
    %451 = vrot.lane.b32.xlu0 %v450, 48
    %v452 = vpop.permute.xlu0 %451
    %vm453 = vcmask 523648
    %454 = vst.msk [vmem:[%s1] sm:$0xff] %vm453, %v452
    %s455 = scalar_lea.vmem [#allocation0], 11
    %s456 = smov 3
    %v457 = vld [vmem:[%s455] ss:$16 sm:%s456]
    %s458 = scalar_lea.vmem [#allocation0], 11
    %s459 = smov 12
    %v460 = vld [vmem:[%s458] ss:$16 sm:%s459]
    %vm461 = vcmask 1043458
    %v462 = vsel %vm461, %v460, %v457
    %s463 = scalar_lea.vmem [#allocation0], 11
    %s464 = smov 48
    %v465 = vld [vmem:[%s463] ss:$16 sm:%s464]
    %vm466 = vcmask 1045508
    %v467 = vsel %vm466, %v465, %v462
    %s468 = scalar_lea.vmem [#allocation0], 11
    %s469 = smov 192
    %v470 = vld [vmem:[%s468] ss:$16 sm:%s469]
    %vm471 = vcmask 1047558
    %v472 = vsel %vm471, %v470, %v467
    %473 = vrot.lane.b32.xlu0 %v472, 48
    %v474 = vpop.permute.xlu0 %473
    %vm475 = vcmask 523648
    %s476 = scalar_lea.vmem %s1, 8
    %477 = vst.msk [vmem:[%s476] sm:$0xff] %vm475, %v474
    %s478 = scalar_lea.vmem [#allocation0], 131
    %s479 = smov 3
    %v480 = vld [vmem:[%s478] ss:$16 sm:%s479]
    %s481 = scalar_lea.vmem [#allocation0], 131
    %s482 = smov 12
    %v483 = vld [vmem:[%s481] ss:$16 sm:%s482]
    %vm484 = vcmask 1043458
    %v485 = vsel %vm484, %v483, %v480
    %s486 = scalar_lea.vmem [#allocation0], 131
    %s487 = smov 48
    %v488 = vld [vmem:[%s486] ss:$16 sm:%s487]
    %vm489 = vcmask 1045508
    %v490 = vsel %vm489, %v488, %v485
    %s491 = scalar_lea.vmem [#allocation0], 131
    %s492 = smov 192
    %v493 = vld [vmem:[%s491] ss:$16 sm:%s492]
    %vm494 = vcmask 1047558
    %v495 = vsel %vm494, %v493, %v490
    %496 = vrot.lane.b32.xlu0 %v495, 48
    %v497 = vpop.permute.xlu0 %496
    %vm498 = vcmask 523648
    %s499 = scalar_lea.vmem %s1, 16
    %500 = vst.msk [vmem:[%s499] sm:$0xff] %vm498, %v497
    %s501 = scalar_lea.vmem [#allocation0], 139
    %s502 = smov 3
    %v503 = vld [vmem:[%s501] ss:$16 sm:%s502]
    %s504 = scalar_lea.vmem [#allocation0], 139
    %s505 = smov 12
    %v506 = vld [vmem:[%s504] ss:$16 sm:%s505]
    %vm507 = vcmask 1043458
    %v508 = vsel %vm507, %v506, %v503
    %s509 = scalar_lea.vmem [#allocation0], 139
    %s510 = smov 48
    %v511 = vld [vmem:[%s509] ss:$16 sm:%s510]
    %vm512 = vcmask 1045508
    %v513 = vsel %vm512, %v511, %v508
    %s514 = scalar_lea.vmem [#allocation0], 139
    %s515 = smov 192
    %v516 = vld [vmem:[%s514] ss:$16 sm:%s515]
    %vm517 = vcmask 1047558
    %v518 = vsel %vm517, %v516, %v513
    %519 = vrot.lane.b32.xlu0 %v518, 48
    %v520 = vpop.permute.xlu0 %519
    %vm521 = vcmask 523648
    %s522 = scalar_lea.vmem %s1, 24
    %523 = vst.msk [vmem:[%s522] sm:$0xff] %vm521, %v520
    %s524 = scalar_lea.vmem [#allocation0], 2
    %s525 = smov 3
    %v526 = vld [vmem:[%s524] ss:$16 sm:%s525]
    %s527 = scalar_lea.vmem [#allocation0], 2
    %s528 = smov 12
    %v529 = vld [vmem:[%s527] ss:$16 sm:%s528]
    %vm530 = vcmask 1043458
    %v531 = vsel %vm530, %v529, %v526
    %s532 = scalar_lea.vmem [#allocation0], 2
    %s533 = smov 48
    %v534 = vld [vmem:[%s532] ss:$16 sm:%s533]
    %vm535 = vcmask 1045508
    %v536 = vsel %vm535, %v534, %v531
    %s537 = scalar_lea.vmem [#allocation0], 2
    %s538 = smov 192
    %v539 = vld [vmem:[%s537] ss:$16 sm:%s538]
    %vm540 = vcmask 1047558
    %v541 = vsel %vm540, %v539, %v536
    %542 = vrot.lane.b32.xlu0 %v541, 32
    %v543 = vpop.permute.xlu0 %542
    %vm544 = vcmask 392448
    %545 = vst.msk [vmem:[%s1] sm:$0xff] %vm544, %v543
    %s546 = scalar_lea.vmem [#allocation0], 10
    %s547 = smov 3
    %v548 = vld [vmem:[%s546] ss:$16 sm:%s547]
    %s549 = scalar_lea.vmem [#allocation0], 10
    %s550 = smov 12
    %v551 = vld [vmem:[%s549] ss:$16 sm:%s550]
    %vm552 = vcmask 1043458
    %v553 = vsel %vm552, %v551, %v548
    %s554 = scalar_lea.vmem [#allocation0], 10
    %s555 = smov 48
    %v556 = vld [vmem:[%s554] ss:$16 sm:%s555]
    %vm557 = vcmask 1045508
    %v558 = vsel %vm557, %v556, %v553
    %s559 = scalar_lea.vmem [#allocation0], 10
    %s560 = smov 192
    %v561 = vld [vmem:[%s559] ss:$16 sm:%s560]
    %vm562 = vcmask 1047558
    %v563 = vsel %vm562, %v561, %v558
    %564 = vrot.lane.b32.xlu0 %v563, 32
    %v565 = vpop.permute.xlu0 %564
    %vm566 = vcmask 392448
    %s567 = scalar_lea.vmem %s1, 8
    %568 = vst.msk [vmem:[%s567] sm:$0xff] %vm566, %v565
    %s569 = scalar_lea.vmem [#allocation0], 130
    %s570 = smov 3
    %v571 = vld [vmem:[%s569] ss:$16 sm:%s570]
    %s572 = scalar_lea.vmem [#allocation0], 130
    %s573 = smov 12
    %v574 = vld [vmem:[%s572] ss:$16 sm:%s573]
    %vm575 = vcmask 1043458
    %v576 = vsel %vm575, %v574, %v571
    %s577 = scalar_lea.vmem [#allocation0], 130
    %s578 = smov 48
    %v579 = vld [vmem:[%s577] ss:$16 sm:%s578]
    %vm580 = vcmask 1045508
    %v581 = vsel %vm580, %v579, %v576
    %s582 = scalar_lea.vmem [#allocation0], 130
    %s583 = smov 192
    %v584 = vld [vmem:[%s582] ss:$16 sm:%s583]
    %vm585 = vcmask 1047558
    %v586 = vsel %vm585, %v584, %v581
    %587 = vrot.lane.b32.xlu0 %v586, 32
    %v588 = vpop.permute.xlu0 %587
    %vm589 = vcmask 392448
    %s590 = scalar_lea.vmem %s1, 16
    %591 = vst.msk [vmem:[%s590] sm:$0xff] %vm589, %v588
    %s592 = scalar_lea.vmem [#allocation0], 138
    %s593 = smov 3
    %v594 = vld [vmem:[%s592] ss:$16 sm:%s593]
    %s595 = scalar_lea.vmem [#allocation0], 138
    %s596 = smov 12
    %v597 = vld [vmem:[%s595] ss:$16 sm:%s596]
    %vm598 = vcmask 1043458
    %v599 = vsel %vm598, %v597, %v594
    %s600 = scalar_lea.vmem [#allocation0], 138
    %s601 = smov 48
    %v602 = vld [vmem:[%s600] ss:$16 sm:%s601]
    %vm603 = vcmask 1045508
    %v604 = vsel %vm603, %v602, %v599
    %s605 = scalar_lea.vmem [#allocation0], 138
    %s606 = smov 192
    %v607 = vld [vmem:[%s605] ss:$16 sm:%s606]
    %vm608 = vcmask 1047558
    %v609 = vsel %vm608, %v607, %v604
    %610 = vrot.lane.b32.xlu0 %v609, 32
    %v611 = vpop.permute.xlu0 %610
    %vm612 = vcmask 392448
    %s613 = scalar_lea.vmem %s1, 24
    %614 = vst.msk [vmem:[%s613] sm:$0xff] %vm612, %v611
    %s615 = scalar_lea.vmem [#allocation0], 1
    %s616 = smov 3
    %v617 = vld [vmem:[%s615] ss:$16 sm:%s616]
    %s618 = scalar_lea.vmem [#allocation0], 1
    %s619 = smov 12
    %v620 = vld [vmem:[%s618] ss:$16 sm:%s619]
    %vm621 = vcmask 1043458
    %v622 = vsel %vm621, %v620, %v617
    %s623 = scalar_lea.vmem [#allocation0], 1
    %s624 = smov 48
    %v625 = vld [vmem:[%s623] ss:$16 sm:%s624]
    %vm626 = vcmask 1045508
    %v627 = vsel %vm626, %v625, %v622
    %s628 = scalar_lea.vmem [#allocation0], 1
    %s629 = smov 192
    %v630 = vld [vmem:[%s628] ss:$16 sm:%s629]
    %vm631 = vcmask 1047558
    %v632 = vsel %vm631, %v630, %v627
    %633 = vrot.lane.b32.xlu0 %v632, 16
    %v634 = vpop.permute.xlu0 %633
    %vm635 = vcmask 261248
    %636 = vst.msk [vmem:[%s1] sm:$0xff] %vm635, %v634
    %s637 = scalar_lea.vmem [#allocation0], 9
    %s638 = smov 3
    %v639 = vld [vmem:[%s637] ss:$16 sm:%s638]
    %s640 = scalar_lea.vmem [#allocation0], 9
    %s641 = smov 12
    %v642 = vld [vmem:[%s640] ss:$16 sm:%s641]
    %vm643 = vcmask 1043458
    %v644 = vsel %vm643, %v642, %v639
    %s645 = scalar_lea.vmem [#allocation0], 9
    %s646 = smov 48
    %v647 = vld [vmem:[%s645] ss:$16 sm:%s646]
    %vm648 = vcmask 1045508
    %v649 = vsel %vm648, %v647, %v644
    %s650 = scalar_lea.vmem [#allocation0], 9
    %s651 = smov 192
    %v652 = vld [vmem:[%s650] ss:$16 sm:%s651]
    %vm653 = vcmask 1047558
    %v654 = vsel %vm653, %v652, %v649
    %655 = vrot.lane.b32.xlu0 %v654, 16
    %v656 = vpop.permute.xlu0 %655
    %vm657 = vcmask 261248
    %s658 = scalar_lea.vmem %s1, 8
    %659 = vst.msk [vmem:[%s658] sm:$0xff] %vm657, %v656
    %s660 = scalar_lea.vmem [#allocation0], 129
    %s661 = smov 3
    %v662 = vld [vmem:[%s660] ss:$16 sm:%s661]
    %s663 = scalar_lea.vmem [#allocation0], 129
    %s664 = smov 12
    %v665 = vld [vmem:[%s663] ss:$16 sm:%s664]
    %vm666 = vcmask 1043458
    %v667 = vsel %vm666, %v665, %v662
    %s668 = scalar_lea.vmem [#allocation0], 129
    %s669 = smov 48
    %v670 = vld [vmem:[%s668] ss:$16 sm:%s669]
    %vm671 = vcmask 1045508
    %v672 = vsel %vm671, %v670, %v667
    %s673 = scalar_lea.vmem [#allocation0], 129
    %s674 = smov 192
    %v675 = vld [vmem:[%s673] ss:$16 sm:%s674]
    %vm676 = vcmask 1047558
    %v677 = vsel %vm676, %v675, %v672
    %678 = vrot.lane.b32.xlu0 %v677, 16
    %v679 = vpop.permute.xlu0 %678
    %vm680 = vcmask 261248
    %s681 = scalar_lea.vmem %s1, 16
    %682 = vst.msk [vmem:[%s681] sm:$0xff] %vm680, %v679
    %s683 = scalar_lea.vmem [#allocation0], 137
    %s684 = smov 3
    %v685 = vld [vmem:[%s683] ss:$16 sm:%s684]
    %s686 = scalar_lea.vmem [#allocation0], 137
    %s687 = smov 12
    %v688 = vld [vmem:[%s686] ss:$16 sm:%s687]
    %vm689 = vcmask 1043458
    %v690 = vsel %vm689, %v688, %v685
    %s691 = scalar_lea.vmem [#allocation0], 137
    %s692 = smov 48
    %v693 = vld [vmem:[%s691] ss:$16 sm:%s692]
    %vm694 = vcmask 1045508
    %v695 = vsel %vm694, %v693, %v690
    %s696 = scalar_lea.vmem [#allocation0], 137
    %s697 = smov 192
    %v698 = vld [vmem:[%s696] ss:$16 sm:%s697]
    %vm699 = vcmask 1047558
    %v700 = vsel %vm699, %v698, %v695
    %701 = vrot.lane.b32.xlu0 %v700, 16
    %v702 = vpop.permute.xlu0 %701
    %vm703 = vcmask 261248
    %s704 = scalar_lea.vmem %s1, 24
    %705 = vst.msk [vmem:[%s704] sm:$0xff] %vm703, %v702
    %706 = vsyncpa [#allocation1], 1

// kernel: neg.4
$region0: #{neg.4}
  #allocation0 [shape = 's32[1]{0}', space=sflag, size = 0x4, scoped, tag = 'scoped memory for neg.4']
  %s0 = inlined_call_operand.vmem [shape: f32[5], index: 0, kind: input, shape index: {}]
  %s1 = inlined_call_operand.vmem [shape: f32[5], index: 1, kind: output, shape index: {}]
  %v2 = vld [vmem:[%s0] sm:$0x1]
  %3 = xla_tuple %v2
  %4 = xla_tuple %3
  %v5 = vxor.u32 %v2, 2147483648
  %6 = xla_tuple %v5
  %7 = vst [vmem:[%s1] sm:$0x1] %v5

// kernel: point2plane_loss.1
$region0: #{point2plane_loss.1}
  #allocation0 [shape = 'u32[]', space=smem, size = 0x4, offset = 0x4, fixed_abs, tag = 'smem constant byte address 0x4 - core index']
  #allocation1 [shape = 'u32[144,128]{1,0:T(1,128)}', space=vmem, size = 0x12000, scoped, tag = 'internal scratch']
  %s0 = inlined_call_operand.vmem [shape: f32[16,256], index: 0, kind: input, shape index: {}, may-alias: {0,1,2}]
  %s1 = inlined_call_operand.vmem [shape: f32[16,256], index: 1, kind: input, shape index: {}, may-alias: {0,1,2}]
  %s2 = inlined_call_operand.vmem [shape: f32[16,256], index: 2, kind: input, shape index: {}, may-alias: {0,1,2}]
  %s3 = inlined_call_operand.hbm [shape: f32[1,15], index: 3, kind: output, shape index: {0}]
  %s4 = inlined_call_operand.vmem [shape: s32[1,15], index: 4, kind: output, shape index: {1}]
  %5 = xla_tuple %s3, %s4
  %s6 = sld [smem:[#allocation0]]
  $region34: #{point2plane_loss.1} parent=0
    _
  %s8 = ssub.s32 1, %s6
  %s9 = scalar_select 0, %s8, %s6
  $region1: #{point2plane_loss.1} parent=0
    #allocation2 [shape = 'u8[512]{0}', space=vmem, size = 0x400, scoped, tag = 'output window, operand 0, single buffered']
    #allocation3 [shape = 's32[1]{0}', space=sflag, size = 0x4, scoped, tag = 'scoped memory for point2plane_loss.1']
    %10 = vsyncpa [#allocation3], 0
    // Predicated region
    $region2: #{point2plane_loss.1} parent=1 // pred_check
      _
    $region3: #{point2plane_loss.1} parent=1 // pred_check_branch
      %12 = sbr.rel (0) target = $region5
    $region4: #{point2plane_loss.1} parent=1 // pred_region
      _
    $region5: #{point2plane_loss.1} parent=1 // pred_fallthru
      _
    // Predicated region
    $region6: #{point2plane_loss.1} parent=1 // pred_check
      _
    $region7: #{point2plane_loss.1} parent=1 // pred_check_branch
      %14 = sbr.rel (0) target = $region9
    $region8: #{point2plane_loss.1} parent=1 // pred_region
      %s15 = smul.u32 0, 2
      %s16 = ssub.s32 %s15, 1
      %p17 = scmp.gt.s32.totalorder %s16, 0
      %s18 = scalar_select %p17, %s16, 0
      %p19 = scmp.lt.s32.totalorder %s18, 1
      %s20 = scalar_select %p19, %s18, 1
      %s21 = smul.addr %s20, 2
      %s22 = smul.addr %s21, 8
      %s23 = scalar_lea.vmem %s1, %s22
      %s24 = smul.u32 0, 2
      %s25 = ssub.s32 %s24, 1
      %p26 = scmp.gt.s32.totalorder %s25, 0
      %s27 = scalar_select %p26, %s25, 0
    $region9: #{point2plane_loss.1} parent=1 // pred_fallthru
      _
    // Predicated region
    $region10: #{point2plane_loss.1} parent=1 // pred_check
      _
    $region11: #{point2plane_loss.1} parent=1 // pred_check_branch
      %29 = sbr.rel (0) target = $region13
    $region12: #{point2plane_loss.1} parent=1 // pred_region
      %s30 = smul.u32 0, 2
      %s31 = sadd.s32 %s30, 2
      %p32 = scmp.lt.s32.totalorder %s31, 1
      %s33 = scalar_select %p32, %s31, 1
      %p34 = scmp.lt.s32.totalorder %s33, 1
      %s35 = scalar_select %p34, %s33, 1
      %s36 = smul.addr %s35, 2
      %s37 = smul.addr %s36, 8
      %s38 = scalar_lea.vmem %s2, %s37
      %s39 = smul.u32 0, 2
      %s40 = sadd.s32 %s39, 2
      %p41 = scmp.lt.s32.totalorder %s40, 1
      %s42 = scalar_select %p41, %s40, 1
    $region13: #{point2plane_loss.1} parent=1 // pred_fallthru
      _
    %s43 = smul.u32 0, 2
    %s44 = ssub.s32 %s43, 1
    %p45 = scmp.gt.s32.totalorder %s44, 0
    %s46 = scalar_select %p45, %s44, 0
    %p47 = scmp.lt.s32.totalorder %s46, 1
    %s48 = scalar_select %p47, %s46, 1
    %s49 = smul.addr %s48, 2
    %s50 = smul.addr %s49, 8
    %s51 = scalar_lea.vmem %s1, %s50
    %s52 = smul.u32 0, 2
    %s53 = sadd.s32 %s52, 2
    %p54 = scmp.lt.s32.totalorder %s53, 1
    %s55 = scalar_select %p54, %s53, 1
    %p56 = scmp.lt.s32.totalorder %s55, 1
    %s57 = scalar_select %p56, %s55, 1
    %s58 = smul.addr %s57, 2
    %s59 = smul.addr %s58, 8
    %s60 = scalar_lea.vmem %s2, %s59
    %s61 = smul.u32 0, 2
    %s62 = ssub.s32 %s61, 1
    %p63 = scmp.gt.s32.totalorder %s62, 0
    %s64 = scalar_select %p63, %s62, 0
    %p65 = scmp.lt.s32.totalorder %s64, 1
    %s66 = scalar_select %p65, %s64, 1
    %s67 = smul.addr %s66, 2
    %s68 = smul.addr %s67, 8
    %s69 = scalar_lea.vmem %s1, %s68
    %s70 = smul.u32 0, 2
    %s71 = ssub.s32 %s70, 1
    %p72 = scmp.gt.s32.totalorder %s71, 0
    %s73 = scalar_select %p72, %s71, 0
    %s74 = smul.u32 0, 2
    %s75 = sadd.s32 %s74, 2
    %p76 = scmp.lt.s32.totalorder %s75, 1
    %s77 = scalar_select %p76, %s75, 1
    %p78 = scmp.lt.s32.totalorder %s77, 1
    %s79 = scalar_select %p78, %s77, 1
    %s80 = smul.addr %s79, 2
    %s81 = smul.addr %s80, 8
    %s82 = scalar_lea.vmem %s2, %s81
    %s83 = smul.u32 0, 2
    %s84 = sadd.s32 %s83, 2
    %p85 = scmp.lt.s32.totalorder %s84, 1
    %s86 = scalar_select %p85, %s84, 1
    %v87 = vld [vmem:[%s0] sm:$0xff]
    %v88 = vld [vmem:[%s0 + $0x8] sm:$0xff]
    %v89 = vld [vmem:[%s0 + $0x10] sm:$0xff]
    %v90 = vld [vmem:[%s0 + $0x18] sm:$0xff]
    %v91 = vlaneseq
    %v92 = vand.u32 %v91, 127
    %v93 = vadd.s32 %v92, 128
    %v94 = vlaneseq
    %v95 = vshrl.u32 %v94, 7
    %v96 = vadd.s32 %v95, 8
    %v97 = vand.u32 %v92, 15
    %v98 = vand.u32 %v93, 15
    %vm99 = vcmp.eq.s32.totalorder %v97, 0
    %vm100 = vcmp.eq.s32.totalorder %v98, 0
    %101 = vrot.lane.b32.xlu0 %v87, 1
    %v102 = vpop.permute.xlu0 %101
    %103 = vrot.lane.b32.xlu0 %v89, 1
    %v104 = vpop.permute.xlu0 %103
    %105 = vrot.lane.b32.xlu0 %v88, 1
    %v106 = vpop.permute.xlu0 %105
    %107 = vrot.lane.b32.xlu0 %v90, 1
    %v108 = vpop.permute.xlu0 %107
    %vm109 = vcmp.lt.s32.totalorder %v92, 1
    %v110 = vsel %vm109, %v102, %v106
    %v111 = vsel %vm109, %v104, %v108
    %v112 = vsel %vm109, %v106, %v102
    %v113 = vsel %vm109, %v108, %v104
    %v114 = vsel %vm99, -inf, %v112
    %v115 = vsel %vm100, -inf, %v110
    %v116 = vsel %vm99, -inf, %v113
    %v117 = vsel %vm100, -inf, %v111
    %vm118 = vcmp.eq.s32.totalorder %v97, 15
    %vm119 = vcmp.eq.s32.totalorder %v98, 15
    %120 = vrot.lane.b32.xlu0 %v87, 127
    %v121 = vpop.permute.xlu0 %120
    %122 = vrot.lane.b32.xlu0 %v89, 127
    %v123 = vpop.permute.xlu0 %122
    %124 = vrot.lane.b32.xlu0 %v88, 127
    %v125 = vpop.permute.xlu0 %124
    %126 = vrot.lane.b32.xlu0 %v90, 127
    %v127 = vpop.permute.xlu0 %126
    %vm128 = vcmp.lt.s32.totalorder %v92, 127
    %v129 = vsel %vm128, %v121, %v125
    %v130 = vsel %vm128, %v123, %v127
    %v131 = vsel %vm128, %v125, %v121
    %v132 = vsel %vm128, %v127, %v123
    %v133 = vsel %vm118, -inf, %v129
    %v134 = vsel %vm119, -inf, %v131
    %v135 = vsel %vm118, -inf, %v130
    %v136 = vsel %vm119, -inf, %v132
    %v137 = vmax.f32 %v87, %v114
    %v138 = vmax.f32 %v88, %v115
    %v139 = vmax.f32 %v89, %v116
    %v140 = vmax.f32 %v90, %v117
    %v141 = vmax.f32 %v137, %v133
    %v142 = vmax.f32 %v138, %v134
    %v143 = vmax.f32 %v139, %v135
    %v144 = vmax.f32 %v140, %v136
    %vm145 = vcmp.lt.s32.totalorder %v92, 16
    %vm146 = vcmp.lt.s32.totalorder %v93, 16
    %147 = vrot.lane.b32.xlu0 %v141, 16
    %v148 = vpop.permute.xlu0 %147
    %149 = vrot.lane.b32.xlu0 %v143, 16
    %v150 = vpop.permute.xlu0 %149
    %151 = vrot.lane.b32.xlu0 %v142, 16
    %v152 = vpop.permute.xlu0 %151
    %153 = vrot.lane.b32.xlu0 %v144, 16
    %v154 = vpop.permute.xlu0 %153
    %v155 = vsel %vm145, %v148, %v152
    %v156 = vsel %vm145, %v150, %v154
    %v157 = vsel %vm145, %v152, %v148
    %v158 = vsel %vm145, %v154, %v150
    %v159 = vsel %vm145, -inf, %v157
    %v160 = vsel %vm146, -inf, %v155
    %v161 = vsel %vm145, -inf, %v158
    %v162 = vsel %vm146, -inf, %v156
    %vm163 = vcmp.ge.s32.totalorder %v92, 240
    %vm164 = vcmp.ge.s32.totalorder %v93, 240
    %165 = vrot.lane.b32.xlu0 %v141, 112
    %v166 = vpop.permute.xlu0 %165
    %167 = vrot.lane.b32.xlu0 %v143, 112
    %v168 = vpop.permute.xlu0 %167
    %169 = vrot.lane.b32.xlu0 %v142, 112
    %v170 = vpop.permute.xlu0 %169
    %171 = vrot.lane.b32.xlu0 %v144, 112
    %v172 = vpop.permute.xlu0 %171
    %vm173 = vcmp.lt.s32.totalorder %v92, 112
    %v174 = vsel %vm173, %v166, %v170
    %v175 = vsel %vm173, %v168, %v172
    %v176 = vsel %vm173, %v170, %v166
    %v177 = vsel %vm173, %v172, %v168
    %v178 = vsel %vm163, -inf, %v174
    %v179 = vsel %vm164, -inf, %v176
    %v180 = vsel %vm163, -inf, %v175
    %v181 = vsel %vm164, -inf, %v177
    %v182 = vmax.f32 %v141, %v159
    %v183 = vmax.f32 %v142, %v160
    %v184 = vmax.f32 %v143, %v161
    %v185 = vmax.f32 %v144, %v162
    %v186 = vmax.f32 %v182, %v178
    %v187 = vmax.f32 %v183, %v179
    %v188 = vmax.f32 %v184, %v180
    %v189 = vmax.f32 %v185, %v181
    %s190 = scalar_lea.vmem %s69, 7
    %v191 = vld [vmem:[%s190] ss:$8 sm:$0x3]
    %v192 = vld [vmem:[%s82] ss:$8 sm:$0x3]
    %p193 = scmp.eq.s32.totalorder 0, 0
    %s194 = scalar_select %p193, 1, 0
    %v195 = vstv %s194
    %vm196 = vcmp.eq.s32.totalorder %v195, 1
    %v197 = vsel %vm196, -inf, %v191
    %v198 = vsel %vm196, -inf, %v192
    %v200 = vlaneseq
    %v201 = vshrl.u32 %v200, 7
    %v202 = vsub.s32 0, %v201
    %v203 = vrot.slane %v197, %v202
    %v204 = vlaneseq
    %v205 = vshrl.u32 %v204, 7
    %v206 = vsub.s32 1, %v205
    %v207 = vrot.slane %v197, %v206
    %210 = vrot.lane.b32.xlu0 %v203, 1
    %v211 = vpop.permute.xlu0 %210
    %212 = vrot.lane.b32.xlu0 %v207, 1
    %v213 = vpop.permute.xlu0 %212
    %v214 = vsel %vm109, %v211, %v213
    %v215 = vsel %vm109, %v213, %v211
    %v216 = vsel %vm99, -inf, %v215
    %v217 = vsel %vm100, -inf, %v214
    %218 = vrot.lane.b32.xlu0 %v203, 127
    %v219 = vpop.permute.xlu0 %218
    %220 = vrot.lane.b32.xlu0 %v207, 127
    %v221 = vpop.permute.xlu0 %220
    %v222 = vsel %vm128, %v219, %v221
    %v223 = vsel %vm128, %v221, %v219
    %v224 = vsel %vm118, -inf, %v222
    %v225 = vsel %vm119, -inf, %v223
    %v228 = vcombine.low %v216, %v217
    %v230 = vunpack.c.l.s4 1966171168
    %v231 = vunpack.c.0.s8 %v230
    %v232 = vlaneseq
    %v233 = vshrl.u32 %v232, 7
    %v234 = vsub.s32 %v231, %v233
    %v235 = vrot.slane %v228, %v234
    %v237 = vunpack.c.l.s4 1966171168
    %v238 = vunpack.c.0.s8 %v237
    %v239 = vlaneseq
    %v240 = vshrl.u32 %v239, 7
    %v241 = vsub.s32 %v238, %v240
    %v242 = vrot.slane %v235, %v241
    %v244 = vmax.f32 %v197, %v242
    %v247 = vcombine.low %v224, %v225
    %v249 = vunpack.c.l.s4 1966171168
    %v250 = vunpack.c.0.s8 %v249
    %v251 = vlaneseq
    %v252 = vshrl.u32 %v251, 7
    %v253 = vsub.s32 %v250, %v252
    %v254 = vrot.slane %v247, %v253
    %v256 = vunpack.c.l.s4 1966171168
    %v257 = vunpack.c.0.s8 %v256
    %v258 = vlaneseq
    %v259 = vshrl.u32 %v258, 7
    %v260 = vsub.s32 %v257, %v259
    %v261 = vrot.slane %v254, %v260
    %v263 = vmax.f32 %v244, %v261
    %v265 = vlaneseq
    %v266 = vshrl.u32 %v265, 7
    %v267 = vsub.s32 0, %v266
    %v268 = vrot.slane %v263, %v267
    %v269 = vlaneseq
    %v270 = vshrl.u32 %v269, 7
    %v271 = vsub.s32 1, %v270
    %v272 = vrot.slane %v263, %v271
    %275 = vrot.lane.b32.xlu0 %v268, 16
    %v276 = vpop.permute.xlu0 %275
    %277 = vrot.lane.b32.xlu0 %v272, 16
    %v278 = vpop.permute.xlu0 %277
    %v279 = vsel %vm145, %v276, %v278
    %v280 = vsel %vm145, %v278, %v276
    %v281 = vsel %vm145, -inf, %v280
    %v282 = vsel %vm146, -inf, %v279
    %283 = vrot.lane.b32.xlu0 %v268, 112
    %v284 = vpop.permute.xlu0 %283
    %285 = vrot.lane.b32.xlu0 %v272, 112
    %v286 = vpop.permute.xlu0 %285
    %v287 = vsel %vm173, %v284, %v286
    %v288 = vsel %vm173, %v286, %v284
    %v289 = vsel %vm163, -inf, %v287
    %v290 = vsel %vm164, -inf, %v288
    %v293 = vcombine.low %v281, %v282
    %v295 = vunpack.c.l.s4 1966171168
    %v296 = vunpack.c.0.s8 %v295
    %v297 = vlaneseq
    %v298 = vshrl.u32 %v297, 7
    %v299 = vsub.s32 %v296, %v298
    %v300 = vrot.slane %v293, %v299
    %v302 = vunpack.c.l.s4 1966171168
    %v303 = vunpack.c.0.s8 %v302
    %v304 = vlaneseq
    %v305 = vshrl.u32 %v304, 7
    %v306 = vsub.s32 %v303, %v305
    %v307 = vrot.slane %v300, %v306
    %v309 = vmax.f32 %v263, %v307
    %v312 = vcombine.low %v289, %v290
    %v314 = vunpack.c.l.s4 1966171168
    %v315 = vunpack.c.0.s8 %v314
    %v316 = vlaneseq
    %v317 = vshrl.u32 %v316, 7
    %v318 = vsub.s32 %v315, %v317
    %v319 = vrot.slane %v312, %v318
    %v321 = vunpack.c.l.s4 1966171168
    %v322 = vunpack.c.0.s8 %v321
    %v323 = vlaneseq
    %v324 = vshrl.u32 %v323, 7
    %v325 = vsub.s32 %v322, %v324
    %v326 = vrot.slane %v319, %v325
    %v328 = vmax.f32 %v309, %v326
    %v330 = vlaneseq
    %v331 = vshrl.u32 %v330, 7
    %v332 = vsub.s32 0, %v331
    %v333 = vrot.slane %v198, %v332
    %v334 = vlaneseq
    %v335 = vshrl.u32 %v334, 7
    %v336 = vsub.s32 1, %v335
    %v337 = vrot.slane %v198, %v336
    %340 = vrot.lane.b32.xlu0 %v333, 1
    %v341 = vpop.permute.xlu0 %340
    %342 = vrot.lane.b32.xlu0 %v337, 1
    %v343 = vpop.permute.xlu0 %342
    %v344 = vsel %vm109, %v341, %v343
    %v345 = vsel %vm109, %v343, %v341
    %v346 = vsel %vm99, -inf, %v345
    %v347 = vsel %vm100, -inf, %v344
    %348 = vrot.lane.b32.xlu0 %v333, 127
    %v349 = vpop.permute.xlu0 %348
    %350 = vrot.lane.b32.xlu0 %v337, 127
    %v351 = vpop.permute.xlu0 %350
    %v352 = vsel %vm128, %v349, %v351
    %v353 = vsel %vm128, %v351, %v349
    %v354 = vsel %vm118, -inf, %v352
    %v355 = vsel %vm119, -inf, %v353
    %v358 = vcombine.low %v346, %v347
    %v360 = vunpack.c.l.s4 1966171168
    %v361 = vunpack.c.0.s8 %v360
    %v362 = vlaneseq
    %v363 = vshrl.u32 %v362, 7
    %v364 = vsub.s32 %v361, %v363
    %v365 = vrot.slane %v358, %v364
    %v367 = vunpack.c.l.s4 1966171168
    %v368 = vunpack.c.0.s8 %v367
    %v369 = vlaneseq
    %v370 = vshrl.u32 %v369, 7
    %v371 = vsub.s32 %v368, %v370
    %v372 = vrot.slane %v365, %v371
    %v374 = vmax.f32 %v198, %v372
    %v377 = vcombine.low %v354, %v355
    %v379 = vunpack.c.l.s4 1966171168
    %v380 = vunpack.c.0.s8 %v379
    %v381 = vlaneseq
    %v382 = vshrl.u32 %v381, 7
    %v383 = vsub.s32 %v380, %v382
    %v384 = vrot.slane %v377, %v383
    %v386 = vunpack.c.l.s4 1966171168
    %v387 = vunpack.c.0.s8 %v386
    %v388 = vlaneseq
    %v389 = vshrl.u32 %v388, 7
    %v390 = vsub.s32 %v387, %v389
    %v391 = vrot.slane %v384, %v390
    %v393 = vmax.f32 %v374, %v391
    %v395 = vlaneseq
    %v396 = vshrl.u32 %v395, 7
    %v397 = vsub.s32 0, %v396
    %v398 = vrot.slane %v393, %v397
    %v399 = vlaneseq
    %v400 = vshrl.u32 %v399, 7
    %v401 = vsub.s32 1, %v400
    %v402 = vrot.slane %v393, %v401
    %405 = vrot.lane.b32.xlu0 %v398, 16
    %v406 = vpop.permute.xlu0 %405
    %407 = vrot.lane.b32.xlu0 %v402, 16
    %v408 = vpop.permute.xlu0 %407
    %v409 = vsel %vm145, %v406, %v408
    %v410 = vsel %vm145, %v408, %v406
    %v411 = vsel %vm145, -inf, %v410
    %v412 = vsel %vm146, -inf, %v409
    %413 = vrot.lane.b32.xlu0 %v398, 112
    %v414 = vpop.permute.xlu0 %413
    %415 = vrot.lane.b32.xlu0 %v402, 112
    %v416 = vpop.permute.xlu0 %415
    %v417 = vsel %vm173, %v414, %v416
    %v418 = vsel %vm173, %v416, %v414
    %v419 = vsel %vm163, -inf, %v417
    %v420 = vsel %vm164, -inf, %v418
    %v423 = vcombine.low %v411, %v412
    %v425 = vunpack.c.l.s4 1966171168
    %v426 = vunpack.c.0.s8 %v425
    %v427 = vlaneseq
    %v428 = vshrl.u32 %v427, 7
    %v429 = vsub.s32 %v426, %v428
    %v430 = vrot.slane %v423, %v429
    %v432 = vunpack.c.l.s4 1966171168
    %v433 = vunpack.c.0.s8 %v432
    %v434 = vlaneseq
    %v435 = vshrl.u32 %v434, 7
    %v436 = vsub.s32 %v433, %v435
    %v437 = vrot.slane %v430, %v436
    %v439 = vmax.f32 %v393, %v437
    %v442 = vcombine.low %v419, %v420
    %v444 = vunpack.c.l.s4 1966171168
    %v445 = vunpack.c.0.s8 %v444
    %v446 = vlaneseq
    %v447 = vshrl.u32 %v446, 7
    %v448 = vsub.s32 %v445, %v447
    %v449 = vrot.slane %v442, %v448
    %v451 = vunpack.c.l.s4 1966171168
    %v452 = vunpack.c.0.s8 %v451
    %v453 = vlaneseq
    %v454 = vshrl.u32 %v453, 7
    %v455 = vsub.s32 %v452, %v454
    %v456 = vrot.slane %v449, %v455
    %v458 = vmax.f32 %v439, %v456
    %vm459 = vcmp.eq.s32.totalorder %v95, 0
    %vm460 = vcmp.eq.s32.totalorder %v96, 0
    %v461 = vrot.slane %v186, 7
    %v462 = vrot.slane %v187, 7
    %v463 = vrot.slane %v188, 7
    %v464 = vrot.slane %v189, 7
    %vm465 = vcmp.lt.s32.totalorder %v95, 1
    %v466 = vsel %vm465, %v461, %v463
    %v467 = vsel %vm465, %v462, %v464
    %v468 = vsel %vm465, %v463, %v461
    %v469 = vsel %vm465, %v464, %v462
    %v471 = vlaneseq
    %v472 = vshrl.u32 %v471, 7
    %v473 = vsub.s32 0, %v472
    %v474 = vrot.slane %v328, %v473
    %v475 = vlaneseq
    %v476 = vshrl.u32 %v475, 7
    %v477 = vsub.s32 1, %v476
    %v478 = vrot.slane %v328, %v477
    %v481 = vsel %vm459, %v474, %v468
    %v482 = vsel %vm459, %v478, %v469
    %v483 = vsel %vm460, %v474, %v466
    %v484 = vsel %vm460, %v478, %v467
    %vm485 = vcmp.eq.s32.totalorder %v95, 15
    %vm486 = vcmp.eq.s32.totalorder %v96, 15
    %v487 = vrot.slane %v186, 1
    %v488 = vrot.slane %v187, 1
    %v489 = vrot.slane %v188, 1
    %v490 = vrot.slane %v189, 1
    %vm491 = vcmp.lt.s32.totalorder %v95, 7
    %v492 = vsel %vm491, %v487, %v489
    %v493 = vsel %vm491, %v488, %v490
    %v494 = vsel %vm491, %v489, %v487
    %v495 = vsel %vm491, %v490, %v488
    %v497 = vlaneseq
    %v498 = vshrl.u32 %v497, 7
    %v499 = vsub.s32 0, %v498
    %v500 = vrot.slane %v458, %v499
    %v501 = vlaneseq
    %v502 = vshrl.u32 %v501, 7
    %v503 = vsub.s32 1, %v502
    %v504 = vrot.slane %v458, %v503
    %v507 = vsel %vm485, %v500, %v492
    %v508 = vsel %vm485, %v504, %v493
    %v509 = vsel %vm486, %v500, %v494
    %v510 = vsel %vm486, %v504, %v495
    %v511 = vmax.f32 %v186, %v481
    %v512 = vmax.f32 %v187, %v482
    %v513 = vmax.f32 %v188, %v483
    %v514 = vmax.f32 %v189, %v484
    %v515 = vmax.f32 %v511, %v507
    %v516 = vmax.f32 %v512, %v508
    %v517 = vmax.f32 %v513, %v509
    %v518 = vmax.f32 %v514, %v510
    %vm519 = vcmp.eq.f32.partialorder %v87, %v515
    %vm520 = vcmp.eq.f32.partialorder %v88, %v516
    %vm521 = vcmp.eq.f32.partialorder %v89, %v517
    %vm522 = vcmp.eq.f32.partialorder %v90, %v518
    %v523 = vsel %vm519, %v87, 0.0
    %v524 = vsel %vm520, %v88, 0.0
    %v525 = vsel %vm521, %v89, 0.0
    %v526 = vsel %vm522, %v90, 0.0
    %s527 = smul.u32 0, 16
    %v528 = vstv %s527
    %v529 = vadd.s32 %v528, %v95
    %v530 = vadd.s32 %v528, %v96
    %v531 = vmul.u32 %v529, 256
    %v532 = vmul.u32 %v530, 256
    %v533 = vadd.s32 %v531, %v92
    %v534 = vadd.s32 %v531, %v93
    %v535 = vadd.s32 %v532, %v92
    %v536 = vadd.s32 %v532, %v93
    // Predicated region
    $region14: #{point2plane_loss.1} parent=1 // pred_check
      %p537 = pneg %p193
    $region15: #{point2plane_loss.1} parent=1 // pred_check_branch
      %539 = sbr.rel (%p537) target = $region17
    $region16: #{point2plane_loss.1} parent=1 // pred_region
      %vm540 = vcmask 114688
      %541 = vst.msk [vmem:[#allocation2] sm:$0x1] %vm540, -inf
      %542 = vst.msk [vmem:[%s4] sm:$0x1] %vm540, 4294967295
    $region17: #{point2plane_loss.1} parent=1 // pred_fallthru
      _
    %v543 = vld [vmem:[#allocation2] sm:$0x1]
    %v544 = vld [vmem:[%s4] sm:$0x1]
    %v545 = vmax.f32 %v523, %v524
    %v546 = vmax.f32 %v525, %v526
    %v547 = vmax.f32 %v545, %v546
    %548 = vmax.xlane.f32.xlu0 %v547
    %v549 = vpop.xlane.xlu0 %548
    %v550 = vrot.slane %v549, 4
    %v551 = vmax.f32 %v549, %v550
    %v552 = vrot.slane %v551, 2
    %v553 = vmax.f32 %v551, %v552
    %v554 = vrot.slane %v553, 1
    %v555 = vmax.f32 %v553, %v554
    %s556 = vtos %v555
    %v557 = vstv %s556
    %vm558 = vcmp.eq.f32.partialorder %v523, %v557
    %vm559 = vcmp.eq.f32.partialorder %v524, %v557
    %vm560 = vcmp.eq.f32.partialorder %v525, %v557
    %vm561 = vcmp.eq.f32.partialorder %v526, %v557
    %v562 = vsel %vm558, %v533, 2147483647
    %v563 = vsel %vm559, %v534, 2147483647
    %v564 = vsel %vm560, %v535, 2147483647
    %v565 = vsel %vm561, %v536, 2147483647
    %vm566 = vcmp.lt.s32.totalorder %v562, %v563
    %v567 = vsel %vm566, %v562, %v563
    %vm568 = vcmp.lt.s32.totalorder %v564, %v565
    %v569 = vsel %vm568, %v564, %v565
    %vm570 = vcmp.lt.s32.totalorder %v567, %v569
    %v571 = vsel %vm570, %v567, %v569
    %v572 = vand.u32 %v571, 65535
    %v573 = vshra.s32 %v571, 16
    %v574 = vcvt.s32.f32 %v572
    %v575 = vcvt.s32.f32 %v573
    %576 = vmin.xlane.f32.xlu0 %v575
    %v577 = vpop.xlane.xlu0 %576
    %vm578 = vcmp.eq.f32.partialorder %v575, %v577
    %v579 = vsel %vm578, %v574, inf
    %580 = vmin.xlane.f32.xlu0 %v579
    %v581 = vpop.xlane.xlu0 %580
    %v582 = vcvt.f32.s32 %v581
    %v583 = vcvt.f32.s32 %v577
    %v584 = vshll.u32 %v583, 16
    %v585 = vadd.s32 %v584, %v582
    %v586 = vrot.slane %v585, 4
    %vm587 = vcmp.lt.s32.totalorder %v585, %v586
    %v588 = vsel %vm587, %v585, %v586
    %v589 = vrot.slane %v588, 2
    %vm590 = vcmp.lt.s32.totalorder %v588, %v589
    %v591 = vsel %vm590, %v588, %v589
    %v592 = vrot.slane %v591, 1
    %vm593 = vcmp.lt.s32.totalorder %v591, %v592
    %v594 = vsel %vm593, %v591, %v592
    %s595 = vtos %v594
    %vm596 = vcmask 114688
    %v597 = vsel %vm596, %v543, inf
    %598 = vmin.xlane.f32.xlu0 %v597
    %v599 = vpop.xlane.xlu0 %598
    %v600 = vrot.slane %v599, 4
    %v601 = vmin.f32 %v599, %v600
    %v602 = vrot.slane %v601, 2
    %v603 = vmin.f32 %v601, %v602
    %v604 = vrot.slane %v603, 1
    %v605 = vmin.f32 %v603, %v604
    %s606 = vtos %v605
    %v607 = vstv %s606
    %vm608 = vcmp.eq.f32.partialorder %v543, %v607
    %v609 = vsel %vm608, %v92, 2147483647
    %v610 = vsel %vm596, %v609, 2147483647
    %v611 = vand.u32 %v610, 65535
    %v612 = vshra.s32 %v610, 16
    %v613 = vcvt.s32.f32 %v611
    %v614 = vcvt.s32.f32 %v612
    %615 = vmin.xlane.f32.xlu0 %v614
    %v616 = vpop.xlane.xlu0 %615
    %vm617 = vcmp.eq.f32.partialorder %v614, %v616
    %v618 = vsel %vm617, %v613, inf
    %619 = vmin.xlane.f32.xlu0 %v618
    %v620 = vpop.xlane.xlu0 %619
    %v621 = vcvt.f32.s32 %v620
    %v622 = vcvt.f32.s32 %v616
    %v623 = vshll.u32 %v622, 16
    %v624 = vadd.s32 %v623, %v621
    %v625 = vrot.slane %v624, 4
    %vm626 = vcmp.lt.s32.totalorder %v624, %v625
    %v627 = vsel %vm626, %v624, %v625
    %v628 = vrot.slane %v627, 2
    %vm629 = vcmp.lt.s32.totalorder %v627, %v628
    %v630 = vsel %vm629, %v627, %v628
    %v631 = vrot.slane %v630, 1
    %vm632 = vcmp.lt.s32.totalorder %v630, %v631
    %v633 = vsel %vm632, %v630, %v631
    %s634 = vtos %v633
    %v635 = vstv %s634
    %vm636 = vcmp.eq.s32.totalorder %v92, %v635
    %p637 = scmp.gt.f32.partialorder %s556, %s606
    %s638 = scalar_select %p637, 1, 0
    %v639 = vstv %s638
    %vm640 = vcmp.eq.s32.totalorder %v639, 1
    %vm641 = vmand %vm636, %vm640
    %v642 = vsel %vm641, %v557, %v543
    %v643 = vstv %s595
    %v644 = vsel %vm641, %v643, %v544
    %vm645 = vcmp.eq.s32.totalorder %v533, %v643
    %vm646 = vcmp.eq.s32.totalorder %v534, %v643
    %vm647 = vcmp.eq.s32.totalorder %v535, %v643
    %vm648 = vcmp.eq.s32.totalorder %v536, %v643
    %v649 = vsel %vm645, -inf, %v523
    %v650 = vsel %vm646, -inf, %v524
    %v651 = vsel %vm647, -inf, %v525
    %v652 = vsel %vm648, -inf, %v526
    %v653 = vmax.f32 %v649, %v650
    %v654 = vmax.f32 %v651, %v652
    %v655 = vmax.f32 %v653, %v654
    %656 = vmax.xlane.f32.xlu0 %v655
    %v657 = vpop.xlane.xlu0 %656
    %v658 = vrot.slane %v657, 4
    %v659 = vmax.f32 %v657, %v658
    %v660 = vrot.slane %v659, 2
    %v661 = vmax.f32 %v659, %v660
    %v662 = vrot.slane %v661, 1
    %v663 = vmax.f32 %v661, %v662
    %s664 = vtos %v663
    %v665 = vstv %s664
    %vm666 = vcmp.eq.f32.partialorder %v649, %v665
    %vm667 = vcmp.eq.f32.partialorder %v650, %v665
    %vm668 = vcmp.eq.f32.partialorder %v651, %v665
    %vm669 = vcmp.eq.f32.partialorder %v652, %v665
    %v670 = vsel %vm666, %v533, 2147483647
    %v671 = vsel %vm667, %v534, 2147483647
    %v672 = vsel %vm668, %v535, 2147483647
    %v673 = vsel %vm669, %v536, 2147483647
    %vm674 = vcmp.lt.s32.totalorder %v670, %v671
    %v675 = vsel %vm674, %v670, %v671
    %vm676 = vcmp.lt.s32.totalorder %v672, %v673
    %v677 = vsel %vm676, %v672, %v673
    %vm678 = vcmp.lt.s32.totalorder %v675, %v677
    %v679 = vsel %vm678, %v675, %v677
    %v680 = vand.u32 %v679, 65535
    %v681 = vshra.s32 %v679, 16
    %v682 = vcvt.s32.f32 %v680
    %v683 = vcvt.s32.f32 %v681
    %684 = vmin.xlane.f32.xlu0 %v683
    %v685 = vpop.xlane.xlu0 %684
    %vm686 = vcmp.eq.f32.partialorder %v683, %v685
    %v687 = vsel %vm686, %v682, inf
    %688 = vmin.xlane.f32.xlu0 %v687
    %v689 = vpop.xlane.xlu0 %688
    %v690 = vcvt.f32.s32 %v689
    %v691 = vcvt.f32.s32 %v685
    %v692 = vshll.u32 %v691, 16
    %v693 = vadd.s32 %v692, %v690
    %v694 = vrot.slane %v693, 4
    %vm695 = vcmp.lt.s32.totalorder %v693, %v694
    %v696 = vsel %vm695, %v693, %v694
    %v697 = vrot.slane %v696, 2
    %vm698 = vcmp.lt.s32.totalorder %v696, %v697
    %v699 = vsel %vm698, %v696, %v697
    %v700 = vrot.slane %v699, 1
    %vm701 = vcmp.lt.s32.totalorder %v699, %v700
    %v702 = vsel %vm701, %v699, %v700
    %s703 = vtos %v702
    %v704 = vsel %vm596, %v642, inf
    %705 = vmin.xlane.f32.xlu0 %v704
    %v706 = vpop.xlane.xlu0 %705
    %v707 = vrot.slane %v706, 4
    %v708 = vmin.f32 %v706, %v707
    %v709 = vrot.slane %v708, 2
    %v710 = vmin.f32 %v708, %v709
    %v711 = vrot.slane %v710, 1
    %v712 = vmin.f32 %v710, %v711
    %s713 = vtos %v712
    %v714 = vstv %s713
    %vm715 = vcmp.eq.f32.partialorder %v642, %v714
    %v716 = vsel %vm715, %v92, 2147483647
    %v717 = vsel %vm596, %v716, 2147483647
    %v718 = vand.u32 %v717, 65535
    %v719 = vshra.s32 %v717, 16
    %v720 = vcvt.s32.f32 %v718
    %v721 = vcvt.s32.f32 %v719
    %722 = vmin.xlane.f32.xlu0 %v721
    %v723 = vpop.xlane.xlu0 %722
    %vm724 = vcmp.eq.f32.partialorder %v721, %v723
    %v725 = vsel %vm724, %v720, inf
    %726 = vmin.xlane.f32.xlu0 %v725
    %v727 = vpop.xlane.xlu0 %726
    %v728 = vcvt.f32.s32 %v727
    %v729 = vcvt.f32.s32 %v723
    %v730 = vshll.u32 %v729, 16
    %v731 = vadd.s32 %v730, %v728
    %v732 = vrot.slane %v731, 4
    %vm733 = vcmp.lt.s32.totalorder %v731, %v732
    %v734 = vsel %vm733, %v731, %v732
    %v735 = vrot.slane %v734, 2
    %vm736 = vcmp.lt.s32.totalorder %v734, %v735
    %v737 = vsel %vm736, %v734, %v735
    %v738 = vrot.slane %v737, 1
    %vm739 = vcmp.lt.s32.totalorder %v737, %v738
    %v740 = vsel %vm739, %v737, %v738
    %s741 = vtos %v740
    %v742 = vstv %s741
    %vm743 = vcmp.eq.s32.totalorder %v92, %v742
    %p744 = scmp.gt.f32.partialorder %s664, %s713
    %s745 = scalar_select %p744, 1, 0
    %v746 = vstv %s745
    %vm747 = vcmp.eq.s32.totalorder %v746, 1
    %vm748 = vmand %vm743, %vm747
    %v749 = vsel %vm748, %v665, %v642
    %v750 = vstv %s703
    %v751 = vsel %vm748, %v750, %v644
    %vm752 = vcmp.eq.s32.totalorder %v533, %v750
    %vm753 = vcmp.eq.s32.totalorder %v534, %v750
    %vm754 = vcmp.eq.s32.totalorder %v535, %v750
    %vm755 = vcmp.eq.s32.totalorder %v536, %v750
    %v756 = vsel %vm752, -inf, %v649
    %v757 = vsel %vm753, -inf, %v650
    %v758 = vsel %vm754, -inf, %v651
    %v759 = vsel %vm755, -inf, %v652
    %v760 = vmax.f32 %v756, %v757
    %v761 = vmax.f32 %v758, %v759
    %v762 = vmax.f32 %v760, %v761
    %763 = vmax.xlane.f32.xlu0 %v762
    %v764 = vpop.xlane.xlu0 %763
    %v765 = vrot.slane %v764, 4
    %v766 = vmax.f32 %v764, %v765
    %v767 = vrot.slane %v766, 2
    %v768 = vmax.f32 %v766, %v767
    %v769 = vrot.slane %v768, 1
    %v770 = vmax.f32 %v768, %v769
    %s771 = vtos %v770
    %v772 = vstv %s771
    %vm773 = vcmp.eq.f32.partialorder %v756, %v772
    %vm774 = vcmp.eq.f32.partialorder %v757, %v772
    %vm775 = vcmp.eq.f32.partialorder %v758, %v772
    %vm776 = vcmp.eq.f32.partialorder %v759, %v772
    %v777 = vsel %vm773, %v533, 2147483647
    %v778 = vsel %vm774, %v534, 2147483647
    %v779 = vsel %vm775, %v535, 2147483647
    %v780 = vsel %vm776, %v536, 2147483647
    %vm781 = vcmp.lt.s32.totalorder %v777, %v778
    %v782 = vsel %vm781, %v777, %v778
    %vm783 = vcmp.lt.s32.totalorder %v779, %v780
    %v784 = vsel %vm783, %v779, %v780
    %vm785 = vcmp.lt.s32.totalorder %v782, %v784
    %v786 = vsel %vm785, %v782, %v784
    %v787 = vand.u32 %v786, 65535
    %v788 = vshra.s32 %v786, 16
    %v789 = vcvt.s32.f32 %v787
    %v790 = vcvt.s32.f32 %v788
    %791 = vmin.xlane.f32.xlu0 %v790
    %v792 = vpop.xlane.xlu0 %791
    %vm793 = vcmp.eq.f32.partialorder %v790, %v792
    %v794 = vsel %vm793, %v789, inf
    %795 = vmin.xlane.f32.xlu0 %v794
    %v796 = vpop.xlane.xlu0 %795
    %v797 = vcvt.f32.s32 %v796
    %v798 = vcvt.f32.s32 %v792
    %v799 = vshll.u32 %v798, 16
    %v800 = vadd.s32 %v799, %v797
    %v801 = vrot.slane %v800, 4
    %vm802 = vcmp.lt.s32.totalorder %v800, %v801
    %v803 = vsel %vm802, %v800, %v801
    %v804 = vrot.slane %v803, 2
    %vm805 = vcmp.lt.s32.totalorder %v803, %v804
    %v806 = vsel %vm805, %v803, %v804
    %v807 = vrot.slane %v806, 1
    %vm808 = vcmp.lt.s32.totalorder %v806, %v807
    %v809 = vsel %vm808, %v806, %v807
    %s810 = vtos %v809
    %v811 = vsel %vm596, %v749, inf
    %812 = vmin.xlane.f32.xlu0 %v811
    %v813 = vpop.xlane.xlu0 %812
    %v814 = vrot.slane %v813, 4
    %v815 = vmin.f32 %v813, %v814
    %v816 = vrot.slane %v815, 2
    %v817 = vmin.f32 %v815, %v816
    %v818 = vrot.slane %v817, 1
    %v819 = vmin.f32 %v817, %v818
    %s820 = vtos %v819
    %v821 = vstv %s820
    %vm822 = vcmp.eq.f32.partialorder %v749, %v821
    %v823 = vsel %vm822, %v92, 2147483647
    %v824 = vsel %vm596, %v823, 2147483647
    %v825 = vand.u32 %v824, 65535
    %v826 = vshra.s32 %v824, 16
    %v827 = vcvt.s32.f32 %v825
    %v828 = vcvt.s32.f32 %v826
    %829 = vmin.xlane.f32.xlu0 %v828
    %v830 = vpop.xlane.xlu0 %829
    %vm831 = vcmp.eq.f32.partialorder %v828, %v830
    %v832 = vsel %vm831, %v827, inf
    %833 = vmin.xlane.f32.xlu0 %v832
    %v834 = vpop.xlane.xlu0 %833
    %v835 = vcvt.f32.s32 %v834
    %v836 = vcvt.f32.s32 %v830
    %v837 = vshll.u32 %v836, 16
    %v838 = vadd.s32 %v837, %v835
    %v839 = vrot.slane %v838, 4
    %vm840 = vcmp.lt.s32.totalorder %v838, %v839
    %v841 = vsel %vm840, %v838, %v839
    %v842 = vrot.slane %v841, 2
    %vm843 = vcmp.lt.s32.totalorder %v841, %v842
    %v844 = vsel %vm843, %v841, %v842
    %v845 = vrot.slane %v844, 1
    %vm846 = vcmp.lt.s32.totalorder %v844, %v845
    %v847 = vsel %vm846, %v844, %v845
    %s848 = vtos %v847
    %v849 = vstv %s848
    %vm850 = vcmp.eq.s32.totalorder %v92, %v849
    %p851 = scmp.gt.f32.partialorder %s771, %s820
    %s852 = scalar_select %p851, 1, 0
    %v853 = vstv %s852
    %vm854 = vcmp.eq.s32.totalorder %v853, 1
    %vm855 = vmand %vm850, %vm854
    %v856 = vsel %vm855, %v772, %v749
    %v857 = vstv %s810
    %v858 = vsel %vm855, %v857, %v751
    %vm859 = vcmp.eq.s32.totalorder %v533, %v857
    %vm860 = vcmp.eq.s32.totalorder %v534, %v857
    %vm861 = vcmp.eq.s32.totalorder %v535, %v857
    %vm862 = vcmp.eq.s32.totalorder %v536, %v857
    %v863 = vsel %vm859, -inf, %v756
    %v864 = vsel %vm860, -inf, %v757
    %v865 = vsel %vm861, -inf, %v758
    %v866 = vsel %vm862, -inf, %v759
    %v867 = vmax.f32 %v863, %v864
    %v868 = vmax.f32 %v865, %v866
    %v869 = vmax.f32 %v867, %v868
    %870 = vmax.xlane.f32.xlu0 %v869
    %v871 = vpop.xlane.xlu0 %870
    %v872 = vrot.slane %v871, 4
    %v873 = vmax.f32 %v871, %v872
    %v874 = vrot.slane %v873, 2
    %v875 = vmax.f32 %v873, %v874
    %v876 = vrot.slane %v875, 1
    %v877 = vmax.f32 %v875, %v876
    %s878 = vtos %v877
    %v879 = vstv %s878
    %vm880 = vcmp.eq.f32.partialorder %v863, %v879
    %vm881 = vcmp.eq.f32.partialorder %v864, %v879
    %vm882 = vcmp.eq.f32.partialorder %v865, %v879
    %vm883 = vcmp.eq.f32.partialorder %v866, %v879
    %v884 = vsel %vm880, %v533, 2147483647
    %v885 = vsel %vm881, %v534, 2147483647
    %v886 = vsel %vm882, %v535, 2147483647
    %v887 = vsel %vm883, %v536, 2147483647
    %vm888 = vcmp.lt.s32.totalorder %v884, %v885
    %v889 = vsel %vm888, %v884, %v885
    %vm890 = vcmp.lt.s32.totalorder %v886, %v887
    %v891 = vsel %vm890, %v886, %v887
    %vm892 = vcmp.lt.s32.totalorder %v889, %v891
    %v893 = vsel %vm892, %v889, %v891
    %v894 = vand.u32 %v893, 65535
    %v895 = vshra.s32 %v893, 16
    %v896 = vcvt.s32.f32 %v894
    %v897 = vcvt.s32.f32 %v895
    %898 = vmin.xlane.f32.xlu0 %v897
    %v899 = vpop.xlane.xlu0 %898
    %vm900 = vcmp.eq.f32.partialorder %v897, %v899
    %v901 = vsel %vm900, %v896, inf
    %902 = vmin.xlane.f32.xlu0 %v901
    %v903 = vpop.xlane.xlu0 %902
    %v904 = vcvt.f32.s32 %v903
    %v905 = vcvt.f32.s32 %v899
    %v906 = vshll.u32 %v905, 16
    %v907 = vadd.s32 %v906, %v904
    %v908 = vrot.slane %v907, 4
    %vm909 = vcmp.lt.s32.totalorder %v907, %v908
    %v910 = vsel %vm909, %v907, %v908
    %v911 = vrot.slane %v910, 2
    %vm912 = vcmp.lt.s32.totalorder %v910, %v911
    %v913 = vsel %vm912, %v910, %v911
    %v914 = vrot.slane %v913, 1
    %vm915 = vcmp.lt.s32.totalorder %v913, %v914
    %v916 = vsel %vm915, %v913, %v914
    %s917 = vtos %v916
    %v918 = vsel %vm596, %v856, inf
    %919 = vmin.xlane.f32.xlu0 %v918
    %v920 = vpop.xlane.xlu0 %919
    %v921 = vrot.slane %v920, 4
    %v922 = vmin.f32 %v920, %v921
    %v923 = vrot.slane %v922, 2
    %v924 = vmin.f32 %v922, %v923
    %v925 = vrot.slane %v924, 1
    %v926 = vmin.f32 %v924, %v925
    %s927 = vtos %v926
    %v928 = vstv %s927
    %vm929 = vcmp.eq.f32.partialorder %v856, %v928
    %v930 = vsel %vm929, %v92, 2147483647
    %v931 = vsel %vm596, %v930, 2147483647
    %v932 = vand.u32 %v931, 65535
    %v933 = vshra.s32 %v931, 16
    %v934 = vcvt.s32.f32 %v932
    %v935 = vcvt.s32.f32 %v933
    %936 = vmin.xlane.f32.xlu0 %v935
    %v937 = vpop.xlane.xlu0 %936
    %vm938 = vcmp.eq.f32.partialorder %v935, %v937
    %v939 = vsel %vm938, %v934, inf
    %940 = vmin.xlane.f32.xlu0 %v939
    %v941 = vpop.xlane.xlu0 %940
    %v942 = vcvt.f32.s32 %v941
    %v943 = vcvt.f32.s32 %v937
    %v944 = vshll.u32 %v943, 16
    %v945 = vadd.s32 %v944, %v942
    %v946 = vrot.slane %v945, 4
    %vm947 = vcmp.lt.s32.totalorder %v945, %v946
    %v948 = vsel %vm947, %v945, %v946
    %v949 = vrot.slane %v948, 2
    %vm950 = vcmp.lt.s32.totalorder %v948, %v949
    %v951 = vsel %vm950, %v948, %v949
    %v952 = vrot.slane %v951, 1
    %vm953 = vcmp.lt.s32.totalorder %v951, %v952
    %v954 = vsel %vm953, %v951, %v952
    %s955 = vtos %v954
    %v956 = vstv %s955
    %vm957 = vcmp.eq.s32.totalorder %v92, %v956
    %p958 = scmp.gt.f32.partialorder %s878, %s927
    %s959 = scalar_select %p958, 1, 0
    %v960 = vstv %s959
    %vm961 = vcmp.eq.s32.totalorder %v960, 1
    %vm962 = vmand %vm957, %vm961
    %v963 = vsel %vm962, %v879, %v856
    %v964 = vstv %s917
    %v965 = vsel %vm962, %v964, %v858
    %vm966 = vcmp.eq.s32.totalorder %v533, %v964
    %vm967 = vcmp.eq.s32.totalorder %v534, %v964
    %vm968 = vcmp.eq.s32.totalorder %v535, %v964
    %vm969 = vcmp.eq.s32.totalorder %v536, %v964
    %v970 = vsel %vm966, -inf, %v863
    %v971 = vsel %vm967, -inf, %v864
    %v972 = vsel %vm968, -inf, %v865
    %v973 = vsel %vm969, -inf, %v866
    %v974 = vmax.f32 %v970, %v971
    %v975 = vmax.f32 %v972, %v973
    %v976 = vmax.f32 %v974, %v975
    %977 = vmax.xlane.f32.xlu0 %v976
    %v978 = vpop.xlane.xlu0 %977
    %v979 = vrot.slane %v978, 4
    %v980 = vmax.f32 %v978, %v979
    %v981 = vrot.slane %v980, 2
    %v982 = vmax.f32 %v980, %v981
    %v983 = vrot.slane %v982, 1
    %v984 = vmax.f32 %v982, %v983
    %s985 = vtos %v984
    %v986 = vstv %s985
    %vm987 = vcmp.eq.f32.partialorder %v970, %v986
    %vm988 = vcmp.eq.f32.partialorder %v971, %v986
    %vm989 = vcmp.eq.f32.partialorder %v972, %v986
    %vm990 = vcmp.eq.f32.partialorder %v973, %v986
    %v991 = vsel %vm987, %v533, 2147483647
    %v992 = vsel %vm988, %v534, 2147483647
    %v993 = vsel %vm989, %v535, 2147483647
    %v994 = vsel %vm990, %v536, 2147483647
    %vm995 = vcmp.lt.s32.totalorder %v991, %v992
    %v996 = vsel %vm995, %v991, %v992
    %vm997 = vcmp.lt.s32.totalorder %v993, %v994
    %v998 = vsel %vm997, %v993, %v994
    %vm999 = vcmp.lt.s32.totalorder %v996, %v998
    %v1000 = vsel %vm999, %v996, %v998
    %v1001 = vand.u32 %v1000, 65535
    %v1002 = vshra.s32 %v1000, 16
    %v1003 = vcvt.s32.f32 %v1001
    %v1004 = vcvt.s32.f32 %v1002
    %1005 = vmin.xlane.f32.xlu0 %v1004
    %v1006 = vpop.xlane.xlu0 %1005
    %vm1007 = vcmp.eq.f32.partialorder %v1004, %v1006
    %v1008 = vsel %vm1007, %v1003, inf
    %1009 = vmin.xlane.f32.xlu0 %v1008
    %v1010 = vpop.xlane.xlu0 %1009
    %v1011 = vcvt.f32.s32 %v1010
    %v1012 = vcvt.f32.s32 %v1006
    %v1013 = vshll.u32 %v1012, 16
    %v1014 = vadd.s32 %v1013, %v1011
    %v1015 = vrot.slane %v1014, 4
    %vm1016 = vcmp.lt.s32.totalorder %v1014, %v1015
    %v1017 = vsel %vm1016, %v1014, %v1015
    %v1018 = vrot.slane %v1017, 2
    %vm1019 = vcmp.lt.s32.totalorder %v1017, %v1018
    %v1020 = vsel %vm1019, %v1017, %v1018
    %v1021 = vrot.slane %v1020, 1
    %vm1022 = vcmp.lt.s32.totalorder %v1020, %v1021
    %v1023 = vsel %vm1022, %v1020, %v1021
    %s1024 = vtos %v1023
    %v1025 = vsel %vm596, %v963, inf
    %1026 = vmin.xlane.f32.xlu0 %v1025
    %v1027 = vpop.xlane.xlu0 %1026
    %v1028 = vrot.slane %v1027, 4
    %v1029 = vmin.f32 %v1027, %v1028
    %v1030 = vrot.slane %v1029, 2
    %v1031 = vmin.f32 %v1029, %v1030
    %v1032 = vrot.slane %v1031, 1
    %v1033 = vmin.f32 %v1031, %v1032
    %s1034 = vtos %v1033
    %v1035 = vstv %s1034
    %vm1036 = vcmp.eq.f32.partialorder %v963, %v1035
    %v1037 = vsel %vm1036, %v92, 2147483647
    %v1038 = vsel %vm596, %v1037, 2147483647
    %v1039 = vand.u32 %v1038, 65535
    %v1040 = vshra.s32 %v1038, 16
    %v1041 = vcvt.s32.f32 %v1039
    %v1042 = vcvt.s32.f32 %v1040
    %1043 = vmin.xlane.f32.xlu0 %v1042
    %v1044 = vpop.xlane.xlu0 %1043
    %vm1045 = vcmp.eq.f32.partialorder %v1042, %v1044
    %v1046 = vsel %vm1045, %v1041, inf
    %1047 = vmin.xlane.f32.xlu0 %v1046
    %v1048 = vpop.xlane.xlu0 %1047
    %v1049 = vcvt.f32.s32 %v1048
    %v1050 = vcvt.f32.s32 %v1044
    %v1051 = vshll.u32 %v1050, 16
    %v1052 = vadd.s32 %v1051, %v1049
    %v1053 = vrot.slane %v1052, 4
    %vm1054 = vcmp.lt.s32.totalorder %v1052, %v1053
    %v1055 = vsel %vm1054, %v1052, %v1053
    %v1056 = vrot.slane %v1055, 2
    %vm1057 = vcmp.lt.s32.totalorder %v1055, %v1056
    %v1058 = vsel %vm1057, %v1055, %v1056
    %v1059 = vrot.slane %v1058, 1
    %vm1060 = vcmp.lt.s32.totalorder %v1058, %v1059
    %v1061 = vsel %vm1060, %v1058, %v1059
    %s1062 = vtos %v1061
    %v1063 = vstv %s1062
    %vm1064 = vcmp.eq.s32.totalorder %v92, %v1063
    %p1065 = scmp.gt.f32.partialorder %s985, %s1034
    %s1066 = scalar_select %p1065, 1, 0
    %v1067 = vstv %s1066
    %vm1068 = vcmp.eq.s32.totalorder %v1067, 1
    %vm1069 = vmand %vm1064, %vm1068
    %v1070 = vsel %vm1069, %v986, %v963
    %v1071 = vstv %s1024
    %v1072 = vsel %vm1069, %v1071, %v965
    %vm1073 = vcmp.eq.s32.totalorder %v533, %v1071
    %vm1074 = vcmp.eq.s32.totalorder %v534, %v1071
    %vm1075 = vcmp.eq.s32.totalorder %v535, %v1071
    %vm1076 = vcmp.eq.s32.totalorder %v536, %v1071
    %v1077 = vsel %vm1073, -inf, %v970
    %v1078 = vsel %vm1074, -inf, %v971
    %v1079 = vsel %vm1075, -inf, %v972
    %v1080 = vsel %vm1076, -inf, %v973
    %v1081 = vmax.f32 %v1077, %v1078
    %v1082 = vmax.f32 %v1079, %v1080
    %v1083 = vmax.f32 %v1081, %v1082
    %1084 = vmax.xlane.f32.xlu0 %v1083
    %v1085 = vpop.xlane.xlu0 %1084
    %v1086 = vrot.slane %v1085, 4
    %v1087 = vmax.f32 %v1085, %v1086
    %v1088 = vrot.slane %v1087, 2
    %v1089 = vmax.f32 %v1087, %v1088
    %v1090 = vrot.slane %v1089, 1
    %v1091 = vmax.f32 %v1089, %v1090
    %s1092 = vtos %v1091
    %v1093 = vstv %s1092
    %vm1094 = vcmp.eq.f32.partialorder %v1077, %v1093
    %vm1095 = vcmp.eq.f32.partialorder %v1078, %v1093
    %vm1096 = vcmp.eq.f32.partialorder %v1079, %v1093
    %vm1097 = vcmp.eq.f32.partialorder %v1080, %v1093
    %v1098 = vsel %vm1094, %v533, 2147483647
    %v1099 = vsel %vm1095, %v534, 2147483647
    %v1100 = vsel %vm1096, %v535, 2147483647
    %v1101 = vsel %vm1097, %v536, 2147483647
    %vm1102 = vcmp.lt.s32.totalorder %v1098, %v1099
    %v1103 = vsel %vm1102, %v1098, %v1099
    %vm1104 = vcmp.lt.s32.totalorder %v1100, %v1101
    %v1105 = vsel %vm1104, %v1100, %v1101
    %vm1106 = vcmp.lt.s32.totalorder %v1103, %v1105
    %v1107 = vsel %vm1106, %v1103, %v1105
    %v1108 = vand.u32 %v1107, 65535
    %v1109 = vshra.s32 %v1107, 16
    %v1110 = vcvt.s32.f32 %v1108
    %v1111 = vcvt.s32.f32 %v1109
    %1112 = vmin.xlane.f32.xlu0 %v1111
    %v1113 = vpop.xlane.xlu0 %1112
    %vm1114 = vcmp.eq.f32.partialorder %v1111, %v1113
    %v1115 = vsel %vm1114, %v1110, inf
    %1116 = vmin.xlane.f32.xlu0 %v1115
    %v1117 = vpop.xlane.xlu0 %1116
    %v1118 = vcvt.f32.s32 %v1117
    %v1119 = vcvt.f32.s32 %v1113
    %v1120 = vshll.u32 %v1119, 16
    %v1121 = vadd.s32 %v1120, %v1118
    %v1122 = vrot.slane %v1121, 4
    %vm1123 = vcmp.lt.s32.totalorder %v1121, %v1122
    %v1124 = vsel %vm1123, %v1121, %v1122
    %v1125 = vrot.slane %v1124, 2
    %vm1126 = vcmp.lt.s32.totalorder %v1124, %v1125
    %v1127 = vsel %vm1126, %v1124, %v1125
    %v1128 = vrot.slane %v1127, 1
    %vm1129 = vcmp.lt.s32.totalorder %v1127, %v1128
    %v1130 = vsel %vm1129, %v1127, %v1128
    %s1131 = vtos %v1130
    %v1132 = vsel %vm596, %v1070, inf
    %1133 = vmin.xlane.f32.xlu0 %v1132
    %v1134 = vpop.xlane.xlu0 %1133
    %v1135 = vrot.slane %v1134, 4
    %v1136 = vmin.f32 %v1134, %v1135
    %v1137 = vrot.slane %v1136, 2
    %v1138 = vmin.f32 %v1136, %v1137
    %v1139 = vrot.slane %v1138, 1
    %v1140 = vmin.f32 %v1138, %v1139
    %s1141 = vtos %v1140
    %v1142 = vstv %s1141
    %vm1143 = vcmp.eq.f32.partialorder %v1070, %v1142
    %v1144 = vsel %vm1143, %v92, 2147483647
    %v1145 = vsel %vm596, %v1144, 2147483647
    %v1146 = vand.u32 %v1145, 65535
    %v1147 = vshra.s32 %v1145, 16
    %v1148 = vcvt.s32.f32 %v1146
    %v1149 = vcvt.s32.f32 %v1147
    %1150 = vmin.xlane.f32.xlu0 %v1149
    %v1151 = vpop.xlane.xlu0 %1150
    %vm1152 = vcmp.eq.f32.partialorder %v1149, %v1151
    %v1153 = vsel %vm1152, %v1148, inf
    %1154 = vmin.xlane.f32.xlu0 %v1153
    %v1155 = vpop.xlane.xlu0 %1154
    %v1156 = vcvt.f32.s32 %v1155
    %v1157 = vcvt.f32.s32 %v1151
    %v1158 = vshll.u32 %v1157, 16
    %v1159 = vadd.s32 %v1158, %v1156
    %v1160 = vrot.slane %v1159, 4
    %vm1161 = vcmp.lt.s32.totalorder %v1159, %v1160
    %v1162 = vsel %vm1161, %v1159, %v1160
    %v1163 = vrot.slane %v1162, 2
    %vm1164 = vcmp.lt.s32.totalorder %v1162, %v1163
    %v1165 = vsel %vm1164, %v1162, %v1163
    %v1166 = vrot.slane %v1165, 1
    %vm1167 = vcmp.lt.s32.totalorder %v1165, %v1166
    %v1168 = vsel %vm1167, %v1165, %v1166
    %s1169 = vtos %v1168
    %v1170 = vstv %s1169
    %vm1171 = vcmp.eq.s32.totalorder %v92, %v1170
    %p1172 = scmp.gt.f32.partialorder %s1092, %s1141
    %s1173 = scalar_select %p1172, 1, 0
    %v1174 = vstv %s1173
    %vm1175 = vcmp.eq.s32.totalorder %v1174, 1
    %vm1176 = vmand %vm1171, %vm1175
    %v1177 = vsel %vm1176, %v1093, %v1070
    %v1178 = vstv %s1131
    %v1179 = vsel %vm1176, %v1178, %v1072
    %vm1180 = vcmp.eq.s32.totalorder %v533, %v1178
    %vm1181 = vcmp.eq.s32.totalorder %v534, %v1178
    %vm1182 = vcmp.eq.s32.totalorder %v535, %v1178
    %vm1183 = vcmp.eq.s32.totalorder %v536, %v1178
    %v1184 = vsel %vm1180, -inf, %v1077
    %v1185 = vsel %vm1181, -inf, %v1078
    %v1186 = vsel %vm1182, -inf, %v1079
    %v1187 = vsel %vm1183, -inf, %v1080
    %v1188 = vmax.f32 %v1184, %v1185
    %v1189 = vmax.f32 %v1186, %v1187
    %v1190 = vmax.f32 %v1188, %v1189
    %1191 = vmax.xlane.f32.xlu0 %v1190
    %v1192 = vpop.xlane.xlu0 %1191
    %v1193 = vrot.slane %v1192, 4
    %v1194 = vmax.f32 %v1192, %v1193
    %v1195 = vrot.slane %v1194, 2
    %v1196 = vmax.f32 %v1194, %v1195
    %v1197 = vrot.slane %v1196, 1
    %v1198 = vmax.f32 %v1196, %v1197
    %s1199 = vtos %v1198
    %v1200 = vstv %s1199
    %vm1201 = vcmp.eq.f32.partialorder %v1184, %v1200
    %vm1202 = vcmp.eq.f32.partialorder %v1185, %v1200
    %vm1203 = vcmp.eq.f32.partialorder %v1186, %v1200
    %vm1204 = vcmp.eq.f32.partialorder %v1187, %v1200
    %v1205 = vsel %vm1201, %v533, 2147483647
    %v1206 = vsel %vm1202, %v534, 2147483647
    %v1207 = vsel %vm1203, %v535, 2147483647
    %v1208 = vsel %vm1204, %v536, 2147483647
    %vm1209 = vcmp.lt.s32.totalorder %v1205, %v1206
    %v1210 = vsel %vm1209, %v1205, %v1206
    %vm1211 = vcmp.lt.s32.totalorder %v1207, %v1208
    %v1212 = vsel %vm1211, %v1207, %v1208
    %vm1213 = vcmp.lt.s32.totalorder %v1210, %v1212
    %v1214 = vsel %vm1213, %v1210, %v1212
    %v1215 = vand.u32 %v1214, 65535
    %v1216 = vshra.s32 %v1214, 16
    %v1217 = vcvt.s32.f32 %v1215
    %v1218 = vcvt.s32.f32 %v1216
    %1219 = vmin.xlane.f32.xlu0 %v1218
    %v1220 = vpop.xlane.xlu0 %1219
    %vm1221 = vcmp.eq.f32.partialorder %v1218, %v1220
    %v1222 = vsel %vm1221, %v1217, inf
    %1223 = vmin.xlane.f32.xlu0 %v1222
    %v1224 = vpop.xlane.xlu0 %1223
    %v1225 = vcvt.f32.s32 %v1224
    %v1226 = vcvt.f32.s32 %v1220
    %v1227 = vshll.u32 %v1226, 16
    %v1228 = vadd.s32 %v1227, %v1225
    %v1229 = vrot.slane %v1228, 4
    %vm1230 = vcmp.lt.s32.totalorder %v1228, %v1229
    %v1231 = vsel %vm1230, %v1228, %v1229
    %v1232 = vrot.slane %v1231, 2
    %vm1233 = vcmp.lt.s32.totalorder %v1231, %v1232
    %v1234 = vsel %vm1233, %v1231, %v1232
    %v1235 = vrot.slane %v1234, 1
    %vm1236 = vcmp.lt.s32.totalorder %v1234, %v1235
    %v1237 = vsel %vm1236, %v1234, %v1235
    %s1238 = vtos %v1237
    %v1239 = vsel %vm596, %v1177, inf
    %1240 = vmin.xlane.f32.xlu0 %v1239
    %v1241 = vpop.xlane.xlu0 %1240
    %v1242 = vrot.slane %v1241, 4
    %v1243 = vmin.f32 %v1241, %v1242
    %v1244 = vrot.slane %v1243, 2
    %v1245 = vmin.f32 %v1243, %v1244
    %v1246 = vrot.slane %v1245, 1
    %v1247 = vmin.f32 %v1245, %v1246
    %s1248 = vtos %v1247
    %v1249 = vstv %s1248
    %vm1250 = vcmp.eq.f32.partialorder %v1177, %v1249
    %v1251 = vsel %vm1250, %v92, 2147483647
    %v1252 = vsel %vm596, %v1251, 2147483647
    %v1253 = vand.u32 %v1252, 65535
    %v1254 = vshra.s32 %v1252, 16
    %v1255 = vcvt.s32.f32 %v1253
    %v1256 = vcvt.s32.f32 %v1254
    %1257 = vmin.xlane.f32.xlu0 %v1256
    %v1258 = vpop.xlane.xlu0 %1257
    %vm1259 = vcmp.eq.f32.partialorder %v1256, %v1258
    %v1260 = vsel %vm1259, %v1255, inf
    %1261 = vmin.xlane.f32.xlu0 %v1260
    %v1262 = vpop.xlane.xlu0 %1261
    %v1263 = vcvt.f32.s32 %v1262
    %v1264 = vcvt.f32.s32 %v1258
    %v1265 = vshll.u32 %v1264, 16
    %v1266 = vadd.s32 %v1265, %v1263
    %v1267 = vrot.slane %v1266, 4
    %vm1268 = vcmp.lt.s32.totalorder %v1266, %v1267
    %v1269 = vsel %vm1268, %v1266, %v1267
    %v1270 = vrot.slane %v1269, 2
    %vm1271 = vcmp.lt.s32.totalorder %v1269, %v1270
    %v1272 = vsel %vm1271, %v1269, %v1270
    %v1273 = vrot.slane %v1272, 1
    %vm1274 = vcmp.lt.s32.totalorder %v1272, %v1273
    %v1275 = vsel %vm1274, %v1272, %v1273
    %s1276 = vtos %v1275
    %v1277 = vstv %s1276
    %vm1278 = vcmp.eq.s32.totalorder %v92, %v1277
    %p1279 = scmp.gt.f32.partialorder %s1199, %s1248
    %s1280 = scalar_select %p1279, 1, 0
    %v1281 = vstv %s1280
    %vm1282 = vcmp.eq.s32.totalorder %v1281, 1
    %vm1283 = vmand %vm1278, %vm1282
    %v1284 = vsel %vm1283, %v1200, %v1177
    %v1285 = vstv %s1238
    %v1286 = vsel %vm1283, %v1285, %v1179
    %vm1287 = vcmp.eq.s32.totalorder %v533, %v1285
    %vm1288 = vcmp.eq.s32.totalorder %v534, %v1285
    %vm1289 = vcmp.eq.s32.totalorder %v535, %v1285
    %vm1290 = vcmp.eq.s32.totalorder %v536, %v1285
    %v1291 = vsel %vm1287, -inf, %v1184
    %v1292 = vsel %vm1288, -inf, %v1185
    %v1293 = vsel %vm1289, -inf, %v1186
    %v1294 = vsel %vm1290, -inf, %v1187
    %v1295 = vmax.f32 %v1291, %v1292
    %v1296 = vmax.f32 %v1293, %v1294
    %v1297 = vmax.f32 %v1295, %v1296
    %1298 = vmax.xlane.f32.xlu0 %v1297
    %v1299 = vpop.xlane.xlu0 %1298
    %v1300 = vrot.slane %v1299, 4
    %v1301 = vmax.f32 %v1299, %v1300
    %v1302 = vrot.slane %v1301, 2
    %v1303 = vmax.f32 %v1301, %v1302
    %v1304 = vrot.slane %v1303, 1
    %v1305 = vmax.f32 %v1303, %v1304
    %s1306 = vtos %v1305
    %v1307 = vstv %s1306
    %vm1308 = vcmp.eq.f32.partialorder %v1291, %v1307
    %vm1309 = vcmp.eq.f32.partialorder %v1292, %v1307
    %vm1310 = vcmp.eq.f32.partialorder %v1293, %v1307
    %vm1311 = vcmp.eq.f32.partialorder %v1294, %v1307
    %v1312 = vsel %vm1308, %v533, 2147483647
    %v1313 = vsel %vm1309, %v534, 2147483647
    %v1314 = vsel %vm1310, %v535, 2147483647
    %v1315 = vsel %vm1311, %v536, 2147483647
    %vm1316 = vcmp.lt.s32.totalorder %v1312, %v1313
    %v1317 = vsel %vm1316, %v1312, %v1313
    %vm1318 = vcmp.lt.s32.totalorder %v1314, %v1315
    %v1319 = vsel %vm1318, %v1314, %v1315
    %vm1320 = vcmp.lt.s32.totalorder %v1317, %v1319
    %v1321 = vsel %vm1320, %v1317, %v1319
    %v1322 = vand.u32 %v1321, 65535
    %v1323 = vshra.s32 %v1321, 16
    %v1324 = vcvt.s32.f32 %v1322
    %v1325 = vcvt.s32.f32 %v1323
    %1326 = vmin.xlane.f32.xlu0 %v1325
    %v1327 = vpop.xlane.xlu0 %1326
    %vm1328 = vcmp.eq.f32.partialorder %v1325, %v1327
    %v1329 = vsel %vm1328, %v1324, inf
    %1330 = vmin.xlane.f32.xlu0 %v1329
    %v1331 = vpop.xlane.xlu0 %1330
    %v1332 = vcvt.f32.s32 %v1331
    %v1333 = vcvt.f32.s32 %v1327
    %v1334 = vshll.u32 %v1333, 16
    %v1335 = vadd.s32 %v1334, %v1332
    %v1336 = vrot.slane %v1335, 4
    %vm1337 = vcmp.lt.s32.totalorder %v1335, %v1336
    %v1338 = vsel %vm1337, %v1335, %v1336
    %v1339 = vrot.slane %v1338, 2
    %vm1340 = vcmp.lt.s32.totalorder %v1338, %v1339
    %v1341 = vsel %vm1340, %v1338, %v1339
    %v1342 = vrot.slane %v1341, 1
    %vm1343 = vcmp.lt.s32.totalorder %v1341, %v1342
    %v1344 = vsel %vm1343, %v1341, %v1342
    %s1345 = vtos %v1344
    %v1346 = vsel %vm596, %v1284, inf
    %1347 = vmin.xlane.f32.xlu0 %v1346
    %v1348 = vpop.xlane.xlu0 %1347
    %v1349 = vrot.slane %v1348, 4
    %v1350 = vmin.f32 %v1348, %v1349
    %v1351 = vrot.slane %v1350, 2
    %v1352 = vmin.f32 %v1350, %v1351
    %v1353 = vrot.slane %v1352, 1
    %v1354 = vmin.f32 %v1352, %v1353
    %s1355 = vtos %v1354
    %v1356 = vstv %s1355
    %vm1357 = vcmp.eq.f32.partialorder %v1284, %v1356
    %v1358 = vsel %vm1357, %v92, 2147483647
    %v1359 = vsel %vm596, %v1358, 2147483647
    %v1360 = vand.u32 %v1359, 65535
    %v1361 = vshra.s32 %v1359, 16
    %v1362 = vcvt.s32.f32 %v1360
    %v1363 = vcvt.s32.f32 %v1361
    %1364 = vmin.xlane.f32.xlu0 %v1363
    %v1365 = vpop.xlane.xlu0 %1364
    %vm1366 = vcmp.eq.f32.partialorder %v1363, %v1365
    %v1367 = vsel %vm1366, %v1362, inf
    %1368 = vmin.xlane.f32.xlu0 %v1367
    %v1369 = vpop.xlane.xlu0 %1368
    %v1370 = vcvt.f32.s32 %v1369
    %v1371 = vcvt.f32.s32 %v1365
    %v1372 = vshll.u32 %v1371, 16
    %v1373 = vadd.s32 %v1372, %v1370
    %v1374 = vrot.slane %v1373, 4
    %vm1375 = vcmp.lt.s32.totalorder %v1373, %v1374
    %v1376 = vsel %vm1375, %v1373, %v1374
    %v1377 = vrot.slane %v1376, 2
    %vm1378 = vcmp.lt.s32.totalorder %v1376, %v1377
    %v1379 = vsel %vm1378, %v1376, %v1377
    %v1380 = vrot.slane %v1379, 1
    %vm1381 = vcmp.lt.s32.totalorder %v1379, %v1380
    %v1382 = vsel %vm1381, %v1379, %v1380
    %s1383 = vtos %v1382
    %v1384 = vstv %s1383
    %vm1385 = vcmp.eq.s32.totalorder %v92, %v1384
    %p1386 = scmp.gt.f32.partialorder %s1306, %s1355
    %s1387 = scalar_select %p1386, 1, 0
    %v1388 = vstv %s1387
    %vm1389 = vcmp.eq.s32.totalorder %v1388, 1
    %vm1390 = vmand %vm1385, %vm1389
    %v1391 = vsel %vm1390, %v1307, %v1284
    %v1392 = vstv %s1345
    %v1393 = vsel %vm1390, %v1392, %v1286
    %vm1394 = vcmp.eq.s32.totalorder %v533, %v1392
    %vm1395 = vcmp.eq.s32.totalorder %v534, %v1392
    %vm1396 = vcmp.eq.s32.totalorder %v535, %v1392
    %vm1397 = vcmp.eq.s32.totalorder %v536, %v1392
    %v1398 = vsel %vm1394, -inf, %v1291
    %v1399 = vsel %vm1395, -inf, %v1292
    %v1400 = vsel %vm1396, -inf, %v1293
    %v1401 = vsel %vm1397, -inf, %v1294
    %v1402 = vmax.f32 %v1398, %v1399
    %v1403 = vmax.f32 %v1400, %v1401
    %v1404 = vmax.f32 %v1402, %v1403
    %1405 = vmax.xlane.f32.xlu0 %v1404
    %v1406 = vpop.xlane.xlu0 %1405
    %v1407 = vrot.slane %v1406, 4
    %v1408 = vmax.f32 %v1406, %v1407
    %v1409 = vrot.slane %v1408, 2
    %v1410 = vmax.f32 %v1408, %v1409
    %v1411 = vrot.slane %v1410, 1
    %v1412 = vmax.f32 %v1410, %v1411
    %s1413 = vtos %v1412
    %v1414 = vstv %s1413
    %vm1415 = vcmp.eq.f32.partialorder %v1398, %v1414
    %vm1416 = vcmp.eq.f32.partialorder %v1399, %v1414
    %vm1417 = vcmp.eq.f32.partialorder %v1400, %v1414
    %vm1418 = vcmp.eq.f32.partialorder %v1401, %v1414
    %v1419 = vsel %vm1415, %v533, 2147483647
    %v1420 = vsel %vm1416, %v534, 2147483647
    %v1421 = vsel %vm1417, %v535, 2147483647
    %v1422 = vsel %vm1418, %v536, 2147483647
    %vm1423 = vcmp.lt.s32.totalorder %v1419, %v1420
    %v1424 = vsel %vm1423, %v1419, %v1420
    %vm1425 = vcmp.lt.s32.totalorder %v1421, %v1422
    %v1426 = vsel %vm1425, %v1421, %v1422
    %vm1427 = vcmp.lt.s32.totalorder %v1424, %v1426
    %v1428 = vsel %vm1427, %v1424, %v1426
    %v1429 = vand.u32 %v1428, 65535
    %v1430 = vshra.s32 %v1428, 16
    %v1431 = vcvt.s32.f32 %v1429
    %v1432 = vcvt.s32.f32 %v1430
    %1433 = vmin.xlane.f32.xlu0 %v1432
    %v1434 = vpop.xlane.xlu0 %1433
    %vm1435 = vcmp.eq.f32.partialorder %v1432, %v1434
    %v1436 = vsel %vm1435, %v1431, inf
    %1437 = vmin.xlane.f32.xlu0 %v1436
    %v1438 = vpop.xlane.xlu0 %1437
    %v1439 = vcvt.f32.s32 %v1438
    %v1440 = vcvt.f32.s32 %v1434
    %v1441 = vshll.u32 %v1440, 16
    %v1442 = vadd.s32 %v1441, %v1439
    %v1443 = vrot.slane %v1442, 4
    %vm1444 = vcmp.lt.s32.totalorder %v1442, %v1443
    %v1445 = vsel %vm1444, %v1442, %v1443
    %v1446 = vrot.slane %v1445, 2
    %vm1447 = vcmp.lt.s32.totalorder %v1445, %v1446
    %v1448 = vsel %vm1447, %v1445, %v1446
    %v1449 = vrot.slane %v1448, 1
    %vm1450 = vcmp.lt.s32.totalorder %v1448, %v1449
    %v1451 = vsel %vm1450, %v1448, %v1449
    %s1452 = vtos %v1451
    %v1453 = vsel %vm596, %v1391, inf
    %1454 = vmin.xlane.f32.xlu0 %v1453
    %v1455 = vpop.xlane.xlu0 %1454
    %v1456 = vrot.slane %v1455, 4
    %v1457 = vmin.f32 %v1455, %v1456
    %v1458 = vrot.slane %v1457, 2
    %v1459 = vmin.f32 %v1457, %v1458
    %v1460 = vrot.slane %v1459, 1
    %v1461 = vmin.f32 %v1459, %v1460
    %s1462 = vtos %v1461
    %v1463 = vstv %s1462
    %vm1464 = vcmp.eq.f32.partialorder %v1391, %v1463
    %v1465 = vsel %vm1464, %v92, 2147483647
    %v1466 = vsel %vm596, %v1465, 2147483647
    %v1467 = vand.u32 %v1466, 65535
    %v1468 = vshra.s32 %v1466, 16
    %v1469 = vcvt.s32.f32 %v1467
    %v1470 = vcvt.s32.f32 %v1468
    %1471 = vmin.xlane.f32.xlu0 %v1470
    %v1472 = vpop.xlane.xlu0 %1471
    %vm1473 = vcmp.eq.f32.partialorder %v1470, %v1472
    %v1474 = vsel %vm1473, %v1469, inf
    %1475 = vmin.xlane.f32.xlu0 %v1474
    %v1476 = vpop.xlane.xlu0 %1475
    %v1477 = vcvt.f32.s32 %v1476
    %v1478 = vcvt.f32.s32 %v1472
    %v1479 = vshll.u32 %v1478, 16
    %v1480 = vadd.s32 %v1479, %v1477
    %v1481 = vrot.slane %v1480, 4
    %vm1482 = vcmp.lt.s32.totalorder %v1480, %v1481
    %v1483 = vsel %vm1482, %v1480, %v1481
    %v1484 = vrot.slane %v1483, 2
    %vm1485 = vcmp.lt.s32.totalorder %v1483, %v1484
    %v1486 = vsel %vm1485, %v1483, %v1484
    %v1487 = vrot.slane %v1486, 1
    %vm1488 = vcmp.lt.s32.totalorder %v1486, %v1487
    %v1489 = vsel %vm1488, %v1486, %v1487
    %s1490 = vtos %v1489
    %v1491 = vstv %s1490
    %vm1492 = vcmp.eq.s32.totalorder %v92, %v1491
    %p1493 = scmp.gt.f32.partialorder %s1413, %s1462
    %s1494 = scalar_select %p1493, 1, 0
    %v1495 = vstv %s1494
    %vm1496 = vcmp.eq.s32.totalorder %v1495, 1
    %vm1497 = vmand %vm1492, %vm1496
    %v1498 = vsel %vm1497, %v1414, %v1391
    %v1499 = vstv %s1452
    %v1500 = vsel %vm1497, %v1499, %v1393
    %vm1501 = vcmp.eq.s32.totalorder %v533, %v1499
    %vm1502 = vcmp.eq.s32.totalorder %v534, %v1499
    %vm1503 = vcmp.eq.s32.totalorder %v535, %v1499
    %vm1504 = vcmp.eq.s32.totalorder %v536, %v1499
    %v1505 = vsel %vm1501, -inf, %v1398
    %v1506 = vsel %vm1502, -inf, %v1399
    %v1507 = vsel %vm1503, -inf, %v1400
    %v1508 = vsel %vm1504, -inf, %v1401
    %v1509 = vmax.f32 %v1505, %v1506
    %v1510 = vmax.f32 %v1507, %v1508
    %v1511 = vmax.f32 %v1509, %v1510
    %1512 = vmax.xlane.f32.xlu0 %v1511
    %v1513 = vpop.xlane.xlu0 %1512
    %v1514 = vrot.slane %v1513, 4
    %v1515 = vmax.f32 %v1513, %v1514
    %v1516 = vrot.slane %v1515, 2
    %v1517 = vmax.f32 %v1515, %v1516
    %v1518 = vrot.slane %v1517, 1
    %v1519 = vmax.f32 %v1517, %v1518
    %s1520 = vtos %v1519
    %v1521 = vstv %s1520
    %vm1522 = vcmp.eq.f32.partialorder %v1505, %v1521
    %vm1523 = vcmp.eq.f32.partialorder %v1506, %v1521
    %vm1524 = vcmp.eq.f32.partialorder %v1507, %v1521
    %vm1525 = vcmp.eq.f32.partialorder %v1508, %v1521
    %v1526 = vsel %vm1522, %v533, 2147483647
    %v1527 = vsel %vm1523, %v534, 2147483647
    %v1528 = vsel %vm1524, %v535, 2147483647
    %v1529 = vsel %vm1525, %v536, 2147483647
    %vm1530 = vcmp.lt.s32.totalorder %v1526, %v1527
    %v1531 = vsel %vm1530, %v1526, %v1527
    %vm1532 = vcmp.lt.s32.totalorder %v1528, %v1529
    %v1533 = vsel %vm1532, %v1528, %v1529
    %vm1534 = vcmp.lt.s32.totalorder %v1531, %v1533
    %v1535 = vsel %vm1534, %v1531, %v1533
    %v1536 = vand.u32 %v1535, 65535
    %v1537 = vshra.s32 %v1535, 16
    %v1538 = vcvt.s32.f32 %v1536
    %v1539 = vcvt.s32.f32 %v1537
    %1540 = vmin.xlane.f32.xlu0 %v1539
    %v1541 = vpop.xlane.xlu0 %1540
    %vm1542 = vcmp.eq.f32.partialorder %v1539, %v1541
    %v1543 = vsel %vm1542, %v1538, inf
    %1544 = vmin.xlane.f32.xlu0 %v1543
    %v1545 = vpop.xlane.xlu0 %1544
    %v1546 = vcvt.f32.s32 %v1545
    %v1547 = vcvt.f32.s32 %v1541
    %v1548 = vshll.u32 %v1547, 16
    %v1549 = vadd.s32 %v1548, %v1546
    %v1550 = vrot.slane %v1549, 4
    %vm1551 = vcmp.lt.s32.totalorder %v1549, %v1550
    %v1552 = vsel %vm1551, %v1549, %v1550
    %v1553 = vrot.slane %v1552, 2
    %vm1554 = vcmp.lt.s32.totalorder %v1552, %v1553
    %v1555 = vsel %vm1554, %v1552, %v1553
    %v1556 = vrot.slane %v1555, 1
    %vm1557 = vcmp.lt.s32.totalorder %v1555, %v1556
    %v1558 = vsel %vm1557, %v1555, %v1556
    %s1559 = vtos %v1558
    %v1560 = vsel %vm596, %v1498, inf
    %1561 = vmin.xlane.f32.xlu0 %v1560
    %v1562 = vpop.xlane.xlu0 %1561
    %v1563 = vrot.slane %v1562, 4
    %v1564 = vmin.f32 %v1562, %v1563
    %v1565 = vrot.slane %v1564, 2
    %v1566 = vmin.f32 %v1564, %v1565
    %v1567 = vrot.slane %v1566, 1
    %v1568 = vmin.f32 %v1566, %v1567
    %s1569 = vtos %v1568
    %v1570 = vstv %s1569
    %vm1571 = vcmp.eq.f32.partialorder %v1498, %v1570
    %v1572 = vsel %vm1571, %v92, 2147483647
    %v1573 = vsel %vm596, %v1572, 2147483647
    %v1574 = vand.u32 %v1573, 65535
    %v1575 = vshra.s32 %v1573, 16
    %v1576 = vcvt.s32.f32 %v1574
    %v1577 = vcvt.s32.f32 %v1575
    %1578 = vmin.xlane.f32.xlu0 %v1577
    %v1579 = vpop.xlane.xlu0 %1578
    %vm1580 = vcmp.eq.f32.partialorder %v1577, %v1579
    %v1581 = vsel %vm1580, %v1576, inf
    %1582 = vmin.xlane.f32.xlu0 %v1581
    %v1583 = vpop.xlane.xlu0 %1582
    %v1584 = vcvt.f32.s32 %v1583
    %v1585 = vcvt.f32.s32 %v1579
    %v1586 = vshll.u32 %v1585, 16
    %v1587 = vadd.s32 %v1586, %v1584
    %v1588 = vrot.slane %v1587, 4
    %vm1589 = vcmp.lt.s32.totalorder %v1587, %v1588
    %v1590 = vsel %vm1589, %v1587, %v1588
    %v1591 = vrot.slane %v1590, 2
    %vm1592 = vcmp.lt.s32.totalorder %v1590, %v1591
    %v1593 = vsel %vm1592, %v1590, %v1591
    %v1594 = vrot.slane %v1593, 1
    %vm1595 = vcmp.lt.s32.totalorder %v1593, %v1594
    %v1596 = vsel %vm1595, %v1593, %v1594
    %s1597 = vtos %v1596
    %v1598 = vstv %s1597
    %vm1599 = vcmp.eq.s32.totalorder %v92, %v1598
    %p1600 = scmp.gt.f32.partialorder %s1520, %s1569
    %s1601 = scalar_select %p1600, 1, 0
    %v1602 = vstv %s1601
    %vm1603 = vcmp.eq.s32.totalorder %v1602, 1
    %vm1604 = vmand %vm1599, %vm1603
    %v1605 = vsel %vm1604, %v1521, %v1498
    %v1606 = vstv %s1559
    %v1607 = vsel %vm1604, %v1606, %v1500
    %vm1608 = vcmp.eq.s32.totalorder %v533, %v1606
    %vm1609 = vcmp.eq.s32.totalorder %v534, %v1606
    %vm1610 = vcmp.eq.s32.totalorder %v535, %v1606
    %vm1611 = vcmp.eq.s32.totalorder %v536, %v1606
    %v1612 = vsel %vm1608, -inf, %v1505
    %v1613 = vsel %vm1609, -inf, %v1506
    %v1614 = vsel %vm1610, -inf, %v1507
    %v1615 = vsel %vm1611, -inf, %v1508
    %v1616 = vmax.f32 %v1612, %v1613
    %v1617 = vmax.f32 %v1614, %v1615
    %v1618 = vmax.f32 %v1616, %v1617
    %1619 = vmax.xlane.f32.xlu0 %v1618
    %v1620 = vpop.xlane.xlu0 %1619
    %v1621 = vrot.slane %v1620, 4
    %v1622 = vmax.f32 %v1620, %v1621
    %v1623 = vrot.slane %v1622, 2
    %v1624 = vmax.f32 %v1622, %v1623
    %v1625 = vrot.slane %v1624, 1
    %v1626 = vmax.f32 %v1624, %v1625
    %s1627 = vtos %v1626
    %v1628 = vstv %s1627
    %vm1629 = vcmp.eq.f32.partialorder %v1612, %v1628
    %vm1630 = vcmp.eq.f32.partialorder %v1613, %v1628
    %vm1631 = vcmp.eq.f32.partialorder %v1614, %v1628
    %vm1632 = vcmp.eq.f32.partialorder %v1615, %v1628
    %v1633 = vsel %vm1629, %v533, 2147483647
    %v1634 = vsel %vm1630, %v534, 2147483647
    %v1635 = vsel %vm1631, %v535, 2147483647
    %v1636 = vsel %vm1632, %v536, 2147483647
    %vm1637 = vcmp.lt.s32.totalorder %v1633, %v1634
    %v1638 = vsel %vm1637, %v1633, %v1634
    %vm1639 = vcmp.lt.s32.totalorder %v1635, %v1636
    %v1640 = vsel %vm1639, %v1635, %v1636
    %vm1641 = vcmp.lt.s32.totalorder %v1638, %v1640
    %v1642 = vsel %vm1641, %v1638, %v1640
    %v1643 = vand.u32 %v1642, 65535
    %v1644 = vshra.s32 %v1642, 16
    %v1645 = vcvt.s32.f32 %v1643
    %v1646 = vcvt.s32.f32 %v1644
    %1647 = vmin.xlane.f32.xlu0 %v1646
    %v1648 = vpop.xlane.xlu0 %1647
    %vm1649 = vcmp.eq.f32.partialorder %v1646, %v1648
    %v1650 = vsel %vm1649, %v1645, inf
    %1651 = vmin.xlane.f32.xlu0 %v1650
    %v1652 = vpop.xlane.xlu0 %1651
    %v1653 = vcvt.f32.s32 %v1652
    %v1654 = vcvt.f32.s32 %v1648
    %v1655 = vshll.u32 %v1654, 16
    %v1656 = vadd.s32 %v1655, %v1653
    %v1657 = vrot.slane %v1656, 4
    %vm1658 = vcmp.lt.s32.totalorder %v1656, %v1657
    %v1659 = vsel %vm1658, %v1656, %v1657
    %v1660 = vrot.slane %v1659, 2
    %vm1661 = vcmp.lt.s32.totalorder %v1659, %v1660
    %v1662 = vsel %vm1661, %v1659, %v1660
    %v1663 = vrot.slane %v1662, 1
    %vm1664 = vcmp.lt.s32.totalorder %v1662, %v1663
    %v1665 = vsel %vm1664, %v1662, %v1663
    %s1666 = vtos %v1665
    %v1667 = vsel %vm596, %v1605, inf
    %1668 = vmin.xlane.f32.xlu0 %v1667
    %v1669 = vpop.xlane.xlu0 %1668
    %v1670 = vrot.slane %v1669, 4
    %v1671 = vmin.f32 %v1669, %v1670
    %v1672 = vrot.slane %v1671, 2
    %v1673 = vmin.f32 %v1671, %v1672
    %v1674 = vrot.slane %v1673, 1
    %v1675 = vmin.f32 %v1673, %v1674
    %s1676 = vtos %v1675
    %v1677 = vstv %s1676
    %vm1678 = vcmp.eq.f32.partialorder %v1605, %v1677
    %v1679 = vsel %vm1678, %v92, 2147483647
    %v1680 = vsel %vm596, %v1679, 2147483647
    %v1681 = vand.u32 %v1680, 65535
    %v1682 = vshra.s32 %v1680, 16
    %v1683 = vcvt.s32.f32 %v1681
    %v1684 = vcvt.s32.f32 %v1682
    %1685 = vmin.xlane.f32.xlu0 %v1684
    %v1686 = vpop.xlane.xlu0 %1685
    %vm1687 = vcmp.eq.f32.partialorder %v1684, %v1686
    %v1688 = vsel %vm1687, %v1683, inf
    %1689 = vmin.xlane.f32.xlu0 %v1688
    %v1690 = vpop.xlane.xlu0 %1689
    %v1691 = vcvt.f32.s32 %v1690
    %v1692 = vcvt.f32.s32 %v1686
    %v1693 = vshll.u32 %v1692, 16
    %v1694 = vadd.s32 %v1693, %v1691
    %v1695 = vrot.slane %v1694, 4
    %vm1696 = vcmp.lt.s32.totalorder %v1694, %v1695
    %v1697 = vsel %vm1696, %v1694, %v1695
    %v1698 = vrot.slane %v1697, 2
    %vm1699 = vcmp.lt.s32.totalorder %v1697, %v1698
    %v1700 = vsel %vm1699, %v1697, %v1698
    %v1701 = vrot.slane %v1700, 1
    %vm1702 = vcmp.lt.s32.totalorder %v1700, %v1701
    %v1703 = vsel %vm1702, %v1700, %v1701
    %s1704 = vtos %v1703
    %v1705 = vstv %s1704
    %vm1706 = vcmp.eq.s32.totalorder %v92, %v1705
    %p1707 = scmp.gt.f32.partialorder %s1627, %s1676
    %s1708 = scalar_select %p1707, 1, 0
    %v1709 = vstv %s1708
    %vm1710 = vcmp.eq.s32.totalorder %v1709, 1
    %vm1711 = vmand %vm1706, %vm1710
    %v1712 = vsel %vm1711, %v1628, %v1605
    %v1713 = vstv %s1666
    %v1714 = vsel %vm1711, %v1713, %v1607
    %vm1715 = vcmp.eq.s32.totalorder %v533, %v1713
    %vm1716 = vcmp.eq.s32.totalorder %v534, %v1713
    %vm1717 = vcmp.eq.s32.totalorder %v535, %v1713
    %vm1718 = vcmp.eq.s32.totalorder %v536, %v1713
    %v1719 = vsel %vm1715, -inf, %v1612
    %v1720 = vsel %vm1716, -inf, %v1613
    %v1721 = vsel %vm1717, -inf, %v1614
    %v1722 = vsel %vm1718, -inf, %v1615
    %v1723 = vmax.f32 %v1719, %v1720
    %v1724 = vmax.f32 %v1721, %v1722
    %v1725 = vmax.f32 %v1723, %v1724
    %1726 = vmax.xlane.f32.xlu0 %v1725
    %v1727 = vpop.xlane.xlu0 %1726
    %v1728 = vrot.slane %v1727, 4
    %v1729 = vmax.f32 %v1727, %v1728
    %v1730 = vrot.slane %v1729, 2
    %v1731 = vmax.f32 %v1729, %v1730
    %v1732 = vrot.slane %v1731, 1
    %v1733 = vmax.f32 %v1731, %v1732
    %s1734 = vtos %v1733
    %v1735 = vstv %s1734
    %vm1736 = vcmp.eq.f32.partialorder %v1719, %v1735
    %vm1737 = vcmp.eq.f32.partialorder %v1720, %v1735
    %vm1738 = vcmp.eq.f32.partialorder %v1721, %v1735
    %vm1739 = vcmp.eq.f32.partialorder %v1722, %v1735
    %v1740 = vsel %vm1736, %v533, 2147483647
    %v1741 = vsel %vm1737, %v534, 2147483647
    %v1742 = vsel %vm1738, %v535, 2147483647
    %v1743 = vsel %vm1739, %v536, 2147483647
    %vm1744 = vcmp.lt.s32.totalorder %v1740, %v1741
    %v1745 = vsel %vm1744, %v1740, %v1741
    %vm1746 = vcmp.lt.s32.totalorder %v1742, %v1743
    %v1747 = vsel %vm1746, %v1742, %v1743
    %vm1748 = vcmp.lt.s32.totalorder %v1745, %v1747
    %v1749 = vsel %vm1748, %v1745, %v1747
    %v1750 = vand.u32 %v1749, 65535
    %v1751 = vshra.s32 %v1749, 16
    %v1752 = vcvt.s32.f32 %v1750
    %v1753 = vcvt.s32.f32 %v1751
    %1754 = vmin.xlane.f32.xlu0 %v1753
    %v1755 = vpop.xlane.xlu0 %1754
    %vm1756 = vcmp.eq.f32.partialorder %v1753, %v1755
    %v1757 = vsel %vm1756, %v1752, inf
    %1758 = vmin.xlane.f32.xlu0 %v1757
    %v1759 = vpop.xlane.xlu0 %1758
    %v1760 = vcvt.f32.s32 %v1759
    %v1761 = vcvt.f32.s32 %v1755
    %v1762 = vshll.u32 %v1761, 16
    %v1763 = vadd.s32 %v1762, %v1760
    %v1764 = vrot.slane %v1763, 4
    %vm1765 = vcmp.lt.s32.totalorder %v1763, %v1764
    %v1766 = vsel %vm1765, %v1763, %v1764
    %v1767 = vrot.slane %v1766, 2
    %vm1768 = vcmp.lt.s32.totalorder %v1766, %v1767
    %v1769 = vsel %vm1768, %v1766, %v1767
    %v1770 = vrot.slane %v1769, 1
    %vm1771 = vcmp.lt.s32.totalorder %v1769, %v1770
    %v1772 = vsel %vm1771, %v1769, %v1770
    %s1773 = vtos %v1772
    %v1774 = vsel %vm596, %v1712, inf
    %1775 = vmin.xlane.f32.xlu0 %v1774
    %v1776 = vpop.xlane.xlu0 %1775
    %v1777 = vrot.slane %v1776, 4
    %v1778 = vmin.f32 %v1776, %v1777
    %v1779 = vrot.slane %v1778, 2
    %v1780 = vmin.f32 %v1778, %v1779
    %v1781 = vrot.slane %v1780, 1
    %v1782 = vmin.f32 %v1780, %v1781
    %s1783 = vtos %v1782
    %v1784 = vstv %s1783
    %vm1785 = vcmp.eq.f32.partialorder %v1712, %v1784
    %v1786 = vsel %vm1785, %v92, 2147483647
    %v1787 = vsel %vm596, %v1786, 2147483647
    %v1788 = vand.u32 %v1787, 65535
    %v1789 = vshra.s32 %v1787, 16
    %v1790 = vcvt.s32.f32 %v1788
    %v1791 = vcvt.s32.f32 %v1789
    %1792 = vmin.xlane.f32.xlu0 %v1791
    %v1793 = vpop.xlane.xlu0 %1792
    %vm1794 = vcmp.eq.f32.partialorder %v1791, %v1793
    %v1795 = vsel %vm1794, %v1790, inf
    %1796 = vmin.xlane.f32.xlu0 %v1795
    %v1797 = vpop.xlane.xlu0 %1796
    %v1798 = vcvt.f32.s32 %v1797
    %v1799 = vcvt.f32.s32 %v1793
    %v1800 = vshll.u32 %v1799, 16
    %v1801 = vadd.s32 %v1800, %v1798
    %v1802 = vrot.slane %v1801, 4
    %vm1803 = vcmp.lt.s32.totalorder %v1801, %v1802
    %v1804 = vsel %vm1803, %v1801, %v1802
    %v1805 = vrot.slane %v1804, 2
    %vm1806 = vcmp.lt.s32.totalorder %v1804, %v1805
    %v1807 = vsel %vm1806, %v1804, %v1805
    %v1808 = vrot.slane %v1807, 1
    %vm1809 = vcmp.lt.s32.totalorder %v1807, %v1808
    %v1810 = vsel %vm1809, %v1807, %v1808
    %s1811 = vtos %v1810
    %v1812 = vstv %s1811
    %vm1813 = vcmp.eq.s32.totalorder %v92, %v1812
    %p1814 = scmp.gt.f32.partialorder %s1734, %s1783
    %s1815 = scalar_select %p1814, 1, 0
    %v1816 = vstv %s1815
    %vm1817 = vcmp.eq.s32.totalorder %v1816, 1
    %vm1818 = vmand %vm1813, %vm1817
    %v1819 = vsel %vm1818, %v1735, %v1712
    %v1820 = vstv %s1773
    %v1821 = vsel %vm1818, %v1820, %v1714
    %vm1822 = vcmp.eq.s32.totalorder %v533, %v1820
    %vm1823 = vcmp.eq.s32.totalorder %v534, %v1820
    %vm1824 = vcmp.eq.s32.totalorder %v535, %v1820
    %vm1825 = vcmp.eq.s32.totalorder %v536, %v1820
    %v1826 = vsel %vm1822, -inf, %v1719
    %v1827 = vsel %vm1823, -inf, %v1720
    %v1828 = vsel %vm1824, -inf, %v1721
    %v1829 = vsel %vm1825, -inf, %v1722
    %v1830 = vmax.f32 %v1826, %v1827
    %v1831 = vmax.f32 %v1828, %v1829
    %v1832 = vmax.f32 %v1830, %v1831
    %1833 = vmax.xlane.f32.xlu0 %v1832
    %v1834 = vpop.xlane.xlu0 %1833
    %v1835 = vrot.slane %v1834, 4
    %v1836 = vmax.f32 %v1834, %v1835
    %v1837 = vrot.slane %v1836, 2
    %v1838 = vmax.f32 %v1836, %v1837
    %v1839 = vrot.slane %v1838, 1
    %v1840 = vmax.f32 %v1838, %v1839
    %s1841 = vtos %v1840
    %v1842 = vstv %s1841
    %vm1843 = vcmp.eq.f32.partialorder %v1826, %v1842
    %vm1844 = vcmp.eq.f32.partialorder %v1827, %v1842
    %vm1845 = vcmp.eq.f32.partialorder %v1828, %v1842
    %vm1846 = vcmp.eq.f32.partialorder %v1829, %v1842
    %v1847 = vsel %vm1843, %v533, 2147483647
    %v1848 = vsel %vm1844, %v534, 2147483647
    %v1849 = vsel %vm1845, %v535, 2147483647
    %v1850 = vsel %vm1846, %v536, 2147483647
    %vm1851 = vcmp.lt.s32.totalorder %v1847, %v1848
    %v1852 = vsel %vm1851, %v1847, %v1848
    %vm1853 = vcmp.lt.s32.totalorder %v1849, %v1850
    %v1854 = vsel %vm1853, %v1849, %v1850
    %vm1855 = vcmp.lt.s32.totalorder %v1852, %v1854
    %v1856 = vsel %vm1855, %v1852, %v1854
    %v1857 = vand.u32 %v1856, 65535
    %v1858 = vshra.s32 %v1856, 16
    %v1859 = vcvt.s32.f32 %v1857
    %v1860 = vcvt.s32.f32 %v1858
    %1861 = vmin.xlane.f32.xlu0 %v1860
    %v1862 = vpop.xlane.xlu0 %1861
    %vm1863 = vcmp.eq.f32.partialorder %v1860, %v1862
    %v1864 = vsel %vm1863, %v1859, inf
    %1865 = vmin.xlane.f32.xlu0 %v1864
    %v1866 = vpop.xlane.xlu0 %1865
    %v1867 = vcvt.f32.s32 %v1866
    %v1868 = vcvt.f32.s32 %v1862
    %v1869 = vshll.u32 %v1868, 16
    %v1870 = vadd.s32 %v1869, %v1867
    %v1871 = vrot.slane %v1870, 4
    %vm1872 = vcmp.lt.s32.totalorder %v1870, %v1871
    %v1873 = vsel %vm1872, %v1870, %v1871
    %v1874 = vrot.slane %v1873, 2
    %vm1875 = vcmp.lt.s32.totalorder %v1873, %v1874
    %v1876 = vsel %vm1875, %v1873, %v1874
    %v1877 = vrot.slane %v1876, 1
    %vm1878 = vcmp.lt.s32.totalorder %v1876, %v1877
    %v1879 = vsel %vm1878, %v1876, %v1877
    %s1880 = vtos %v1879
    %v1881 = vsel %vm596, %v1819, inf
    %1882 = vmin.xlane.f32.xlu0 %v1881
    %v1883 = vpop.xlane.xlu0 %1882
    %v1884 = vrot.slane %v1883, 4
    %v1885 = vmin.f32 %v1883, %v1884
    %v1886 = vrot.slane %v1885, 2
    %v1887 = vmin.f32 %v1885, %v1886
    %v1888 = vrot.slane %v1887, 1
    %v1889 = vmin.f32 %v1887, %v1888
    %s1890 = vtos %v1889
    %v1891 = vstv %s1890
    %vm1892 = vcmp.eq.f32.partialorder %v1819, %v1891
    %v1893 = vsel %vm1892, %v92, 2147483647
    %v1894 = vsel %vm596, %v1893, 2147483647
    %v1895 = vand.u32 %v1894, 65535
    %v1896 = vshra.s32 %v1894, 16
    %v1897 = vcvt.s32.f32 %v1895
    %v1898 = vcvt.s32.f32 %v1896
    %1899 = vmin.xlane.f32.xlu0 %v1898
    %v1900 = vpop.xlane.xlu0 %1899
    %vm1901 = vcmp.eq.f32.partialorder %v1898, %v1900
    %v1902 = vsel %vm1901, %v1897, inf
    %1903 = vmin.xlane.f32.xlu0 %v1902
    %v1904 = vpop.xlane.xlu0 %1903
    %v1905 = vcvt.f32.s32 %v1904
    %v1906 = vcvt.f32.s32 %v1900
    %v1907 = vshll.u32 %v1906, 16
    %v1908 = vadd.s32 %v1907, %v1905
    %v1909 = vrot.slane %v1908, 4
    %vm1910 = vcmp.lt.s32.totalorder %v1908, %v1909
    %v1911 = vsel %vm1910, %v1908, %v1909
    %v1912 = vrot.slane %v1911, 2
    %vm1913 = vcmp.lt.s32.totalorder %v1911, %v1912
    %v1914 = vsel %vm1913, %v1911, %v1912
    %v1915 = vrot.slane %v1914, 1
    %vm1916 = vcmp.lt.s32.totalorder %v1914, %v1915
    %v1917 = vsel %vm1916, %v1914, %v1915
    %s1918 = vtos %v1917
    %v1919 = vstv %s1918
    %vm1920 = vcmp.eq.s32.totalorder %v92, %v1919
    %p1921 = scmp.gt.f32.partialorder %s1841, %s1890
    %s1922 = scalar_select %p1921, 1, 0
    %v1923 = vstv %s1922
    %vm1924 = vcmp.eq.s32.totalorder %v1923, 1
    %vm1925 = vmand %vm1920, %vm1924
    %v1926 = vsel %vm1925, %v1842, %v1819
    %v1927 = vstv %s1880
    %v1928 = vsel %vm1925, %v1927, %v1821
    %vm1929 = vcmp.eq.s32.totalorder %v533, %v1927
    %vm1930 = vcmp.eq.s32.totalorder %v534, %v1927
    %vm1931 = vcmp.eq.s32.totalorder %v535, %v1927
    %vm1932 = vcmp.eq.s32.totalorder %v536, %v1927
    %v1933 = vsel %vm1929, -inf, %v1826
    %v1934 = vsel %vm1930, -inf, %v1827
    %v1935 = vsel %vm1931, -inf, %v1828
    %v1936 = vsel %vm1932, -inf, %v1829
    %v1937 = vmax.f32 %v1933, %v1934
    %v1938 = vmax.f32 %v1935, %v1936
    %v1939 = vmax.f32 %v1937, %v1938
    %1940 = vmax.xlane.f32.xlu0 %v1939
    %v1941 = vpop.xlane.xlu0 %1940
    %v1942 = vrot.slane %v1941, 4
    %v1943 = vmax.f32 %v1941, %v1942
    %v1944 = vrot.slane %v1943, 2
    %v1945 = vmax.f32 %v1943, %v1944
    %v1946 = vrot.slane %v1945, 1
    %v1947 = vmax.f32 %v1945, %v1946
    %s1948 = vtos %v1947
    %v1949 = vstv %s1948
    %vm1950 = vcmp.eq.f32.partialorder %v1933, %v1949
    %vm1951 = vcmp.eq.f32.partialorder %v1934, %v1949
    %vm1952 = vcmp.eq.f32.partialorder %v1935, %v1949
    %vm1953 = vcmp.eq.f32.partialorder %v1936, %v1949
    %v1954 = vsel %vm1950, %v533, 2147483647
    %v1955 = vsel %vm1951, %v534, 2147483647
    %v1956 = vsel %vm1952, %v535, 2147483647
    %v1957 = vsel %vm1953, %v536, 2147483647
    %vm1958 = vcmp.lt.s32.totalorder %v1954, %v1955
    %v1959 = vsel %vm1958, %v1954, %v1955
    %vm1960 = vcmp.lt.s32.totalorder %v1956, %v1957
    %v1961 = vsel %vm1960, %v1956, %v1957
    %vm1962 = vcmp.lt.s32.totalorder %v1959, %v1961
    %v1963 = vsel %vm1962, %v1959, %v1961
    %v1964 = vand.u32 %v1963, 65535
    %v1965 = vshra.s32 %v1963, 16
    %v1966 = vcvt.s32.f32 %v1964
    %v1967 = vcvt.s32.f32 %v1965
    %1968 = vmin.xlane.f32.xlu0 %v1967
    %v1969 = vpop.xlane.xlu0 %1968
    %vm1970 = vcmp.eq.f32.partialorder %v1967, %v1969
    %v1971 = vsel %vm1970, %v1966, inf
    %1972 = vmin.xlane.f32.xlu0 %v1971
    %v1973 = vpop.xlane.xlu0 %1972
    %v1974 = vcvt.f32.s32 %v1973
    %v1975 = vcvt.f32.s32 %v1969
    %v1976 = vshll.u32 %v1975, 16
    %v1977 = vadd.s32 %v1976, %v1974
    %v1978 = vrot.slane %v1977, 4
    %vm1979 = vcmp.lt.s32.totalorder %v1977, %v1978
    %v1980 = vsel %vm1979, %v1977, %v1978
    %v1981 = vrot.slane %v1980, 2
    %vm1982 = vcmp.lt.s32.totalorder %v1980, %v1981
    %v1983 = vsel %vm1982, %v1980, %v1981
    %v1984 = vrot.slane %v1983, 1
    %vm1985 = vcmp.lt.s32.totalorder %v1983, %v1984
    %v1986 = vsel %vm1985, %v1983, %v1984
    %s1987 = vtos %v1986
    %v1988 = vsel %vm596, %v1926, inf
    %1989 = vmin.xlane.f32.xlu0 %v1988
    %v1990 = vpop.xlane.xlu0 %1989
    %v1991 = vrot.slane %v1990, 4
    %v1992 = vmin.f32 %v1990, %v1991
    %v1993 = vrot.slane %v1992, 2
    %v1994 = vmin.f32 %v1992, %v1993
    %v1995 = vrot.slane %v1994, 1
    %v1996 = vmin.f32 %v1994, %v1995
    %s1997 = vtos %v1996
    %v1998 = vstv %s1997
    %vm1999 = vcmp.eq.f32.partialorder %v1926, %v1998
    %v2000 = vsel %vm1999, %v92, 2147483647
    %v2001 = vsel %vm596, %v2000, 2147483647
    %v2002 = vand.u32 %v2001, 65535
    %v2003 = vshra.s32 %v2001, 16
    %v2004 = vcvt.s32.f32 %v2002
    %v2005 = vcvt.s32.f32 %v2003
    %2006 = vmin.xlane.f32.xlu0 %v2005
    %v2007 = vpop.xlane.xlu0 %2006
    %vm2008 = vcmp.eq.f32.partialorder %v2005, %v2007
    %v2009 = vsel %vm2008, %v2004, inf
    %2010 = vmin.xlane.f32.xlu0 %v2009
    %v2011 = vpop.xlane.xlu0 %2010
    %v2012 = vcvt.f32.s32 %v2011
    %v2013 = vcvt.f32.s32 %v2007
    %v2014 = vshll.u32 %v2013, 16
    %v2015 = vadd.s32 %v2014, %v2012
    %v2016 = vrot.slane %v2015, 4
    %vm2017 = vcmp.lt.s32.totalorder %v2015, %v2016
    %v2018 = vsel %vm2017, %v2015, %v2016
    %v2019 = vrot.slane %v2018, 2
    %vm2020 = vcmp.lt.s32.totalorder %v2018, %v2019
    %v2021 = vsel %vm2020, %v2018, %v2019
    %v2022 = vrot.slane %v2021, 1
    %vm2023 = vcmp.lt.s32.totalorder %v2021, %v2022
    %v2024 = vsel %vm2023, %v2021, %v2022
    %s2025 = vtos %v2024
    %v2026 = vstv %s2025
    %vm2027 = vcmp.eq.s32.totalorder %v92, %v2026
    %p2028 = scmp.gt.f32.partialorder %s1948, %s1997
    %s2029 = scalar_select %p2028, 1, 0
    %v2030 = vstv %s2029
    %vm2031 = vcmp.eq.s32.totalorder %v2030, 1
    %vm2032 = vmand %vm2027, %vm2031
    %v2033 = vsel %vm2032, %v1949, %v1926
    %v2034 = vstv %s1987
    %v2035 = vsel %vm2032, %v2034, %v1928
    %vm2036 = vcmp.eq.s32.totalorder %v533, %v2034
    %vm2037 = vcmp.eq.s32.totalorder %v534, %v2034
    %vm2038 = vcmp.eq.s32.totalorder %v535, %v2034
    %vm2039 = vcmp.eq.s32.totalorder %v536, %v2034
    %v2040 = vsel %vm2036, -inf, %v1933
    %v2041 = vsel %vm2037, -inf, %v1934
    %v2042 = vsel %vm2038, -inf, %v1935
    %v2043 = vsel %vm2039, -inf, %v1936
    %v2044 = vmax.f32 %v2040, %v2041
    %v2045 = vmax.f32 %v2042, %v2043
    %v2046 = vmax.f32 %v2044, %v2045
    %2047 = vmax.xlane.f32.xlu0 %v2046
    %v2048 = vpop.xlane.xlu0 %2047
    %v2049 = vrot.slane %v2048, 4
    %v2050 = vmax.f32 %v2048, %v2049
    %v2051 = vrot.slane %v2050, 2
    %v2052 = vmax.f32 %v2050, %v2051
    %v2053 = vrot.slane %v2052, 1
    %v2054 = vmax.f32 %v2052, %v2053
    %s2055 = vtos %v2054
    %v2056 = vstv %s2055
    %vm2057 = vcmp.eq.f32.partialorder %v2040, %v2056
    %vm2058 = vcmp.eq.f32.partialorder %v2041, %v2056
    %vm2059 = vcmp.eq.f32.partialorder %v2042, %v2056
    %vm2060 = vcmp.eq.f32.partialorder %v2043, %v2056
    %v2061 = vsel %vm2057, %v533, 2147483647
    %v2062 = vsel %vm2058, %v534, 2147483647
    %v2063 = vsel %vm2059, %v535, 2147483647
    %v2064 = vsel %vm2060, %v536, 2147483647
    %vm2065 = vcmp.lt.s32.totalorder %v2061, %v2062
    %v2066 = vsel %vm2065, %v2061, %v2062
    %vm2067 = vcmp.lt.s32.totalorder %v2063, %v2064
    %v2068 = vsel %vm2067, %v2063, %v2064
    %vm2069 = vcmp.lt.s32.totalorder %v2066, %v2068
    %v2070 = vsel %vm2069, %v2066, %v2068
    %v2071 = vand.u32 %v2070, 65535
    %v2072 = vshra.s32 %v2070, 16
    %v2073 = vcvt.s32.f32 %v2071
    %v2074 = vcvt.s32.f32 %v2072
    %2075 = vmin.xlane.f32.xlu0 %v2074
    %v2076 = vpop.xlane.xlu0 %2075
    %vm2077 = vcmp.eq.f32.partialorder %v2074, %v2076
    %v2078 = vsel %vm2077, %v2073, inf
    %2079 = vmin.xlane.f32.xlu0 %v2078
    %v2080 = vpop.xlane.xlu0 %2079
    %v2081 = vcvt.f32.s32 %v2080
    %v2082 = vcvt.f32.s32 %v2076
    %v2083 = vshll.u32 %v2082, 16
    %v2084 = vadd.s32 %v2083, %v2081
    %v2085 = vrot.slane %v2084, 4
    %vm2086 = vcmp.lt.s32.totalorder %v2084, %v2085
    %v2087 = vsel %vm2086, %v2084, %v2085
    %v2088 = vrot.slane %v2087, 2
    %vm2089 = vcmp.lt.s32.totalorder %v2087, %v2088
    %v2090 = vsel %vm2089, %v2087, %v2088
    %v2091 = vrot.slane %v2090, 1
    %vm2092 = vcmp.lt.s32.totalorder %v2090, %v2091
    %v2093 = vsel %vm2092, %v2090, %v2091
    %s2094 = vtos %v2093
    %v2095 = vsel %vm596, %v2033, inf
    %2096 = vmin.xlane.f32.xlu0 %v2095
    %v2097 = vpop.xlane.xlu0 %2096
    %v2098 = vrot.slane %v2097, 4
    %v2099 = vmin.f32 %v2097, %v2098
    %v2100 = vrot.slane %v2099, 2
    %v2101 = vmin.f32 %v2099, %v2100
    %v2102 = vrot.slane %v2101, 1
    %v2103 = vmin.f32 %v2101, %v2102
    %s2104 = vtos %v2103
    %v2105 = vstv %s2104
    %vm2106 = vcmp.eq.f32.partialorder %v2033, %v2105
    %v2107 = vsel %vm2106, %v92, 2147483647
    %v2108 = vsel %vm596, %v2107, 2147483647
    %v2109 = vand.u32 %v2108, 65535
    %v2110 = vshra.s32 %v2108, 16
    %v2111 = vcvt.s32.f32 %v2109
    %v2112 = vcvt.s32.f32 %v2110
    %2113 = vmin.xlane.f32.xlu0 %v2112
    %v2114 = vpop.xlane.xlu0 %2113
    %vm2115 = vcmp.eq.f32.partialorder %v2112, %v2114
    %v2116 = vsel %vm2115, %v2111, inf
    %2117 = vmin.xlane.f32.xlu0 %v2116
    %v2118 = vpop.xlane.xlu0 %2117
    %v2119 = vcvt.f32.s32 %v2118
    %v2120 = vcvt.f32.s32 %v2114
    %v2121 = vshll.u32 %v2120, 16
    %v2122 = vadd.s32 %v2121, %v2119
    %v2123 = vrot.slane %v2122, 4
    %vm2124 = vcmp.lt.s32.totalorder %v2122, %v2123
    %v2125 = vsel %vm2124, %v2122, %v2123
    %v2126 = vrot.slane %v2125, 2
    %vm2127 = vcmp.lt.s32.totalorder %v2125, %v2126
    %v2128 = vsel %vm2127, %v2125, %v2126
    %v2129 = vrot.slane %v2128, 1
    %vm2130 = vcmp.lt.s32.totalorder %v2128, %v2129
    %v2131 = vsel %vm2130, %v2128, %v2129
    %s2132 = vtos %v2131
    %v2133 = vstv %s2132
    %vm2134 = vcmp.eq.s32.totalorder %v92, %v2133
    %p2135 = scmp.gt.f32.partialorder %s2055, %s2104
    %s2136 = scalar_select %p2135, 1, 0
    %v2137 = vstv %s2136
    %vm2138 = vcmp.eq.s32.totalorder %v2137, 1
    %vm2139 = vmand %vm2134, %vm2138
    %v2140 = vsel %vm2139, %v2056, %v2033
    %v2141 = vstv %s2094
    %v2142 = vsel %vm2139, %v2141, %v2035
    %2143 = vst.msk [vmem:[#allocation2] sm:$0x1] %vm596, %v2140
    %2144 = vst.msk [vmem:[%s4] sm:$0x1] %vm596, %v2142
    // Predicated region
    $region18: #{point2plane_loss.1} parent=1 // pred_check
      _
    $region19: #{point2plane_loss.1} parent=1 // pred_check_branch
      %2146 = sbr.rel (0) target = $region21
    $region20: #{point2plane_loss.1} parent=1 // pred_region
      %s2148 = ssub.s32 16, 16
      %2149 = vsyncadd [#allocation3], %s2148
      %s2151 = sshll.u32 [#allocation2], 4
      %s2152 = int_to_ptr.vmem [resolvable:$true] %s2151
      %2154 = dma.vmem_to_hbm [thread:$0]  %s2152, 16, %s3, [#allocation3]
    $region21: #{point2plane_loss.1} parent=1 // pred_fallthru
      _
    // Predicated region
    $region22: #{point2plane_loss.1} parent=1 // pred_check
      _
    $region23: #{point2plane_loss.1} parent=1 // pred_check_branch
      %2156 = sbr.rel (0) target = $region25
    $region24: #{point2plane_loss.1} parent=1 // pred_region
      _
    $region25: #{point2plane_loss.1} parent=1 // pred_fallthru
      _
    // Predicated region
    $region26: #{point2plane_loss.1} parent=1 // pred_check
      _
    $region27: #{point2plane_loss.1} parent=1 // pred_check_branch
      %2158 = sbr.rel (0) target = $region29
    $region28: #{point2plane_loss.1} parent=1 // pred_region
      %2159 = dma.done [#allocation3], 16
    $region29: #{point2plane_loss.1} parent=1 // pred_fallthru
      _
    // Predicated region
    $region30: #{point2plane_loss.1} parent=1 // pred_check
      _
    $region31: #{point2plane_loss.1} parent=1 // pred_check_branch
      %2161 = sbr.rel (0) target = $region33
    $region32: #{point2plane_loss.1} parent=1 // pred_region
      _
    $region33: #{point2plane_loss.1} parent=1 // pred_fallthru
      _
    %2162 = vsyncpa [#allocation3], 1

</llo_original>
